<compile_context>
chip_gen: v7x
topology: tpu7x:2x2x1
jax: 0.10.0
libtpu: 0.0.40
codegen_flags: <defaults>
</compile_context>

<pallas_src>
import jax
import jax.numpy as jnp
from jax.experimental import pallas as pl
from jax.experimental.pallas import tpu as pltpu


LP = 16   # pooled length after conv2/pool (fc1 expects 128 * 16) -- module-fixed


def _choose_tb(batch):
    """Batch rows per grid tile: multiple of 8, <= 128, >= 2 tiles when possible."""
    bp8 = -(-batch // 8) * 8
    tb = min(128, bp8)
    if bp8 >= 16 and bp8 // tb < 2:      # keep >= 2 tiles for megacore / v7x
        tb = max(8, (bp8 // 2) // 8 * 8)
    return tb


# ------------------------------ fused kernel --------------------------------


def _fused_kernel(xcol_ref, w1_ref, b1_ref, w2e_ref, w2o_ref, b2_ref,
                  wf1_ref, bf1_ref, wf2_ref, bf2_ref, out_ref):
    """Whole AudioEmotionCNN forward for one TB-row batch tile."""
    tb = out_ref.shape[0]

    # ---- conv1 + relu + pool: one K=16 matmul over all 4 position phases ----
    # y1 lane blocks are [phase0 | phase2 | phase1 | phase3] (64 each), so
    # MaxPool1d(2) is a single max of the two 128-lane halves and h1eo holds
    # [pooled-even | pooled-odd] h1 positions; rows are m*tb + b.
    y1 = jnp.dot(xcol_ref[0], w1_ref[...], preferred_element_type=jnp.float32)
    h1eo = jnp.maximum(jnp.maximum(y1[:, :128], y1[:, 128:]) + b1_ref[...], 0.0)

    # ---- conv2 (k=3, pad=1) + relu + pool: taps fused along K (=256) ----
    # Neighbouring pooled-h1 positions are a +-tb row shift (zero padded ends).
    zrow = jnp.zeros((tb, 128), jnp.float32)
    h1_prev = jnp.concatenate([zrow, h1eo[:-tb, :]], axis=0)
    h1_next = jnp.concatenate([h1eo[tb:, :], zrow], axis=0)
    lhs_e = jnp.concatenate([h1eo, h1_prev], axis=1).astype(jnp.bfloat16)
    lhs_o = jnp.concatenate([h1eo, h1_next], axis=1).astype(jnp.bfloat16)
    ye = jnp.dot(lhs_e, w2e_ref[...], preferred_element_type=jnp.float32)
    yo = jnp.dot(lhs_o, w2o_ref[...], preferred_element_type=jnp.float32)
    h2 = jnp.maximum(jnp.maximum(ye, yo) + b2_ref[...], 0.0)     # (LP*tb, 128)

    # ---- flatten: pooled position l -> lane block l  =>  (tb, 2048) ----
    lp = h2.shape[0] // tb
    flat = jnp.concatenate([h2[l * tb:(l + 1) * tb, :] for l in range(lp)],
                           axis=1).astype(jnp.bfloat16)

    # ---- fc1 + relu: single K=2048 matmul against the VMEM-resident weight ----
    h3 = jnp.dot(flat, wf1_ref[...], preferred_element_type=jnp.float32)
    h3 = jnp.maximum(h3 + bf1_ref[...], 0.0)

    # ---- fc2 (7 real logits in a 128-lane padded head -> unmasked stores) ----
    out_ref[...] = jnp.dot(h3.astype(jnp.bfloat16), wf2_ref[...],
                           preferred_element_type=jnp.float32) + bf2_ref[...]


# ------------------------------ host wrapper ---------------------------------


def _prep_conv1_cols(x, tb):
    """x: (B, 1, 64) -> (nbt, LP*tb, 16) bf16 conv1 taps.

    xcol[i, m*tb + b, t*4 + j] = x[i*tb + b, 0, 4*m + j - 1 + t] (zero padded),
    i.e. the k=3 / pad=1 taps of conv1 position 4*m + j, grouped (position,
    batch) along rows and (tap, phase) along the last dim (padded 12 -> 16).
    """
    B = x.shape[0]
    nbt = -(-B // tb)
    Bp = nbt * tb
    xs = jnp.pad(x[:, 0, :], ((0, Bp - B), (0, 0)))                      # (Bp, 64)
    xp = jnp.pad(xs, ((0, 0), (1, 1)))                                   # (Bp, 66)
    cols = jnp.stack([xp[:, 0:64], xp[:, 1:65], xp[:, 2:66]], axis=-1)   # [b, p, t]
    cols = cols.reshape(Bp, LP, 4, 3).transpose(0, 1, 3, 2)              # [b, m, t, j]
    cols = cols.reshape(Bp, LP, 12)                                      # [b, m, t*4+j]
    cols = cols.reshape(nbt, tb, LP, 12).transpose(0, 2, 1, 3)           # [i, m, b, r]
    cols = cols.reshape(nbt, LP * tb, 12)
    cols = jnp.pad(cols, ((0, 0), (0, 0), (0, 4)))                       # K 12 -> 16
    return cols.astype(jnp.bfloat16), Bp


@jax.jit
def audio_emotion_cnn_forward(x, params):
    """x: (B, 1, 64) float32 (PyTorch NCL).  Returns logits (B, 7) float32."""
    # TODO(synk): input length is hard-wired to 64 (fc1 expects 128*16), like the module.
    assert x.shape[1] == 1 and x.shape[2] == 64, "AudioEmotionCNN expects (B, 1, 64)"
    w12, b1k, w2e, w2o, b2k, wf1k, bf1k, wf2k, bf2k = params
    B = x.shape[0]
    tb = _choose_tb(B)
    xcol, Bp = _prep_conv1_cols(x, tb)
    nbt = Bp // tb

    out = pl.pallas_call(
        _fused_kernel,
        grid=(nbt,),
        in_specs=[
            pl.BlockSpec((1, LP * tb, 16), lambda i: (i, 0, 0)),  # conv1 taps (bf16)
            pl.BlockSpec((16, 256), lambda i: (0, 0)),            # w1 phase-blocked (bf16)
            pl.BlockSpec((1, 128), lambda i: (0, 0)),             # b1 (tiled x2, f32)
            pl.BlockSpec((256, 128), lambda i: (0, 0)),           # w2 even (bf16)
            pl.BlockSpec((256, 128), lambda i: (0, 0)),           # w2 odd (bf16)
            pl.BlockSpec((1, 128), lambda i: (0, 0)),             # b2 (f32)
            pl.BlockSpec((2048, 512), lambda i: (0, 0)),          # wf1 (bf16, VMEM-resident)
            pl.BlockSpec((1, 512), lambda i: (0, 0)),             # bf1 (f32)
            pl.BlockSpec((512, 128), lambda i: (0, 0)),           # wf2 (bf16, padded)
            pl.BlockSpec((1, 128), lambda i: (0, 0)),             # bf2 (f32, padded)
        ],
        out_specs=pl.BlockSpec((tb, 128), lambda i: (i, 0)),
        out_shape=jax.ShapeDtypeStruct((Bp, 128), jnp.float32),
        compiler_params=pltpu.CompilerParams(
            dimension_semantics=("parallel",),
            vmem_limit_bytes=48 * 1024 * 1024,
        ),
    )(xcol, w12, b1k, w2e, w2o, b2k, wf1k, bf1k, wf2k, bf2k)

    return out[:B, :7]


def prepare_params(torch_params):
    """One-time conversion of PyTorch-layout weights into the kernel layouts."""
    w1, b1, w2, b2, wf1, bf1, wf2, bf2 = torch_params
    # conv1: (64,1,3) -> tap-major (3,64), then fold the 4 phases (column block
    # order [p0|p2|p1|p3] so the pool is a max of the two 128-lane halves) into
    # a (16, 256) weight; rows r = t*4 + j (rows 12..15 are zero K padding).
    w1t = jnp.transpose(w1[:, 0, :], (1, 0))                       # (3, 64)
    co = (0, 2, 1, 3)                                              # phase of column block jb
    w12 = jnp.zeros((16, 256), jnp.float32)
    for t in range(3):
        for jb in range(4):
            w12 = w12.at[t * 4 + co[jb], jb * 64:(jb + 1) * 64].set(w1t[t])
    w12 = w12.astype(jnp.bfloat16)
    b1k = jnp.tile(b1.reshape(1, 64), (1, 2))                      # (1, 128)
    # conv2: taps stacked along K for the even / odd pooled output positions.
    # lhs columns are [h1e[m] | h1o[m] | h1e[m+-1] | h1o[m+-1]] (64 each).
    w2t = jnp.transpose(w2, (2, 1, 0))                             # (3, 64, 128) tap-major
    z = jnp.zeros((64, 128), jnp.float32)
    w2e = jnp.concatenate([w2t[1], w2t[2], z, w2t[0]], axis=0).astype(jnp.bfloat16)
    w2o = jnp.concatenate([w2t[0], w2t[1], w2t[2], z], axis=0).astype(jnp.bfloat16)
    b2k = b2.reshape(1, 128)
    # fc1: fold the NCL flatten (idx = c*16 + l) into weight row order l*128 + c
    # so the kernel consumes its channels-last flattened conv2 output directly.
    wf1k = (wf1.T.reshape(128, LP, 512).transpose(1, 0, 2)
            .reshape(128 * LP, 512).astype(jnp.bfloat16))
    bf1k = bf1.reshape(1, 512)
    # fc2: transpose + zero-pad 7 -> 128 output lanes (lane-dense stores).
    wf2k = jnp.zeros((512, 128), jnp.float32).at[:, :7].set(wf2.T).astype(jnp.bfloat16)
    bf2k = jnp.zeros((1, 128), jnp.float32).at[0, :7].set(bf2)
    return (w12, b1k, w2e, w2o, b2k, wf1k, bf1k, wf2k, bf2k)


# ------------------------------ reference ------------------------------------


def _reference_forward(x, torch_params):
    """Pure-JAX float32 replica of the PyTorch forward (for a sanity check)."""
    w1, b1, w2, b2, wf1, bf1, wf2, bf2 = torch_params

    def conv1d(h, w, b):                       # h (B, Cin, L), w (Cout, Cin, 3), pad=1
        L = h.shape[-1]
        hp = jnp.pad(h, ((0, 0), (0, 0), (1, 1)))
        y = sum(jnp.einsum("bcl,oc->bol", hp[:, :, t:t + L], w[:, :, t]) for t in range(3))
        return y + b[None, :, None]

    def relu_pool(h):
        h = jax.nn.relu(h)
        Bb, C, L = h.shape
        return h.reshape(Bb, C, L // 2, 2).max(axis=-1)

    h = relu_pool(conv1d(x, w1, b1))
    h = relu_pool(conv1d(h, w2, b2))
    flat = h.reshape(h.shape[0], 128 * 16)
    h = jax.nn.relu(flat @ wf1.T + bf1)
    return h @ wf2.T + bf2


# --------------------------------- main ---------------------------------------

if __name__ == "__main__":
    B, L = 2, 64
    key = jax.random.PRNGKey(0)
    ks = jax.random.split(key, 9)

    # Synthetic parameters in PyTorch layouts (shapes from AudioEmotionCNN.__init__).
    w1 = 0.10 * jax.random.normal(ks[0], (64, 1, 3), jnp.float32)        # conv1.weight
    b1 = 0.10 * jax.random.normal(ks[1], (64,), jnp.float32)             # conv1.bias
    w2 = 0.05 * jax.random.normal(ks[2], (128, 64, 3), jnp.float32)      # conv2.weight
    b2 = 0.05 * jax.random.normal(ks[3], (128,), jnp.float32)            # conv2.bias
    wf1 = 0.02 * jax.random.normal(ks[4], (512, 128 * 16), jnp.float32)  # fc1.weight
    bf1 = 0.02 * jax.random.normal(ks[5], (512,), jnp.float32)           # fc1.bias
    wf2 = 0.05 * jax.random.normal(ks[6], (7, 512), jnp.float32)         # fc2.weight
    bf2 = 0.05 * jax.random.normal(ks[7], (7,), jnp.float32)             # fc2.bias
    torch_params = (w1, b1, w2, b2, wf1, bf1, wf2, bf2)

    x = jax.random.normal(ks[8], (B, 1, L), jnp.float32)

    params = prepare_params(torch_params)
    out = jax.block_until_ready(audio_emotion_cnn_forward(x, params))
    assert out.shape == (B, 7) and out.dtype == jnp.float32

    ref = jax.block_until_ready(_reference_forward(x, torch_params))
    err = float(jnp.max(jnp.abs(out - ref)))
    assert err < 5e-2, f"kernel vs reference mismatch: max abs err = {err}"

    print("KERNEL_OK")
</pallas_src>

<mosaic_0001>
module attributes {stable_mosaic.version = 11 : i64} {
  func.func @_fused_kernel(%arg0: i32, %arg1: memref<1x128x16xbf16, #tpu.memory_space<vmem>>, %arg2: memref<16x256xbf16, #tpu.memory_space<vmem>>, %arg3: memref<1x128xf32, #tpu.memory_space<vmem>>, %arg4: memref<256x128xbf16, #tpu.memory_space<vmem>>, %arg5: memref<256x128xbf16, #tpu.memory_space<vmem>>, %arg6: memref<1x128xf32, #tpu.memory_space<vmem>>, %arg7: memref<2048x512xbf16, #tpu.memory_space<vmem>>, %arg8: memref<1x512xf32, #tpu.memory_space<vmem>>, %arg9: memref<512x128xbf16, #tpu.memory_space<vmem>>, %arg10: memref<1x128xf32, #tpu.memory_space<vmem>>, %arg11: memref<8x128xf32, #tpu.memory_space<vmem>>) attributes {dimension_semantics = [#tpu.dimension_semantics<parallel>], iteration_bounds = array<i64: 1>, scalar_prefetch = 0 : i64, scratch_operands = 0 : i64, tpu.core_type = #tpu.core_type<tc>, window_params = [{transform_indices = @transform_0, window_bounds = array<i64: 1, 128, 16>}, {pipeline_mode = #tpu.pipeline_mode<synchronous>, transform_indices = @transform_1, window_bounds = array<i64: 16, 256>}, {pipeline_mode = #tpu.pipeline_mode<synchronous>, transform_indices = @transform_2, window_bounds = array<i64: 1, 128>}, {pipeline_mode = #tpu.pipeline_mode<synchronous>, transform_indices = @transform_3, window_bounds = array<i64: 256, 128>}, {pipeline_mode = #tpu.pipeline_mode<synchronous>, transform_indices = @transform_4, window_bounds = array<i64: 256, 128>}, {pipeline_mode = #tpu.pipeline_mode<synchronous>, transform_indices = @transform_5, window_bounds = array<i64: 1, 128>}, {pipeline_mode = #tpu.pipeline_mode<synchronous>, transform_indices = @transform_6, window_bounds = array<i64: 2048, 512>}, {pipeline_mode = #tpu.pipeline_mode<synchronous>, transform_indices = @transform_7, window_bounds = array<i64: 1, 512>}, {pipeline_mode = #tpu.pipeline_mode<synchronous>, transform_indices = @transform_8, window_bounds = array<i64: 512, 128>}, {pipeline_mode = #tpu.pipeline_mode<synchronous>, transform_indices = @transform_9, window_bounds = array<i64: 1, 128>}, {transform_indices = @transform_10, window_bounds = array<i64: 8, 128>}]} {
    %c0 = arith.constant 0 : index
    %c0_0 = arith.constant 0 : index
    %c0_1 = arith.constant 0 : index
    %0 = vector.load %arg1[%c0, %c0_0, %c0_1] : memref<1x128x16xbf16, #tpu.memory_space<vmem>>, vector<1x128x16xbf16>
    %1 = vector.shape_cast %0 : vector<1x128x16xbf16> to vector<128x16xbf16>
    %c0_2 = arith.constant 0 : index
    %c0_3 = arith.constant 0 : index
    %2 = vector.load %arg2[%c0_2, %c0_3] : memref<16x256xbf16, #tpu.memory_space<vmem>>, vector<16x256xbf16>
    %cst = arith.constant dense<0.000000e+00> : vector<128x256xf32>
    %3 = tpu.matmul %1, %2, %cst {dimension_numbers = #tpu.dot_dimension_numbers<[1], [0], [0], [1], [0, 0, 1, 1], [], []>} : vector<128x16xbf16>, vector<16x256xbf16>, vector<128x256xf32> -> vector<128x256xf32>
    %4 = vector.extract_strided_slice %3 {offsets = [0, 0], sizes = [128, 128], strides = [1, 1]} : vector<128x256xf32> to vector<128x128xf32>
    %5 = vector.extract_strided_slice %3 {offsets = [0, 128], sizes = [128, 128], strides = [1, 1]} : vector<128x256xf32> to vector<128x128xf32>
    %6 = arith.maximumf %4, %5 : vector<128x128xf32>
    %c0_4 = arith.constant 0 : index
    %c0_5 = arith.constant 0 : index
    %7 = vector.load %arg3[%c0_4, %c0_5] : memref<1x128xf32, #tpu.memory_space<vmem>>, vector<1x128xf32>
    %8 = vector.broadcast %7 : vector<1x128xf32> to vector<128x128xf32>
    %9 = arith.addf %6, %8 : vector<128x128xf32>
    %cst_6 = arith.constant 0.000000e+00 : f32
    %10 = vector.broadcast %cst_6 : f32 to vector<128x128xf32>
    %11 = arith.maximumf %9, %10 : vector<128x128xf32>
    %cst_7 = arith.constant 0.000000e+00 : f32
    %12 = vector.broadcast %cst_7 : f32 to vector<8x128xf32>
    %13 = vector.extract_strided_slice %11 {offsets = [0, 0], sizes = [120, 128], strides = [1, 1]} : vector<128x128xf32> to vector<120x128xf32>
    %14 = tpu.concatenate %12, %13 in 0 : vector<8x128xf32>, vector<120x128xf32> -> vector<128x128xf32>
    %15 = vector.extract_strided_slice %11 {offsets = [8, 0], sizes = [120, 128], strides = [1, 1]} : vector<128x128xf32> to vector<120x128xf32>
    %16 = tpu.concatenate %15, %12 in 0 : vector<120x128xf32>, vector<8x128xf32> -> vector<128x128xf32>
    %17 = tpu.concatenate %11, %14 in 1 : vector<128x128xf32>, vector<128x128xf32> -> vector<128x256xf32>
    %18 = arith.truncf %17 : vector<128x256xf32> to vector<128x256xbf16>
    %19 = tpu.concatenate %11, %16 in 1 : vector<128x128xf32>, vector<128x128xf32> -> vector<128x256xf32>
    %20 = arith.truncf %19 : vector<128x256xf32> to vector<128x256xbf16>
    %c0_8 = arith.constant 0 : index
    %c0_9 = arith.constant 0 : index
    %21 = vector.load %arg4[%c0_8, %c0_9] : memref<256x128xbf16, #tpu.memory_space<vmem>>, vector<256x128xbf16>
    %cst_10 = arith.constant dense<0.000000e+00> : vector<128x128xf32>
    %22 = tpu.matmul %18, %21, %cst_10 {dimension_numbers = #tpu.dot_dimension_numbers<[1], [0], [0], [1], [0, 0, 1, 1], [], []>} : vector<128x256xbf16>, vector<256x128xbf16>, vector<128x128xf32> -> vector<128x128xf32>
    %c0_11 = arith.constant 0 : index
    %c0_12 = arith.constant 0 : index
    %23 = vector.load %arg5[%c0_11, %c0_12] : memref<256x128xbf16, #tpu.memory_space<vmem>>, vector<256x128xbf16>
    %cst_13 = arith.constant dense<0.000000e+00> : vector<128x128xf32>
    %24 = tpu.matmul %20, %23, %cst_13 {dimension_numbers = #tpu.dot_dimension_numbers<[1], [0], [0], [1], [0, 0, 1, 1], [], []>} : vector<128x256xbf16>, vector<256x128xbf16>, vector<128x128xf32> -> vector<128x128xf32>
    %25 = arith.maximumf %22, %24 : vector<128x128xf32>
    %c0_14 = arith.constant 0 : index
    %c0_15 = arith.constant 0 : index
    %26 = vector.load %arg6[%c0_14, %c0_15] : memref<1x128xf32, #tpu.memory_space<vmem>>, vector<1x128xf32>
    %27 = vector.broadcast %26 : vector<1x128xf32> to vector<128x128xf32>
    %28 = arith.addf %25, %27 : vector<128x128xf32>
    %cst_16 = arith.constant 0.000000e+00 : f32
    %29 = vector.broadcast %cst_16 : f32 to vector<128x128xf32>
    %30 = arith.maximumf %28, %29 : vector<128x128xf32>
    %31 = vector.extract_strided_slice %30 {offsets = [0, 0], sizes = [8, 128], strides = [1, 1]} : vector<128x128xf32> to vector<8x128xf32>
    %32 = vector.extract_strided_slice %30 {offsets = [8, 0], sizes = [8, 128], strides = [1, 1]} : vector<128x128xf32> to vector<8x128xf32>
    %33 = vector.extract_strided_slice %30 {offsets = [16, 0], sizes = [8, 128], strides = [1, 1]} : vector<128x128xf32> to vector<8x128xf32>
    %34 = vector.extract_strided_slice %30 {offsets = [24, 0], sizes = [8, 128], strides = [1, 1]} : vector<128x128xf32> to vector<8x128xf32>
    %35 = vector.extract_strided_slice %30 {offsets = [32, 0], sizes = [8, 128], strides = [1, 1]} : vector<128x128xf32> to vector<8x128xf32>
    %36 = vector.extract_strided_slice %30 {offsets = [40, 0], sizes = [8, 128], strides = [1, 1]} : vector<128x128xf32> to vector<8x128xf32>
    %37 = vector.extract_strided_slice %30 {offsets = [48, 0], sizes = [8, 128], strides = [1, 1]} : vector<128x128xf32> to vector<8x128xf32>
    %38 = vector.extract_strided_slice %30 {offsets = [56, 0], sizes = [8, 128], strides = [1, 1]} : vector<128x128xf32> to vector<8x128xf32>
    %39 = vector.extract_strided_slice %30 {offsets = [64, 0], sizes = [8, 128], strides = [1, 1]} : vector<128x128xf32> to vector<8x128xf32>
    %40 = vector.extract_strided_slice %30 {offsets = [72, 0], sizes = [8, 128], strides = [1, 1]} : vector<128x128xf32> to vector<8x128xf32>
    %41 = vector.extract_strided_slice %30 {offsets = [80, 0], sizes = [8, 128], strides = [1, 1]} : vector<128x128xf32> to vector<8x128xf32>
    %42 = vector.extract_strided_slice %30 {offsets = [88, 0], sizes = [8, 128], strides = [1, 1]} : vector<128x128xf32> to vector<8x128xf32>
    %43 = vector.extract_strided_slice %30 {offsets = [96, 0], sizes = [8, 128], strides = [1, 1]} : vector<128x128xf32> to vector<8x128xf32>
    %44 = vector.extract_strided_slice %30 {offsets = [104, 0], sizes = [8, 128], strides = [1, 1]} : vector<128x128xf32> to vector<8x128xf32>
    %45 = vector.extract_strided_slice %30 {offsets = [112, 0], sizes = [8, 128], strides = [1, 1]} : vector<128x128xf32> to vector<8x128xf32>
    %46 = vector.extract_strided_slice %30 {offsets = [120, 0], sizes = [8, 128], strides = [1, 1]} : vector<128x128xf32> to vector<8x128xf32>
    %47 = tpu.concatenate %31, %32, %33, %34, %35, %36, %37, %38, %39, %40, %41, %42, %43, %44, %45, %46 in 1 : vector<8x128xf32>, vector<8x128xf32>, vector<8x128xf32>, vector<8x128xf32>, vector<8x128xf32>, vector<8x128xf32>, vector<8x128xf32>, vector<8x128xf32>, vector<8x128xf32>, vector<8x128xf32>, vector<8x128xf32>, vector<8x128xf32>, vector<8x128xf32>, vector<8x128xf32>, vector<8x128xf32>, vector<8x128xf32> -> vector<8x2048xf32>
    %48 = arith.truncf %47 : vector<8x2048xf32> to vector<8x2048xbf16>
    %c0_17 = arith.constant 0 : index
    %c0_18 = arith.constant 0 : index
    %49 = vector.load %arg7[%c0_17, %c0_18] : memref<2048x512xbf16, #tpu.memory_space<vmem>>, vector<2048x512xbf16>
    %cst_19 = arith.constant dense<0.000000e+00> : vector<8x512xf32>
    %50 = tpu.matmul %48, %49, %cst_19 {dimension_numbers = #tpu.dot_dimension_numbers<[1], [0], [0], [1], [0, 0, 1, 1], [], []>} : vector<8x2048xbf16>, vector<2048x512xbf16>, vector<8x512xf32> -> vector<8x512xf32>
    %c0_20 = arith.constant 0 : index
    %c0_21 = arith.constant 0 : index
    %51 = vector.load %arg8[%c0_20, %c0_21] : memref<1x512xf32, #tpu.memory_space<vmem>>, vector<1x512xf32>
    %52 = vector.broadcast %51 : vector<1x512xf32> to vector<8x512xf32>
    %53 = arith.addf %50, %52 : vector<8x512xf32>
    %cst_22 = arith.constant 0.000000e+00 : f32
    %54 = vector.broadcast %cst_22 : f32 to vector<8x512xf32>
    %55 = arith.maximumf %53, %54 : vector<8x512xf32>
    %56 = arith.truncf %55 : vector<8x512xf32> to vector<8x512xbf16>
    %c0_23 = arith.constant 0 : index
    %c0_24 = arith.constant 0 : index
    %57 = vector.load %arg9[%c0_23, %c0_24] : memref<512x128xbf16, #tpu.memory_space<vmem>>, vector<512x128xbf16>
    %cst_25 = arith.constant dense<0.000000e+00> : vector<8x128xf32>
    %58 = tpu.matmul %56, %57, %cst_25 {dimension_numbers = #tpu.dot_dimension_numbers<[1], [0], [0], [1], [0, 0, 1, 1], [], []>} : vector<8x512xbf16>, vector<512x128xbf16>, vector<8x128xf32> -> vector<8x128xf32>
    %c0_26 = arith.constant 0 : index
    %c0_27 = arith.constant 0 : index
    %59 = vector.load %arg10[%c0_26, %c0_27] : memref<1x128xf32, #tpu.memory_space<vmem>>, vector<1x128xf32>
    %60 = vector.broadcast %59 : vector<1x128xf32> to vector<8x128xf32>
    %61 = arith.addf %58, %60 : vector<8x128xf32>
    %c0_28 = arith.constant 0 : index
    %c0_29 = arith.constant 0 : index
    %62 = vector.load %arg11[%c0_28, %c0_29] : memref<8x128xf32, #tpu.memory_space<vmem>>, vector<8x128xf32>
    tpu.vector_store %arg11[%c0_28, %c0_29], %61 {strides = array<i32>} : memref<8x128xf32, #tpu.memory_space<vmem>>, vector<8x128xf32>,
    return
  }
  func.func @transform_0(%arg0: i32) -> (i32, i32, i32) {
    %c0_i32 = arith.constant 0 : i32
    %c0_i32_0 = arith.constant 0 : i32
    %c0_i32_1 = arith.constant 0 : i32
    return %arg0, %c0_i32, %c0_i32_0 : i32, i32, i32
  }
  func.func @transform_1(%arg0: i32) -> (i32, i32) {
    %c0_i32 = arith.constant 0 : i32
    %c0_i32_0 = arith.constant 0 : i32
    %c0_i32_1 = arith.constant 0 : i32
    return %c0_i32, %c0_i32_0 : i32, i32
  }
  func.func @transform_2(%arg0: i32) -> (i32, i32) {
    %c0_i32 = arith.constant 0 : i32
    %c0_i32_0 = arith.constant 0 : i32
    %c0_i32_1 = arith.constant 0 : i32
    return %c0_i32, %c0_i32_0 : i32, i32
  }
  func.func @transform_3(%arg0: i32) -> (i32, i32) {
    %c0_i32 = arith.constant 0 : i32
    %c0_i32_0 = arith.constant 0 : i32
    %c0_i32_1 = arith.constant 0 : i32
    return %c0_i32, %c0_i32_0 : i32, i32
  }
  func.func @transform_4(%arg0: i32) -> (i32, i32) {
    %c0_i32 = arith.constant 0 : i32
    %c0_i32_0 = arith.constant 0 : i32
    %c0_i32_1 = arith.constant 0 : i32
    return %c0_i32, %c0_i32_0 : i32, i32
  }
  func.func @transform_5(%arg0: i32) -> (i32, i32) {
    %c0_i32 = arith.constant 0 : i32
    %c0_i32_0 = arith.constant 0 : i32
    %c0_i32_1 = arith.constant 0 : i32
    return %c0_i32, %c0_i32_0 : i32, i32
  }
  func.func @transform_6(%arg0: i32) -> (i32, i32) {
    %c0_i32 = arith.constant 0 : i32
    %c0_i32_0 = arith.constant 0 : i32
    %c0_i32_1 = arith.constant 0 : i32
    return %c0_i32, %c0_i32_0 : i32, i32
  }
  func.func @transform_7(%arg0: i32) -> (i32, i32) {
    %c0_i32 = arith.constant 0 : i32
    %c0_i32_0 = arith.constant 0 : i32
    %c0_i32_1 = arith.constant 0 : i32
    return %c0_i32, %c0_i32_0 : i32, i32
  }
  func.func @transform_8(%arg0: i32) -> (i32, i32) {
    %c0_i32 = arith.constant 0 : i32
    %c0_i32_0 = arith.constant 0 : i32
    %c0_i32_1 = arith.constant 0 : i32
    return %c0_i32, %c0_i32_0 : i32, i32
  }
  func.func @transform_9(%arg0: i32) -> (i32, i32) {
    %c0_i32 = arith.constant 0 : i32
    %c0_i32_0 = arith.constant 0 : i32
    %c0_i32_1 = arith.constant 0 : i32
    return %c0_i32, %c0_i32_0 : i32, i32
  }
  func.func @transform_10(%arg0: i32) -> (i32, i32) {
    %c0_i32 = arith.constant 0 : i32
    %c0_i32_0 = arith.constant 0 : i32
    return %arg0, %c0_i32 : i32, i32
  }
}

</mosaic_0001>

<llo_original>
// kernel: audio_emotion_cnn_forward.1
$region0: #{audio_emotion_cnn_forward.1}
  #allocation0 [shape = 'u32[]', space=smem, size = 0x4, offset = 0x4, fixed_abs, tag = 'smem constant byte address 0x4 - core index']
  #allocation1 [shape = 'u32[144,128]{1,0:T(1,128)}', space=vmem, size = 0x12000, scoped, tag = 'internal scratch']
  %s0 = inlined_call_operand.vmem [shape: bf16[1,128,16], index: 0, kind: input, shape index: {}]
  %s1 = inlined_call_operand.hbm [shape: bf16[16,256], index: 1, kind: input, shape index: {}]
  %s2 = inlined_call_operand.hbm [shape: f32[1,128], index: 2, kind: input, shape index: {}]
  %s3 = inlined_call_operand.hbm [shape: bf16[256,128], index: 3, kind: input, shape index: {}]
  %s4 = inlined_call_operand.hbm [shape: bf16[256,128], index: 4, kind: input, shape index: {}]
  %s5 = inlined_call_operand.hbm [shape: f32[1,128], index: 5, kind: input, shape index: {}]
  %s6 = inlined_call_operand.hbm [shape: bf16[2048,512], index: 6, kind: input, shape index: {}]
  %s7 = inlined_call_operand.hbm [shape: f32[1,512], index: 7, kind: input, shape index: {}]
  %s8 = inlined_call_operand.hbm [shape: bf16[512,128], index: 8, kind: input, shape index: {}]
  %s9 = inlined_call_operand.hbm [shape: f32[1,128], index: 9, kind: input, shape index: {}]
  %s10 = inlined_call_operand.vmem [shape: f32[8,128], index: 10, kind: output, shape index: {}]
  %s11 = sld [smem:[#allocation0]]
  $region86: #{audio_emotion_cnn_forward.1} parent=0
    _
  %s13 = ssub.s32 1, %s11
  %s14 = scalar_select 0, %s13, %s11
  $region1: #{audio_emotion_cnn_forward.1} parent=0
    #allocation2 [shape = 'u8[8192]{0}', space=vmem, size = 0x2000, scoped, tag = 'input window, operand 1, single buffered']
    #allocation3 [shape = 's32[1]{0}', space=sflag, size = 0x4, scoped, tag = 'scoped memory for audio_emotion_cnn_forward.1']
    #allocation4 [shape = 'u8[512]{0}', space=vmem, size = 0x400, scoped, tag = 'input window, operand 2, single buffered']
    #allocation5 [shape = 's32[1]{0}', space=sflag, size = 0x4, scoped, tag = 'scoped memory for audio_emotion_cnn_forward.1']
    #allocation6 [shape = 'u8[65536]{0}', space=vmem, size = 0x10000, scoped, tag = 'input window, operand 3, single buffered']
    #allocation7 [shape = 'u8[65536]{0}', space=vmem, size = 0x10000, scoped, tag = 'input window, operand 4, single buffered']
    #allocation8 [shape = 's32[1]{0}', space=sflag, size = 0x4, scoped, tag = 'scoped memory for audio_emotion_cnn_forward.1']
    #allocation9 [shape = 'u8[512]{0}', space=vmem, size = 0x400, scoped, tag = 'input window, operand 5, single buffered']
    #allocation10 [shape = 'u8[2097152]{0}', space=vmem, size = 0x200000, scoped, tag = 'input window, operand 6, single buffered']
    #allocation11 [shape = 's32[1]{0}', space=sflag, size = 0x4, scoped, tag = 'scoped memory for audio_emotion_cnn_forward.1']
    #allocation12 [shape = 'u8[2048]{0}', space=vmem, size = 0x800, scoped, tag = 'input window, operand 7, single buffered']
    #allocation13 [shape = 'u8[131072]{0}', space=vmem, size = 0x20000, scoped, tag = 'input window, operand 8, single buffered']
    #allocation14 [shape = 's32[1]{0}', space=sflag, size = 0x4, scoped, tag = 'scoped memory for audio_emotion_cnn_forward.1']
    #allocation15 [shape = 'u8[512]{0}', space=vmem, size = 0x400, scoped, tag = 'input window, operand 9, single buffered']
    %15 = vsyncpa [#allocation3], 0
    %16 = vsyncpa [#allocation5], 0
    %17 = vsyncpa [#allocation8], 0
    %18 = vsyncpa [#allocation11], 0
    %19 = vsyncpa [#allocation14], 0
    // Predicated region
    $region2: #{audio_emotion_cnn_forward.1} parent=1 // pred_check
      _
    $region3: #{audio_emotion_cnn_forward.1} parent=1 // pred_check_branch
      %21 = sbr.rel (0) target = $region5
    $region4: #{audio_emotion_cnn_forward.1} parent=1 // pred_region
      _
    $region5: #{audio_emotion_cnn_forward.1} parent=1 // pred_fallthru
      _
    // Predicated region
    $region6: #{audio_emotion_cnn_forward.1} parent=1 // pred_check
      _
    $region7: #{audio_emotion_cnn_forward.1} parent=1 // pred_check_branch
      %23 = sbr.rel (0) target = $region9
    $region8: #{audio_emotion_cnn_forward.1} parent=1 // pred_region
      %s25 = ssub.s32 256, 256
      %26 = vsyncadd [#allocation3], %s25
      %s27 = sshll.u32 [#allocation2], 4
      %s28 = int_to_ptr.vmem [resolvable:$true] %s27
      %33 = dma.hbm_to_vmem [thread:$0]  %s1, 256, %s28, [#allocation3], 128, 128, 8
    $region9: #{audio_emotion_cnn_forward.1} parent=1 // pred_fallthru
      _
    // Predicated region
    $region10: #{audio_emotion_cnn_forward.1} parent=1 // pred_check
      _
    $region11: #{audio_emotion_cnn_forward.1} parent=1 // pred_check_branch
      %35 = sbr.rel (0) target = $region13
    $region12: #{audio_emotion_cnn_forward.1} parent=1 // pred_region
      %s37 = ssub.s32 16, 16
      %38 = vsyncadd [#allocation5], %s37
      %s40 = sshll.u32 [#allocation4], 4
      %s41 = int_to_ptr.vmem [resolvable:$true] %s40
      %43 = dma.hbm_to_vmem [thread:$0]  %s2, 16, %s41, [#allocation5]
    $region13: #{audio_emotion_cnn_forward.1} parent=1 // pred_fallthru
      _
    // Predicated region
    $region14: #{audio_emotion_cnn_forward.1} parent=1 // pred_check
      _
    $region15: #{audio_emotion_cnn_forward.1} parent=1 // pred_check_branch
      %45 = sbr.rel (0) target = $region17
    $region16: #{audio_emotion_cnn_forward.1} parent=1 // pred_region
      %s47 = ssub.s32 2048, 2048
      %48 = vsyncadd [#allocation5], %s47
      %s49 = sshll.u32 [#allocation6], 4
      %s50 = int_to_ptr.vmem [resolvable:$true] %s49
      %55 = dma.hbm_to_vmem [thread:$0]  %s3, 2048, %s50, [#allocation5], 64, 64, 4
    $region17: #{audio_emotion_cnn_forward.1} parent=1 // pred_fallthru
      _
    // Predicated region
    $region18: #{audio_emotion_cnn_forward.1} parent=1 // pred_check
      _
    $region19: #{audio_emotion_cnn_forward.1} parent=1 // pred_check_branch
      %57 = sbr.rel (0) target = $region21
    $region20: #{audio_emotion_cnn_forward.1} parent=1 // pred_region
      %s59 = ssub.s32 2048, 2048
      %60 = vsyncadd [#allocation8], %s59
      %s61 = sshll.u32 [#allocation7], 4
      %s62 = int_to_ptr.vmem [resolvable:$true] %s61
      %67 = dma.hbm_to_vmem [thread:$0]  %s4, 2048, %s62, [#allocation8], 64, 64, 4
    $region21: #{audio_emotion_cnn_forward.1} parent=1 // pred_fallthru
      _
    // Predicated region
    $region22: #{audio_emotion_cnn_forward.1} parent=1 // pred_check
      _
    $region23: #{audio_emotion_cnn_forward.1} parent=1 // pred_check_branch
      %69 = sbr.rel (0) target = $region25
    $region24: #{audio_emotion_cnn_forward.1} parent=1 // pred_region
      %s71 = ssub.s32 16, 16
      %72 = vsyncadd [#allocation8], %s71
      %s74 = sshll.u32 [#allocation9], 4
      %s75 = int_to_ptr.vmem [resolvable:$true] %s74
      %77 = dma.hbm_to_vmem [thread:$0]  %s5, 16, %s75, [#allocation8]
    $region25: #{audio_emotion_cnn_forward.1} parent=1 // pred_fallthru
      _
    // Predicated region
    $region26: #{audio_emotion_cnn_forward.1} parent=1 // pred_check
      _
    $region27: #{audio_emotion_cnn_forward.1} parent=1 // pred_check_branch
      %79 = sbr.rel (0) target = $region29
    $region28: #{audio_emotion_cnn_forward.1} parent=1 // pred_region
      %s81 = ssub.s32 65536, 65536
      %82 = vsyncadd [#allocation11], %s81
      %s83 = sshll.u32 [#allocation10], 4
      %s84 = int_to_ptr.vmem [resolvable:$true] %s83
      %89 = dma.hbm_to_vmem [thread:$0]  %s6, 65536, %s84, [#allocation11], 256, 256, 16
    $region29: #{audio_emotion_cnn_forward.1} parent=1 // pred_fallthru
      _
    // Predicated region
    $region30: #{audio_emotion_cnn_forward.1} parent=1 // pred_check
      _
    $region31: #{audio_emotion_cnn_forward.1} parent=1 // pred_check_branch
      %91 = sbr.rel (0) target = $region33
    $region32: #{audio_emotion_cnn_forward.1} parent=1 // pred_region
      %s93 = ssub.s32 64, 64
      %94 = vsyncadd [#allocation11], %s93
      %s96 = sshll.u32 [#allocation12], 4
      %s97 = int_to_ptr.vmem [resolvable:$true] %s96
      %99 = dma.hbm_to_vmem [thread:$0]  %s7, 64, %s97, [#allocation11]
    $region33: #{audio_emotion_cnn_forward.1} parent=1 // pred_fallthru
      _
    // Predicated region
    $region34: #{audio_emotion_cnn_forward.1} parent=1 // pred_check
      _
    $region35: #{audio_emotion_cnn_forward.1} parent=1 // pred_check_branch
      %101 = sbr.rel (0) target = $region37
    $region36: #{audio_emotion_cnn_forward.1} parent=1 // pred_region
      %s103 = ssub.s32 4096, 4096
      %104 = vsyncadd [#allocation14], %s103
      %s105 = sshll.u32 [#allocation13], 4
      %s106 = int_to_ptr.vmem [resolvable:$true] %s105
      %111 = dma.hbm_to_vmem [thread:$0]  %s8, 4096, %s106, [#allocation14], 64, 64, 4
    $region37: #{audio_emotion_cnn_forward.1} parent=1 // pred_fallthru
      _
    // Predicated region
    $region38: #{audio_emotion_cnn_forward.1} parent=1 // pred_check
      _
    $region39: #{audio_emotion_cnn_forward.1} parent=1 // pred_check_branch
      %113 = sbr.rel (0) target = $region41
    $region40: #{audio_emotion_cnn_forward.1} parent=1 // pred_region
      %s115 = ssub.s32 16, 16
      %116 = vsyncadd [#allocation14], %s115
      %s118 = sshll.u32 [#allocation15], 4
      %s119 = int_to_ptr.vmem [resolvable:$true] %s118
      %121 = dma.hbm_to_vmem [thread:$0]  %s9, 16, %s119, [#allocation14]
    $region41: #{audio_emotion_cnn_forward.1} parent=1 // pred_fallthru
      _
    // Predicated region
    $region42: #{audio_emotion_cnn_forward.1} parent=1 // pred_check
      _
    $region43: #{audio_emotion_cnn_forward.1} parent=1 // pred_check_branch
      %123 = sbr.rel (0) target = $region45
    $region44: #{audio_emotion_cnn_forward.1} parent=1 // pred_region
      %124 = dma.done [#allocation3], 256
    $region45: #{audio_emotion_cnn_forward.1} parent=1 // pred_fallthru
      _
    // Predicated region
    $region46: #{audio_emotion_cnn_forward.1} parent=1 // pred_check
      _
    $region47: #{audio_emotion_cnn_forward.1} parent=1 // pred_check_branch
      %126 = sbr.rel (0) target = $region49
    $region48: #{audio_emotion_cnn_forward.1} parent=1 // pred_region
      %127 = dma.done [#allocation5], 16
    $region49: #{audio_emotion_cnn_forward.1} parent=1 // pred_fallthru
      _
    // Predicated region
    $region50: #{audio_emotion_cnn_forward.1} parent=1 // pred_check
      _
    $region51: #{audio_emotion_cnn_forward.1} parent=1 // pred_check_branch
      %129 = sbr.rel (0) target = $region53
    $region52: #{audio_emotion_cnn_forward.1} parent=1 // pred_region
      %130 = dma.done [#allocation5], 2048
    $region53: #{audio_emotion_cnn_forward.1} parent=1 // pred_fallthru
      _
    // Predicated region
    $region54: #{audio_emotion_cnn_forward.1} parent=1 // pred_check
      _
    $region55: #{audio_emotion_cnn_forward.1} parent=1 // pred_check_branch
      %132 = sbr.rel (0) target = $region57
    $region56: #{audio_emotion_cnn_forward.1} parent=1 // pred_region
      %133 = dma.done [#allocation8], 2048
    $region57: #{audio_emotion_cnn_forward.1} parent=1 // pred_fallthru
      _
    // Predicated region
    $region58: #{audio_emotion_cnn_forward.1} parent=1 // pred_check
      _
    $region59: #{audio_emotion_cnn_forward.1} parent=1 // pred_check_branch
      %135 = sbr.rel (0) target = $region61
    $region60: #{audio_emotion_cnn_forward.1} parent=1 // pred_region
      %136 = dma.done [#allocation8], 16
    $region61: #{audio_emotion_cnn_forward.1} parent=1 // pred_fallthru
      _
    // Predicated region
    $region62: #{audio_emotion_cnn_forward.1} parent=1 // pred_check
      _
    $region63: #{audio_emotion_cnn_forward.1} parent=1 // pred_check_branch
      %138 = sbr.rel (0) target = $region65
    $region64: #{audio_emotion_cnn_forward.1} parent=1 // pred_region
      %139 = dma.done [#allocation11], 65536
    $region65: #{audio_emotion_cnn_forward.1} parent=1 // pred_fallthru
      _
    // Predicated region
    $region66: #{audio_emotion_cnn_forward.1} parent=1 // pred_check
      _
    $region67: #{audio_emotion_cnn_forward.1} parent=1 // pred_check_branch
      %141 = sbr.rel (0) target = $region69
    $region68: #{audio_emotion_cnn_forward.1} parent=1 // pred_region
      %142 = dma.done [#allocation11], 64
    $region69: #{audio_emotion_cnn_forward.1} parent=1 // pred_fallthru
      _
    // Predicated region
    $region70: #{audio_emotion_cnn_forward.1} parent=1 // pred_check
      _
    $region71: #{audio_emotion_cnn_forward.1} parent=1 // pred_check_branch
      %144 = sbr.rel (0) target = $region73
    $region72: #{audio_emotion_cnn_forward.1} parent=1 // pred_region
      %145 = dma.done [#allocation14], 4096
    $region73: #{audio_emotion_cnn_forward.1} parent=1 // pred_fallthru
      _
    // Predicated region
    $region74: #{audio_emotion_cnn_forward.1} parent=1 // pred_check
      _
    $region75: #{audio_emotion_cnn_forward.1} parent=1 // pred_check_branch
      %147 = sbr.rel (0) target = $region77
    $region76: #{audio_emotion_cnn_forward.1} parent=1 // pred_region
      %148 = dma.done [#allocation14], 16
    $region77: #{audio_emotion_cnn_forward.1} parent=1 // pred_fallthru
      _
    %v150 = vld [vmem:[%s0] sm:$0xf]
    %v151 = vld [vmem:[%s0 + $0x4] sm:$0xf]
    %v152 = vld [vmem:[%s0 + $0x8] sm:$0xf]
    %v153 = vld [vmem:[%s0 + $0xc] sm:$0xf]
    %v154 = vld [vmem:[%s0 + $0x10] sm:$0xf]
    %v155 = vld [vmem:[%s0 + $0x14] sm:$0xf]
    %v156 = vld [vmem:[%s0 + $0x18] sm:$0xf]
    %v157 = vld [vmem:[%s0 + $0x1c] sm:$0xf]
    %v158 = vld [vmem:[%s0 + $0x20] sm:$0xf]
    %v159 = vld [vmem:[%s0 + $0x24] sm:$0xf]
    %v160 = vld [vmem:[%s0 + $0x28] sm:$0xf]
    %v161 = vld [vmem:[%s0 + $0x2c] sm:$0xf]
    %v162 = vld [vmem:[%s0 + $0x30] sm:$0xf]
    %v163 = vld [vmem:[%s0 + $0x34] sm:$0xf]
    %v164 = vld [vmem:[%s0 + $0x38] sm:$0xf]
    %v165 = vld [vmem:[%s0 + $0x3c] sm:$0xf]
    %v166 = vld [vmem:[#allocation2] sm:$0xff]
    %v167 = vld [vmem:[#allocation2 + $0x8] sm:$0xff]
    %v184 = vunpack.c.l.b16 %v150
    %v185 = vunpack.c.l.b16 %v151
    %v186 = vunpack.c.l.b16 %v152
    %v187 = vunpack.c.l.b16 %v153
    %v188 = vunpack.c.l.b16 %v154
    %v189 = vunpack.c.l.b16 %v155
    %v190 = vunpack.c.l.b16 %v156
    %v191 = vunpack.c.l.b16 %v157
    %v192 = vunpack.c.l.b16 %v158
    %v193 = vunpack.c.l.b16 %v159
    %v194 = vunpack.c.l.b16 %v160
    %v195 = vunpack.c.l.b16 %v161
    %v196 = vunpack.c.l.b16 %v162
    %v197 = vunpack.c.l.b16 %v163
    %v198 = vunpack.c.l.b16 %v164
    %v199 = vunpack.c.l.b16 %v165
    %v200 = vpack.c.b16 %v185, %v184
    %v201 = vpack.c.b16 %v187, %v186
    %v202 = vpack.c.b16 %v189, %v188
    %v203 = vpack.c.b16 %v191, %v190
    %v204 = vpack.c.b16 %v193, %v192
    %v205 = vpack.c.b16 %v195, %v194
    %v206 = vpack.c.b16 %v197, %v196
    %v207 = vpack.c.b16 %v199, %v198
    %v210 = vunpack.c.l.b16 %v166
    %v211 = vunpack.c.h.b16 %v166
    %v212 = vunpack.c.l.b16 %v167
    %v213 = vunpack.c.h.b16 %v167
    %v214 = vpack.c.b16 %v212, %v210
    %v215 = vpack.c.b16 %v213, %v211
    %vm218 = vcmask 130048
    %v220 = vsel %vm218, %v200, 0
    %v223 = vsel %vm218, %v201, 0
    %v226 = vsel %vm218, %v202, 0
    %v229 = vsel %vm218, %v203, 0
    %v232 = vsel %vm218, %v204, 0
    %v235 = vsel %vm218, %v205, 0
    %v238 = vsel %vm218, %v206, 0
    %v241 = vsel %vm218, %v207, 0
    %243 = vmatprep.subr.bf16.mxu0 %v215
    %244 = vmatpush1.bf16.msra.mxu0 %v214
    %245 = vmatprep.subr.bf16.mxu0 0
    %246 = vmatpush1.bf16.msra.mxu0 0
    %247 = vmatprep.subr.bf16.mxu0 0
    %248 = vmatpush1.bf16.msra.mxu0 0
    %249 = vmatprep.subr.bf16.mxu0 0
    %250 = vmatpush1.bf16.msra.mxu0 0
    %251 = vmatprep.subr.bf16.mxu0 0
    %252 = vmatpush1.bf16.msra.mxu0 0
    %253 = vmatprep.subr.bf16.mxu0 0
    %254 = vmatpush1.bf16.msra.mxu0 0
    %255 = vmatprep.subr.bf16.mxu0 0
    %256 = vmatpush1.bf16.msra.mxu0 0
    %257 = vmatprep.subr.bf16.mxu0 0
    %258 = vmatpush1.bf16.msra.mxu0 0
    %259 = vmatprep.subr.bf16.mxu0 0
    %260 = vmatpush1.bf16.msra.mxu0 0
    %261 = vmatprep.subr.bf16.mxu0 0
    %262 = vmatpush1.bf16.msra.mxu0 0
    %263 = vmatprep.subr.bf16.mxu0 0
    %264 = vmatpush1.bf16.msra.mxu0 0
    %265 = vmatprep.subr.bf16.mxu0 0
    %266 = vmatpush1.bf16.msra.mxu0 0
    %267 = vmatprep.subr.bf16.mxu0 0
    %268 = vmatpush1.bf16.msra.mxu0 0
    %269 = vmatprep.subr.bf16.mxu0 0
    %270 = vmatpush1.bf16.msra.mxu0 0
    %271 = vmatprep.subr.bf16.mxu0 0
    %272 = vmatpush1.bf16.msra.mxu0 0
    %273 = vmatprep.subr.bf16.mxu0 0
    %274 = vmatpush1.bf16.msra.mxu0 0
    %275 = vmatprep.mubr.bf16.mxu0 0
    %276 = vmatmul.mubr.bf16.gmra.mrb[0].mxu0 %v220
    %v277 = vpop.f32.mrb[0].mxu0
    %v278 = vadd.f32 0.0, %v277
    %v279 = vpop.f32.mrb[0].mxu0
    %v280 = vadd.f32 0.0, %v279
    %v281 = vpop.f32.mrb[0].mxu0
    %v282 = vadd.f32 0.0, %v281
    %v283 = vpop.f32.mrb[0].mxu0
    %v284 = vadd.f32 0.0, %v283
    %285 = vmatprep.mubr.bf16.mxu0 0
    %286 = vmatmul.mubr.bf16.gmra.mrb[0].mxu0 %v223
    %v287 = vpop.f32.mrb[0].mxu0
    %v288 = vadd.f32 0.0, %v287
    %v289 = vpop.f32.mrb[0].mxu0
    %v290 = vadd.f32 0.0, %v289
    %v291 = vpop.f32.mrb[0].mxu0
    %v292 = vadd.f32 0.0, %v291
    %v293 = vpop.f32.mrb[0].mxu0
    %v294 = vadd.f32 0.0, %v293
    %295 = vmatprep.mubr.bf16.mxu0 0
    %296 = vmatmul.mubr.bf16.gmra.mrb[0].mxu0 %v226
    %v297 = vpop.f32.mrb[0].mxu0
    %v298 = vadd.f32 0.0, %v297
    %v299 = vpop.f32.mrb[0].mxu0
    %v300 = vadd.f32 0.0, %v299
    %v301 = vpop.f32.mrb[0].mxu0
    %v302 = vadd.f32 0.0, %v301
    %v303 = vpop.f32.mrb[0].mxu0
    %v304 = vadd.f32 0.0, %v303
    %305 = vmatprep.mubr.bf16.mxu0 0
    %306 = vmatmul.mubr.bf16.gmra.mrb[0].mxu0 %v229
    %v307 = vpop.f32.mrb[0].mxu0
    %v308 = vadd.f32 0.0, %v307
    %v309 = vpop.f32.mrb[0].mxu0
    %v310 = vadd.f32 0.0, %v309
    %v311 = vpop.f32.mrb[0].mxu0
    %v312 = vadd.f32 0.0, %v311
    %v313 = vpop.f32.mrb[0].mxu0
    %v314 = vadd.f32 0.0, %v313
    %315 = vmatprep.mubr.bf16.mxu0 0
    %316 = vmatmul.mubr.bf16.gmra.mrb[0].mxu0 %v232
    %v317 = vpop.f32.mrb[0].mxu0
    %v318 = vadd.f32 0.0, %v317
    %v319 = vpop.f32.mrb[0].mxu0
    %v320 = vadd.f32 0.0, %v319
    %v321 = vpop.f32.mrb[0].mxu0
    %v322 = vadd.f32 0.0, %v321
    %v323 = vpop.f32.mrb[0].mxu0
    %v324 = vadd.f32 0.0, %v323
    %325 = vmatprep.mubr.bf16.mxu0 0
    %326 = vmatmul.mubr.bf16.gmra.mrb[0].mxu0 %v235
    %v327 = vpop.f32.mrb[0].mxu0
    %v328 = vadd.f32 0.0, %v327
    %v329 = vpop.f32.mrb[0].mxu0
    %v330 = vadd.f32 0.0, %v329
    %v331 = vpop.f32.mrb[0].mxu0
    %v332 = vadd.f32 0.0, %v331
    %v333 = vpop.f32.mrb[0].mxu0
    %v334 = vadd.f32 0.0, %v333
    %335 = vmatprep.mubr.bf16.mxu0 0
    %336 = vmatmul.mubr.bf16.gmra.mrb[0].mxu0 %v238
    %v337 = vpop.f32.mrb[0].mxu0
    %v338 = vadd.f32 0.0, %v337
    %v339 = vpop.f32.mrb[0].mxu0
    %v340 = vadd.f32 0.0, %v339
    %v341 = vpop.f32.mrb[0].mxu0
    %v342 = vadd.f32 0.0, %v341
    %v343 = vpop.f32.mrb[0].mxu0
    %v344 = vadd.f32 0.0, %v343
    %345 = vmatprep.mubr.bf16.mxu0 0
    %346 = vmatmul.mubr.bf16.gmra.mrb[0].mxu0 %v241
    %v347 = vpop.f32.mrb[0].mxu0
    %v348 = vadd.f32 0.0, %v347
    %v349 = vpop.f32.mrb[0].mxu0
    %v350 = vadd.f32 0.0, %v349
    %v351 = vpop.f32.mrb[0].mxu0
    %v352 = vadd.f32 0.0, %v351
    %v353 = vpop.f32.mrb[0].mxu0
    %v354 = vadd.f32 0.0, %v353
    %355 = vdwg.mxu0
    %v356 = vmax.f32 %v278, %v280
    %v357 = vmax.f32 %v282, %v284
    %v358 = vmax.f32 %v288, %v290
    %v359 = vmax.f32 %v292, %v294
    %v360 = vmax.f32 %v298, %v300
    %v361 = vmax.f32 %v302, %v304
    %v362 = vmax.f32 %v308, %v310
    %v363 = vmax.f32 %v312, %v314
    %v364 = vmax.f32 %v318, %v320
    %v365 = vmax.f32 %v322, %v324
    %v366 = vmax.f32 %v328, %v330
    %v367 = vmax.f32 %v332, %v334
    %v368 = vmax.f32 %v338, %v340
    %v369 = vmax.f32 %v342, %v344
    %v370 = vmax.f32 %v348, %v350
    %v371 = vmax.f32 %v352, %v354
    %v372 = vld [vmem:[#allocation4] sm:$0x1]
    %v374 = vlaneseq
    %v375 = vshrl.u32 %v374, 7
    %v376 = vsub.s32 0, %v375
    %v377 = vrot.slane %v372, %v376
    %v379 = vadd.f32 %v356, %v377
    %v380 = vadd.f32 %v357, %v377
    %v381 = vadd.f32 %v358, %v377
    %v382 = vadd.f32 %v359, %v377
    %v383 = vadd.f32 %v360, %v377
    %v384 = vadd.f32 %v361, %v377
    %v385 = vadd.f32 %v362, %v377
    %v386 = vadd.f32 %v363, %v377
    %v387 = vadd.f32 %v364, %v377
    %v388 = vadd.f32 %v365, %v377
    %v389 = vadd.f32 %v366, %v377
    %v390 = vadd.f32 %v367, %v377
    %v391 = vadd.f32 %v368, %v377
    %v392 = vadd.f32 %v369, %v377
    %v393 = vadd.f32 %v370, %v377
    %v394 = vadd.f32 %v371, %v377
    %v395 = vmax.f32 %v379, 0.0
    %v396 = vmax.f32 %v380, 0.0
    %v397 = vmax.f32 %v381, 0.0
    %v398 = vmax.f32 %v382, 0.0
    %v399 = vmax.f32 %v383, 0.0
    %v400 = vmax.f32 %v384, 0.0
    %v401 = vmax.f32 %v385, 0.0
    %v402 = vmax.f32 %v386, 0.0
    %v403 = vmax.f32 %v387, 0.0
    %v404 = vmax.f32 %v388, 0.0
    %v405 = vmax.f32 %v389, 0.0
    %v406 = vmax.f32 %v390, 0.0
    %v407 = vmax.f32 %v391, 0.0
    %v408 = vmax.f32 %v392, 0.0
    %v409 = vmax.f32 %v393, 0.0
    %v410 = vmax.f32 %v394, 0.0
    %v411 = vpack.c.bf16 %v396, %v395
    %v412 = vpack.c.bf16 %v395, 0.0
    %v413 = vpack.c.bf16 %v398, %v397
    %v414 = vpack.c.bf16 %v397, %v396
    %v415 = vpack.c.bf16 %v400, %v399
    %v416 = vpack.c.bf16 %v399, %v398
    %v417 = vpack.c.bf16 %v402, %v401
    %v418 = vpack.c.bf16 %v401, %v400
    %v419 = vpack.c.bf16 %v404, %v403
    %v420 = vpack.c.bf16 %v403, %v402
    %v421 = vpack.c.bf16 %v406, %v405
    %v422 = vpack.c.bf16 %v405, %v404
    %v423 = vpack.c.bf16 %v408, %v407
    %v424 = vpack.c.bf16 %v407, %v406
    %v425 = vpack.c.bf16 %v410, %v409
    %v426 = vpack.c.bf16 %v409, %v408
    %v427 = vpack.c.bf16 0.0, %v410
    %v428 = vld [vmem:[#allocation6] sm:$0xf]
    %v429 = vld [vmem:[#allocation6 + $0x4] sm:$0xf]
    %v430 = vld [vmem:[#allocation6 + $0x8] sm:$0xf]
    %v431 = vld [vmem:[#allocation6 + $0xc] sm:$0xf]
    %v432 = vld [vmem:[#allocation6 + $0x10] sm:$0xf]
    %v433 = vld [vmem:[#allocation6 + $0x14] sm:$0xf]
    %v434 = vld [vmem:[#allocation6 + $0x18] sm:$0xf]
    %v435 = vld [vmem:[#allocation6 + $0x1c] sm:$0xf]
    %v436 = vld [vmem:[#allocation6 + $0x20] sm:$0xf]
    %v437 = vld [vmem:[#allocation6 + $0x24] sm:$0xf]
    %v438 = vld [vmem:[#allocation6 + $0x28] sm:$0xf]
    %v439 = vld [vmem:[#allocation6 + $0x2c] sm:$0xf]
    %v440 = vld [vmem:[#allocation6 + $0x30] sm:$0xf]
    %v441 = vld [vmem:[#allocation6 + $0x34] sm:$0xf]
    %v442 = vld [vmem:[#allocation6 + $0x38] sm:$0xf]
    %v443 = vld [vmem:[#allocation6 + $0x3c] sm:$0xf]
    %v444 = vld [vmem:[#allocation6 + $0x40] sm:$0xf]
    %v445 = vld [vmem:[#allocation6 + $0x44] sm:$0xf]
    %v446 = vld [vmem:[#allocation6 + $0x48] sm:$0xf]
    %v447 = vld [vmem:[#allocation6 + $0x4c] sm:$0xf]
    %v448 = vld [vmem:[#allocation6 + $0x50] sm:$0xf]
    %v449 = vld [vmem:[#allocation6 + $0x54] sm:$0xf]
    %v450 = vld [vmem:[#allocation6 + $0x58] sm:$0xf]
    %v451 = vld [vmem:[#allocation6 + $0x5c] sm:$0xf]
    %v452 = vld [vmem:[#allocation6 + $0x60] sm:$0xf]
    %v453 = vld [vmem:[#allocation6 + $0x64] sm:$0xf]
    %v454 = vld [vmem:[#allocation6 + $0x68] sm:$0xf]
    %v455 = vld [vmem:[#allocation6 + $0x6c] sm:$0xf]
    %v456 = vld [vmem:[#allocation6 + $0x70] sm:$0xf]
    %v457 = vld [vmem:[#allocation6 + $0x74] sm:$0xf]
    %v458 = vld [vmem:[#allocation6 + $0x78] sm:$0xf]
    %v459 = vld [vmem:[#allocation6 + $0x7c] sm:$0xf]
    %v492 = vunpack.c.l.b16 %v428
    %v493 = vunpack.c.l.b16 %v429
    %v494 = vunpack.c.l.b16 %v430
    %v495 = vunpack.c.l.b16 %v431
    %v496 = vunpack.c.l.b16 %v432
    %v497 = vunpack.c.l.b16 %v433
    %v498 = vunpack.c.l.b16 %v434
    %v499 = vunpack.c.l.b16 %v435
    %v500 = vunpack.c.l.b16 %v436
    %v501 = vunpack.c.l.b16 %v437
    %v502 = vunpack.c.l.b16 %v438
    %v503 = vunpack.c.l.b16 %v439
    %v504 = vunpack.c.l.b16 %v440
    %v505 = vunpack.c.l.b16 %v441
    %v506 = vunpack.c.l.b16 %v442
    %v507 = vunpack.c.l.b16 %v443
    %v508 = vunpack.c.l.b16 %v444
    %v509 = vunpack.c.l.b16 %v445
    %v510 = vunpack.c.l.b16 %v446
    %v511 = vunpack.c.l.b16 %v447
    %v512 = vunpack.c.l.b16 %v448
    %v513 = vunpack.c.l.b16 %v449
    %v514 = vunpack.c.l.b16 %v450
    %v515 = vunpack.c.l.b16 %v451
    %v516 = vunpack.c.l.b16 %v452
    %v517 = vunpack.c.l.b16 %v453
    %v518 = vunpack.c.l.b16 %v454
    %v519 = vunpack.c.l.b16 %v455
    %v520 = vunpack.c.l.b16 %v456
    %v521 = vunpack.c.l.b16 %v457
    %v522 = vunpack.c.l.b16 %v458
    %v523 = vunpack.c.l.b16 %v459
    %v524 = vpack.c.b16 %v493, %v492
    %v525 = vpack.c.b16 %v495, %v494
    %v526 = vpack.c.b16 %v497, %v496
    %v527 = vpack.c.b16 %v499, %v498
    %v528 = vpack.c.b16 %v501, %v500
    %v529 = vpack.c.b16 %v503, %v502
    %v530 = vpack.c.b16 %v505, %v504
    %v531 = vpack.c.b16 %v507, %v506
    %v532 = vpack.c.b16 %v509, %v508
    %v533 = vpack.c.b16 %v511, %v510
    %v534 = vpack.c.b16 %v513, %v512
    %v535 = vpack.c.b16 %v515, %v514
    %v536 = vpack.c.b16 %v517, %v516
    %v537 = vpack.c.b16 %v519, %v518
    %v538 = vpack.c.b16 %v521, %v520
    %v539 = vpack.c.b16 %v523, %v522
    %556 = vmatprep.subr.bf16.mxu0 0
    %557 = vmatpush1.bf16.msra.mxu0 %v524
    %558 = vmatprep.subr.bf16.mxu0 0
    %559 = vmatpush1.bf16.msra.mxu0 %v525
    %560 = vmatprep.subr.bf16.mxu0 0
    %561 = vmatpush1.bf16.msra.mxu0 %v526
    %562 = vmatprep.subr.bf16.mxu0 0
    %563 = vmatpush1.bf16.msra.mxu0 %v527
    %564 = vmatprep.subr.bf16.mxu0 0
    %565 = vmatpush1.bf16.msra.mxu0 %v528
    %566 = vmatprep.subr.bf16.mxu0 0
    %567 = vmatpush1.bf16.msra.mxu0 %v529
    %568 = vmatprep.subr.bf16.mxu0 0
    %569 = vmatpush1.bf16.msra.mxu0 %v530
    %570 = vmatprep.subr.bf16.mxu0 0
    %571 = vmatpush1.bf16.msra.mxu0 %v531
    %572 = vmatprep.subr.bf16.mxu0 0
    %573 = vmatpush1.bf16.msra.mxu0 %v532
    %574 = vmatprep.subr.bf16.mxu0 0
    %575 = vmatpush1.bf16.msra.mxu0 %v533
    %576 = vmatprep.subr.bf16.mxu0 0
    %577 = vmatpush1.bf16.msra.mxu0 %v534
    %578 = vmatprep.subr.bf16.mxu0 0
    %579 = vmatpush1.bf16.msra.mxu0 %v535
    %580 = vmatprep.subr.bf16.mxu0 0
    %581 = vmatpush1.bf16.msra.mxu0 %v536
    %582 = vmatprep.subr.bf16.mxu0 0
    %583 = vmatpush1.bf16.msra.mxu0 %v537
    %584 = vmatprep.subr.bf16.mxu0 0
    %585 = vmatpush1.bf16.msra.mxu0 %v538
    %586 = vmatprep.subr.bf16.mxu0 0
    %587 = vmatpush1.bf16.msra.mxu0 %v539
    %588 = vmatprep.mubr.bf16.mxu0 %v412
    %589 = vmatmul.mubr.bf16.gmra.mrb[0].mxu0 %v411
    %v590 = vpop.f32.mrb[0].mxu0
    %v591 = vadd.f32 0.0, %v590
    %v592 = vpop.f32.mrb[0].mxu0
    %v593 = vpop.f32.mrb[0].mxu0
    %v594 = vadd.f32 0.0, %v593
    %v595 = vpop.f32.mrb[0].mxu0
    %596 = vmatprep.mubr.bf16.mxu0 %v414
    %597 = vmatmul.mubr.bf16.gmra.mrb[0].mxu0 %v413
    %v598 = vpop.f32.mrb[0].mxu0
    %v599 = vadd.f32 0.0, %v598
    %v600 = vpop.f32.mrb[0].mxu0
    %v601 = vpop.f32.mrb[0].mxu0
    %v602 = vadd.f32 0.0, %v601
    %v603 = vpop.f32.mrb[0].mxu0
    %604 = vmatprep.mubr.bf16.mxu0 %v416
    %605 = vmatmul.mubr.bf16.gmra.mrb[0].mxu0 %v415
    %v606 = vpop.f32.mrb[0].mxu0
    %v607 = vadd.f32 0.0, %v606
    %v608 = vpop.f32.mrb[0].mxu0
    %v609 = vpop.f32.mrb[0].mxu0
    %v610 = vadd.f32 0.0, %v609
    %v611 = vpop.f32.mrb[0].mxu0
    %612 = vmatprep.mubr.bf16.mxu0 %v418
    %613 = vmatmul.mubr.bf16.gmra.mrb[0].mxu0 %v417
    %v614 = vpop.f32.mrb[0].mxu0
    %v615 = vadd.f32 0.0, %v614
    %v616 = vpop.f32.mrb[0].mxu0
    %v617 = vpop.f32.mrb[0].mxu0
    %v618 = vadd.f32 0.0, %v617
    %v619 = vpop.f32.mrb[0].mxu0
    %620 = vmatprep.mubr.bf16.mxu0 %v420
    %621 = vmatmul.mubr.bf16.gmra.mrb[0].mxu0 %v419
    %v622 = vpop.f32.mrb[0].mxu0
    %v623 = vadd.f32 0.0, %v622
    %v624 = vpop.f32.mrb[0].mxu0
    %v625 = vpop.f32.mrb[0].mxu0
    %v626 = vadd.f32 0.0, %v625
    %v627 = vpop.f32.mrb[0].mxu0
    %628 = vmatprep.mubr.bf16.mxu0 %v422
    %629 = vmatmul.mubr.bf16.gmra.mrb[0].mxu0 %v421
    %v630 = vpop.f32.mrb[0].mxu0
    %v631 = vadd.f32 0.0, %v630
    %v632 = vpop.f32.mrb[0].mxu0
    %v633 = vpop.f32.mrb[0].mxu0
    %v634 = vadd.f32 0.0, %v633
    %v635 = vpop.f32.mrb[0].mxu0
    %636 = vmatprep.mubr.bf16.mxu0 %v424
    %637 = vmatmul.mubr.bf16.gmra.mrb[0].mxu0 %v423
    %v638 = vpop.f32.mrb[0].mxu0
    %v639 = vadd.f32 0.0, %v638
    %v640 = vpop.f32.mrb[0].mxu0
    %v641 = vpop.f32.mrb[0].mxu0
    %v642 = vadd.f32 0.0, %v641
    %v643 = vpop.f32.mrb[0].mxu0
    %644 = vmatprep.mubr.bf16.mxu0 %v426
    %645 = vmatmul.mubr.bf16.gmra.mrb[0].mxu0 %v425
    %v646 = vpop.f32.mrb[0].mxu0
    %v647 = vadd.f32 0.0, %v646
    %v648 = vpop.f32.mrb[0].mxu0
    %v649 = vpop.f32.mrb[0].mxu0
    %v650 = vadd.f32 0.0, %v649
    %v651 = vpop.f32.mrb[0].mxu0
    %652 = vdwg.mxu0
    %v653 = vld [vmem:[#allocation7] sm:$0xf]
    %v654 = vld [vmem:[#allocation7 + $0x4] sm:$0xf]
    %v655 = vld [vmem:[#allocation7 + $0x8] sm:$0xf]
    %v656 = vld [vmem:[#allocation7 + $0xc] sm:$0xf]
    %v657 = vld [vmem:[#allocation7 + $0x10] sm:$0xf]
    %v658 = vld [vmem:[#allocation7 + $0x14] sm:$0xf]
    %v659 = vld [vmem:[#allocation7 + $0x18] sm:$0xf]
    %v660 = vld [vmem:[#allocation7 + $0x1c] sm:$0xf]
    %v661 = vld [vmem:[#allocation7 + $0x20] sm:$0xf]
    %v662 = vld [vmem:[#allocation7 + $0x24] sm:$0xf]
    %v663 = vld [vmem:[#allocation7 + $0x28] sm:$0xf]
    %v664 = vld [vmem:[#allocation7 + $0x2c] sm:$0xf]
    %v665 = vld [vmem:[#allocation7 + $0x30] sm:$0xf]
    %v666 = vld [vmem:[#allocation7 + $0x34] sm:$0xf]
    %v667 = vld [vmem:[#allocation7 + $0x38] sm:$0xf]
    %v668 = vld [vmem:[#allocation7 + $0x3c] sm:$0xf]
    %v669 = vld [vmem:[#allocation7 + $0x40] sm:$0xf]
    %v670 = vld [vmem:[#allocation7 + $0x44] sm:$0xf]
    %v671 = vld [vmem:[#allocation7 + $0x48] sm:$0xf]
    %v672 = vld [vmem:[#allocation7 + $0x4c] sm:$0xf]
    %v673 = vld [vmem:[#allocation7 + $0x50] sm:$0xf]
    %v674 = vld [vmem:[#allocation7 + $0x54] sm:$0xf]
    %v675 = vld [vmem:[#allocation7 + $0x58] sm:$0xf]
    %v676 = vld [vmem:[#allocation7 + $0x5c] sm:$0xf]
    %v677 = vld [vmem:[#allocation7 + $0x60] sm:$0xf]
    %v678 = vld [vmem:[#allocation7 + $0x64] sm:$0xf]
    %v679 = vld [vmem:[#allocation7 + $0x68] sm:$0xf]
    %v680 = vld [vmem:[#allocation7 + $0x6c] sm:$0xf]
    %v681 = vld [vmem:[#allocation7 + $0x70] sm:$0xf]
    %v682 = vld [vmem:[#allocation7 + $0x74] sm:$0xf]
    %v683 = vld [vmem:[#allocation7 + $0x78] sm:$0xf]
    %v684 = vld [vmem:[#allocation7 + $0x7c] sm:$0xf]
    %v717 = vunpack.c.l.b16 %v653
    %v718 = vunpack.c.l.b16 %v654
    %v719 = vunpack.c.l.b16 %v655
    %v720 = vunpack.c.l.b16 %v656
    %v721 = vunpack.c.l.b16 %v657
    %v722 = vunpack.c.l.b16 %v658
    %v723 = vunpack.c.l.b16 %v659
    %v724 = vunpack.c.l.b16 %v660
    %v725 = vunpack.c.l.b16 %v661
    %v726 = vunpack.c.l.b16 %v662
    %v727 = vunpack.c.l.b16 %v663
    %v728 = vunpack.c.l.b16 %v664
    %v729 = vunpack.c.l.b16 %v665
    %v730 = vunpack.c.l.b16 %v666
    %v731 = vunpack.c.l.b16 %v667
    %v732 = vunpack.c.l.b16 %v668
    %v733 = vunpack.c.l.b16 %v669
    %v734 = vunpack.c.l.b16 %v670
    %v735 = vunpack.c.l.b16 %v671
    %v736 = vunpack.c.l.b16 %v672
    %v737 = vunpack.c.l.b16 %v673
    %v738 = vunpack.c.l.b16 %v674
    %v739 = vunpack.c.l.b16 %v675
    %v740 = vunpack.c.l.b16 %v676
    %v741 = vunpack.c.l.b16 %v677
    %v742 = vunpack.c.l.b16 %v678
    %v743 = vunpack.c.l.b16 %v679
    %v744 = vunpack.c.l.b16 %v680
    %v745 = vunpack.c.l.b16 %v681
    %v746 = vunpack.c.l.b16 %v682
    %v747 = vunpack.c.l.b16 %v683
    %v748 = vunpack.c.l.b16 %v684
    %v749 = vpack.c.b16 %v718, %v717
    %v750 = vpack.c.b16 %v720, %v719
    %v751 = vpack.c.b16 %v722, %v721
    %v752 = vpack.c.b16 %v724, %v723
    %v753 = vpack.c.b16 %v726, %v725
    %v754 = vpack.c.b16 %v728, %v727
    %v755 = vpack.c.b16 %v730, %v729
    %v756 = vpack.c.b16 %v732, %v731
    %v757 = vpack.c.b16 %v734, %v733
    %v758 = vpack.c.b16 %v736, %v735
    %v759 = vpack.c.b16 %v738, %v737
    %v760 = vpack.c.b16 %v740, %v739
    %v761 = vpack.c.b16 %v742, %v741
    %v762 = vpack.c.b16 %v744, %v743
    %v763 = vpack.c.b16 %v746, %v745
    %v764 = vpack.c.b16 %v748, %v747
    %781 = vmatprep.subr.bf16.mxu0 0
    %782 = vmatpush1.bf16.msra.mxu0 %v749
    %783 = vmatprep.subr.bf16.mxu0 0
    %784 = vmatpush1.bf16.msra.mxu0 %v750
    %785 = vmatprep.subr.bf16.mxu0 0
    %786 = vmatpush1.bf16.msra.mxu0 %v751
    %787 = vmatprep.subr.bf16.mxu0 0
    %788 = vmatpush1.bf16.msra.mxu0 %v752
    %789 = vmatprep.subr.bf16.mxu0 0
    %790 = vmatpush1.bf16.msra.mxu0 %v753
    %791 = vmatprep.subr.bf16.mxu0 0
    %792 = vmatpush1.bf16.msra.mxu0 %v754
    %793 = vmatprep.subr.bf16.mxu0 0
    %794 = vmatpush1.bf16.msra.mxu0 %v755
    %795 = vmatprep.subr.bf16.mxu0 0
    %796 = vmatpush1.bf16.msra.mxu0 %v756
    %797 = vmatprep.subr.bf16.mxu0 0
    %798 = vmatpush1.bf16.msra.mxu0 %v757
    %799 = vmatprep.subr.bf16.mxu0 0
    %800 = vmatpush1.bf16.msra.mxu0 %v758
    %801 = vmatprep.subr.bf16.mxu0 0
    %802 = vmatpush1.bf16.msra.mxu0 %v759
    %803 = vmatprep.subr.bf16.mxu0 0
    %804 = vmatpush1.bf16.msra.mxu0 %v760
    %805 = vmatprep.subr.bf16.mxu0 0
    %806 = vmatpush1.bf16.msra.mxu0 %v761
    %807 = vmatprep.subr.bf16.mxu0 0
    %808 = vmatpush1.bf16.msra.mxu0 %v762
    %809 = vmatprep.subr.bf16.mxu0 0
    %810 = vmatpush1.bf16.msra.mxu0 %v763
    %811 = vmatprep.subr.bf16.mxu0 0
    %812 = vmatpush1.bf16.msra.mxu0 %v764
    %813 = vmatprep.mubr.bf16.mxu0 %v414
    %814 = vmatmul.mubr.bf16.gmra.mrb[0].mxu0 %v411
    %v815 = vpop.f32.mrb[0].mxu0
    %v816 = vadd.f32 0.0, %v815
    %v817 = vpop.f32.mrb[0].mxu0
    %v818 = vpop.f32.mrb[0].mxu0
    %v819 = vadd.f32 0.0, %v818
    %v820 = vpop.f32.mrb[0].mxu0
    %821 = vmatprep.mubr.bf16.mxu0 %v416
    %822 = vmatmul.mubr.bf16.gmra.mrb[0].mxu0 %v413
    %v823 = vpop.f32.mrb[0].mxu0
    %v824 = vadd.f32 0.0, %v823
    %v825 = vpop.f32.mrb[0].mxu0
    %v826 = vpop.f32.mrb[0].mxu0
    %v827 = vadd.f32 0.0, %v826
    %v828 = vpop.f32.mrb[0].mxu0
    %829 = vmatprep.mubr.bf16.mxu0 %v418
    %830 = vmatmul.mubr.bf16.gmra.mrb[0].mxu0 %v415
    %v831 = vpop.f32.mrb[0].mxu0
    %v832 = vadd.f32 0.0, %v831
    %v833 = vpop.f32.mrb[0].mxu0
    %v834 = vpop.f32.mrb[0].mxu0
    %v835 = vadd.f32 0.0, %v834
    %v836 = vpop.f32.mrb[0].mxu0
    %837 = vmatprep.mubr.bf16.mxu0 %v420
    %838 = vmatmul.mubr.bf16.gmra.mrb[0].mxu0 %v417
    %v839 = vpop.f32.mrb[0].mxu0
    %v840 = vadd.f32 0.0, %v839
    %v841 = vpop.f32.mrb[0].mxu0
    %v842 = vpop.f32.mrb[0].mxu0
    %v843 = vadd.f32 0.0, %v842
    %v844 = vpop.f32.mrb[0].mxu0
    %845 = vmatprep.mubr.bf16.mxu0 %v422
    %846 = vmatmul.mubr.bf16.gmra.mrb[0].mxu0 %v419
    %v847 = vpop.f32.mrb[0].mxu0
    %v848 = vadd.f32 0.0, %v847
    %v849 = vpop.f32.mrb[0].mxu0
    %v850 = vpop.f32.mrb[0].mxu0
    %v851 = vadd.f32 0.0, %v850
    %v852 = vpop.f32.mrb[0].mxu0
    %853 = vmatprep.mubr.bf16.mxu0 %v424
    %854 = vmatmul.mubr.bf16.gmra.mrb[0].mxu0 %v421
    %v855 = vpop.f32.mrb[0].mxu0
    %v856 = vadd.f32 0.0, %v855
    %v857 = vpop.f32.mrb[0].mxu0
    %v858 = vpop.f32.mrb[0].mxu0
    %v859 = vadd.f32 0.0, %v858
    %v860 = vpop.f32.mrb[0].mxu0
    %861 = vmatprep.mubr.bf16.mxu0 %v426
    %862 = vmatmul.mubr.bf16.gmra.mrb[0].mxu0 %v423
    %v863 = vpop.f32.mrb[0].mxu0
    %v864 = vadd.f32 0.0, %v863
    %v865 = vpop.f32.mrb[0].mxu0
    %v866 = vpop.f32.mrb[0].mxu0
    %v867 = vadd.f32 0.0, %v866
    %v868 = vpop.f32.mrb[0].mxu0
    %869 = vmatprep.mubr.bf16.mxu0 %v427
    %870 = vmatmul.mubr.bf16.gmra.mrb[0].mxu0 %v425
    %v871 = vpop.f32.mrb[0].mxu0
    %v872 = vadd.f32 0.0, %v871
    %v873 = vpop.f32.mrb[0].mxu0
    %v874 = vpop.f32.mrb[0].mxu0
    %v875 = vadd.f32 0.0, %v874
    %v876 = vpop.f32.mrb[0].mxu0
    %877 = vdwg.mxu0
    %v878 = vmax.f32 %v591, %v816
    %v879 = vmax.f32 %v594, %v819
    %v880 = vmax.f32 %v599, %v824
    %v881 = vmax.f32 %v602, %v827
    %v882 = vmax.f32 %v607, %v832
    %v883 = vmax.f32 %v610, %v835
    %v884 = vmax.f32 %v615, %v840
    %v885 = vmax.f32 %v618, %v843
    %v886 = vmax.f32 %v623, %v848
    %v887 = vmax.f32 %v626, %v851
    %v888 = vmax.f32 %v631, %v856
    %v889 = vmax.f32 %v634, %v859
    %v890 = vmax.f32 %v639, %v864
    %v891 = vmax.f32 %v642, %v867
    %v892 = vmax.f32 %v647, %v872
    %v893 = vmax.f32 %v650, %v875
    %v894 = vld [vmem:[#allocation9] sm:$0x1]
    %v896 = vlaneseq
    %v897 = vshrl.u32 %v896, 7
    %v898 = vsub.s32 0, %v897
    %v899 = vrot.slane %v894, %v898
    %v901 = vadd.f32 %v878, %v899
    %v902 = vadd.f32 %v879, %v899
    %v903 = vadd.f32 %v880, %v899
    %v904 = vadd.f32 %v881, %v899
    %v905 = vadd.f32 %v882, %v899
    %v906 = vadd.f32 %v883, %v899
    %v907 = vadd.f32 %v884, %v899
    %v908 = vadd.f32 %v885, %v899
    %v909 = vadd.f32 %v886, %v899
    %v910 = vadd.f32 %v887, %v899
    %v911 = vadd.f32 %v888, %v899
    %v912 = vadd.f32 %v889, %v899
    %v913 = vadd.f32 %v890, %v899
    %v914 = vadd.f32 %v891, %v899
    %v915 = vadd.f32 %v892, %v899
    %v916 = vadd.f32 %v893, %v899
    %v917 = vmax.f32 %v901, 0.0
    %v918 = vmax.f32 %v902, 0.0
    %v919 = vmax.f32 %v903, 0.0
    %v920 = vmax.f32 %v904, 0.0
    %v921 = vmax.f32 %v905, 0.0
    %v922 = vmax.f32 %v906, 0.0
    %v923 = vmax.f32 %v907, 0.0
    %v924 = vmax.f32 %v908, 0.0
    %v925 = vmax.f32 %v909, 0.0
    %v926 = vmax.f32 %v910, 0.0
    %v927 = vmax.f32 %v911, 0.0
    %v928 = vmax.f32 %v912, 0.0
    %v929 = vmax.f32 %v913, 0.0
    %v930 = vmax.f32 %v914, 0.0
    %v931 = vmax.f32 %v915, 0.0
    %v932 = vmax.f32 %v916, 0.0
    %v933 = vpack.c.bf16 %v917, %v917
    %v934 = vpack.c.bf16 %v918, %v918
    %v935 = vpack.c.bf16 %v919, %v919
    %v936 = vpack.c.bf16 %v920, %v920
    %v937 = vpack.c.bf16 %v921, %v921
    %v938 = vpack.c.bf16 %v922, %v922
    %v939 = vpack.c.bf16 %v923, %v923
    %v940 = vpack.c.bf16 %v924, %v924
    %v941 = vpack.c.bf16 %v925, %v925
    %v942 = vpack.c.bf16 %v926, %v926
    %v943 = vpack.c.bf16 %v927, %v927
    %v944 = vpack.c.bf16 %v928, %v928
    %v945 = vpack.c.bf16 %v929, %v929
    %v946 = vpack.c.bf16 %v930, %v930
    %v947 = vpack.c.bf16 %v931, %v931
    %v948 = vpack.c.bf16 %v932, %v932
    %v949 = vld [vmem:[#allocation10] sm:$0xff]
    %v950 = vld [vmem:[#allocation10 + $0x8] sm:$0xff]
    %v951 = vld [vmem:[#allocation10 + $0x10] sm:$0xff]
    %v952 = vld [vmem:[#allocation10 + $0x18] sm:$0xff]
    %v953 = vld [vmem:[#allocation10 + $0x20] sm:$0xff]
    %v954 = vld [vmem:[#allocation10 + $0x28] sm:$0xff]
    %v955 = vld [vmem:[#allocation10 + $0x30] sm:$0xff]
    %v956 = vld [vmem:[#allocation10 + $0x38] sm:$0xff]
    %v957 = vld [vmem:[#allocation10 + $0x40] sm:$0xff]
    %v958 = vld [vmem:[#allocation10 + $0x48] sm:$0xff]
    %v959 = vld [vmem:[#allocation10 + $0x50] sm:$0xff]
    %v960 = vld [vmem:[#allocation10 + $0x58] sm:$0xff]
    %v961 = vld [vmem:[#allocation10 + $0x60] sm:$0xff]
    %v962 = vld [vmem:[#allocation10 + $0x68] sm:$0xff]
    %v963 = vld [vmem:[#allocation10 + $0x70] sm:$0xff]
    %v964 = vld [vmem:[#allocation10 + $0x78] sm:$0xff]
    %v965 = vld [vmem:[#allocation10 + $0x80] sm:$0xff]
    %v966 = vld [vmem:[#allocation10 + $0x88] sm:$0xff]
    %v967 = vld [vmem:[#allocation10 + $0x90] sm:$0xff]
    %v968 = vld [vmem:[#allocation10 + $0x98] sm:$0xff]
    %v969 = vld [vmem:[#allocation10 + $0xa0] sm:$0xff]
    %v970 = vld [vmem:[#allocation10 + $0xa8] sm:$0xff]
    %v971 = vld [vmem:[#allocation10 + $0xb0] sm:$0xff]
    %v972 = vld [vmem:[#allocation10 + $0xb8] sm:$0xff]
    %v973 = vld [vmem:[#allocation10 + $0xc0] sm:$0xff]
    %v974 = vld [vmem:[#allocation10 + $0xc8] sm:$0xff]
    %v975 = vld [vmem:[#allocation10 + $0xd0] sm:$0xff]
    %v976 = vld [vmem:[#allocation10 + $0xd8] sm:$0xff]
    %v977 = vld [vmem:[#allocation10 + $0xe0] sm:$0xff]
    %v978 = vld [vmem:[#allocation10 + $0xe8] sm:$0xff]
    %v979 = vld [vmem:[#allocation10 + $0xf0] sm:$0xff]
    %v980 = vld [vmem:[#allocation10 + $0xf8] sm:$0xff]
    %v981 = vld [vmem:[#allocation10 + $0x100] sm:$0xff]
    %v982 = vld [vmem:[#allocation10 + $0x108] sm:$0xff]
    %v983 = vld [vmem:[#allocation10 + $0x110] sm:$0xff]
    %v984 = vld [vmem:[#allocation10 + $0x118] sm:$0xff]
    %v985 = vld [vmem:[#allocation10 + $0x120] sm:$0xff]
    %v986 = vld [vmem:[#allocation10 + $0x128] sm:$0xff]
    %v987 = vld [vmem:[#allocation10 + $0x130] sm:$0xff]
    %v988 = vld [vmem:[#allocation10 + $0x138] sm:$0xff]
    %v989 = vld [vmem:[#allocation10 + $0x140] sm:$0xff]
    %v990 = vld [vmem:[#allocation10 + $0x148] sm:$0xff]
    %v991 = vld [vmem:[#allocation10 + $0x150] sm:$0xff]
    %v992 = vld [vmem:[#allocation10 + $0x158] sm:$0xff]
    %v993 = vld [vmem:[#allocation10 + $0x160] sm:$0xff]
    %v994 = vld [vmem:[#allocation10 + $0x168] sm:$0xff]
    %v995 = vld [vmem:[#allocation10 + $0x170] sm:$0xff]
    %v996 = vld [vmem:[#allocation10 + $0x178] sm:$0xff]
    %v997 = vld [vmem:[#allocation10 + $0x180] sm:$0xff]
    %v998 = vld [vmem:[#allocation10 + $0x188] sm:$0xff]
    %v999 = vld [vmem:[#allocation10 + $0x190] sm:$0xff]
    %v1000 = vld [vmem:[#allocation10 + $0x198] sm:$0xff]
    %v1001 = vld [vmem:[#allocation10 + $0x1a0] sm:$0xff]
    %v1002 = vld [vmem:[#allocation10 + $0x1a8] sm:$0xff]
    %v1003 = vld [vmem:[#allocation10 + $0x1b0] sm:$0xff]
    %v1004 = vld [vmem:[#allocation10 + $0x1b8] sm:$0xff]
    %v1005 = vld [vmem:[#allocation10 + $0x1c0] sm:$0xff]
    %v1006 = vld [vmem:[#allocation10 + $0x1c8] sm:$0xff]
    %v1007 = vld [vmem:[#allocation10 + $0x1d0] sm:$0xff]
    %v1008 = vld [vmem:[#allocation10 + $0x1d8] sm:$0xff]
    %v1009 = vld [vmem:[#allocation10 + $0x1e0] sm:$0xff]
    %v1010 = vld [vmem:[#allocation10 + $0x1e8] sm:$0xff]
    %v1011 = vld [vmem:[#allocation10 + $0x1f0] sm:$0xff]
    %v1012 = vld [vmem:[#allocation10 + $0x1f8] sm:$0xff]
    %v1013 = vld [vmem:[#allocation10 + $0x200] sm:$0xff]
    %v1014 = vld [vmem:[#allocation10 + $0x208] sm:$0xff]
    %v1015 = vld [vmem:[#allocation10 + $0x210] sm:$0xff]
    %v1016 = vld [vmem:[#allocation10 + $0x218] sm:$0xff]
    %v1017 = vld [vmem:[#allocation10 + $0x220] sm:$0xff]
    %v1018 = vld [vmem:[#allocation10 + $0x228] sm:$0xff]
    %v1019 = vld [vmem:[#allocation10 + $0x230] sm:$0xff]
    %v1020 = vld [vmem:[#allocation10 + $0x238] sm:$0xff]
    %v1021 = vld [vmem:[#allocation10 + $0x240] sm:$0xff]
    %v1022 = vld [vmem:[#allocation10 + $0x248] sm:$0xff]
    %v1023 = vld [vmem:[#allocation10 + $0x250] sm:$0xff]
    %v1024 = vld [vmem:[#allocation10 + $0x258] sm:$0xff]
    %v1025 = vld [vmem:[#allocation10 + $0x260] sm:$0xff]
    %v1026 = vld [vmem:[#allocation10 + $0x268] sm:$0xff]
    %v1027 = vld [vmem:[#allocation10 + $0x270] sm:$0xff]
    %v1028 = vld [vmem:[#allocation10 + $0x278] sm:$0xff]
    %v1029 = vld [vmem:[#allocation10 + $0x280] sm:$0xff]
    %v1030 = vld [vmem:[#allocation10 + $0x288] sm:$0xff]
    %v1031 = vld [vmem:[#allocation10 + $0x290] sm:$0xff]
    %v1032 = vld [vmem:[#allocation10 + $0x298] sm:$0xff]
    %v1033 = vld [vmem:[#allocation10 + $0x2a0] sm:$0xff]
    %v1034 = vld [vmem:[#allocation10 + $0x2a8] sm:$0xff]
    %v1035 = vld [vmem:[#allocation10 + $0x2b0] sm:$0xff]
    %v1036 = vld [vmem:[#allocation10 + $0x2b8] sm:$0xff]
    %v1037 = vld [vmem:[#allocation10 + $0x2c0] sm:$0xff]
    %v1038 = vld [vmem:[#allocation10 + $0x2c8] sm:$0xff]
    %v1039 = vld [vmem:[#allocation10 + $0x2d0] sm:$0xff]
    %v1040 = vld [vmem:[#allocation10 + $0x2d8] sm:$0xff]
    %v1041 = vld [vmem:[#allocation10 + $0x2e0] sm:$0xff]
    %v1042 = vld [vmem:[#allocation10 + $0x2e8] sm:$0xff]
    %v1043 = vld [vmem:[#allocation10 + $0x2f0] sm:$0xff]
    %v1044 = vld [vmem:[#allocation10 + $0x2f8] sm:$0xff]
    %v1045 = vld [vmem:[#allocation10 + $0x300] sm:$0xff]
    %v1046 = vld [vmem:[#allocation10 + $0x308] sm:$0xff]
    %v1047 = vld [vmem:[#allocation10 + $0x310] sm:$0xff]
    %v1048 = vld [vmem:[#allocation10 + $0x318] sm:$0xff]
    %v1049 = vld [vmem:[#allocation10 + $0x320] sm:$0xff]
    %v1050 = vld [vmem:[#allocation10 + $0x328] sm:$0xff]
    %v1051 = vld [vmem:[#allocation10 + $0x330] sm:$0xff]
    %v1052 = vld [vmem:[#allocation10 + $0x338] sm:$0xff]
    %v1053 = vld [vmem:[#allocation10 + $0x340] sm:$0xff]
    %v1054 = vld [vmem:[#allocation10 + $0x348] sm:$0xff]
    %v1055 = vld [vmem:[#allocation10 + $0x350] sm:$0xff]
    %v1056 = vld [vmem:[#allocation10 + $0x358] sm:$0xff]
    %v1057 = vld [vmem:[#allocation10 + $0x360] sm:$0xff]
    %v1058 = vld [vmem:[#allocation10 + $0x368] sm:$0xff]
    %v1059 = vld [vmem:[#allocation10 + $0x370] sm:$0xff]
    %v1060 = vld [vmem:[#allocation10 + $0x378] sm:$0xff]
    %v1061 = vld [vmem:[#allocation10 + $0x380] sm:$0xff]
    %v1062 = vld [vmem:[#allocation10 + $0x388] sm:$0xff]
    %v1063 = vld [vmem:[#allocation10 + $0x390] sm:$0xff]
    %v1064 = vld [vmem:[#allocation10 + $0x398] sm:$0xff]
    %v1065 = vld [vmem:[#allocation10 + $0x3a0] sm:$0xff]
    %v1066 = vld [vmem:[#allocation10 + $0x3a8] sm:$0xff]
    %v1067 = vld [vmem:[#allocation10 + $0x3b0] sm:$0xff]
    %v1068 = vld [vmem:[#allocation10 + $0x3b8] sm:$0xff]
    %v1069 = vld [vmem:[#allocation10 + $0x3c0] sm:$0xff]
    %v1070 = vld [vmem:[#allocation10 + $0x3c8] sm:$0xff]
    %v1071 = vld [vmem:[#allocation10 + $0x3d0] sm:$0xff]
    %v1072 = vld [vmem:[#allocation10 + $0x3d8] sm:$0xff]
    %v1073 = vld [vmem:[#allocation10 + $0x3e0] sm:$0xff]
    %v1074 = vld [vmem:[#allocation10 + $0x3e8] sm:$0xff]
    %v1075 = vld [vmem:[#allocation10 + $0x3f0] sm:$0xff]
    %v1076 = vld [vmem:[#allocation10 + $0x3f8] sm:$0xff]
    %v1077 = vld [vmem:[#allocation10 + $0x400] sm:$0xff]
    %v1078 = vld [vmem:[#allocation10 + $0x408] sm:$0xff]
    %v1079 = vld [vmem:[#allocation10 + $0x410] sm:$0xff]
    %v1080 = vld [vmem:[#allocation10 + $0x418] sm:$0xff]
    %v1081 = vld [vmem:[#allocation10 + $0x420] sm:$0xff]
    %v1082 = vld [vmem:[#allocation10 + $0x428] sm:$0xff]
    %v1083 = vld [vmem:[#allocation10 + $0x430] sm:$0xff]
    %v1084 = vld [vmem:[#allocation10 + $0x438] sm:$0xff]
    %v1085 = vld [vmem:[#allocation10 + $0x440] sm:$0xff]
    %v1086 = vld [vmem:[#allocation10 + $0x448] sm:$0xff]
    %v1087 = vld [vmem:[#allocation10 + $0x450] sm:$0xff]
    %v1088 = vld [vmem:[#allocation10 + $0x458] sm:$0xff]
    %v1089 = vld [vmem:[#allocation10 + $0x460] sm:$0xff]
    %v1090 = vld [vmem:[#allocation10 + $0x468] sm:$0xff]
    %v1091 = vld [vmem:[#allocation10 + $0x470] sm:$0xff]
    %v1092 = vld [vmem:[#allocation10 + $0x478] sm:$0xff]
    %v1093 = vld [vmem:[#allocation10 + $0x480] sm:$0xff]
    %v1094 = vld [vmem:[#allocation10 + $0x488] sm:$0xff]
    %v1095 = vld [vmem:[#allocation10 + $0x490] sm:$0xff]
    %v1096 = vld [vmem:[#allocation10 + $0x498] sm:$0xff]
    %v1097 = vld [vmem:[#allocation10 + $0x4a0] sm:$0xff]
    %v1098 = vld [vmem:[#allocation10 + $0x4a8] sm:$0xff]
    %v1099 = vld [vmem:[#allocation10 + $0x4b0] sm:$0xff]
    %v1100 = vld [vmem:[#allocation10 + $0x4b8] sm:$0xff]
    %v1101 = vld [vmem:[#allocation10 + $0x4c0] sm:$0xff]
    %v1102 = vld [vmem:[#allocation10 + $0x4c8] sm:$0xff]
    %v1103 = vld [vmem:[#allocation10 + $0x4d0] sm:$0xff]
    %v1104 = vld [vmem:[#allocation10 + $0x4d8] sm:$0xff]
    %v1105 = vld [vmem:[#allocation10 + $0x4e0] sm:$0xff]
    %v1106 = vld [vmem:[#allocation10 + $0x4e8] sm:$0xff]
    %v1107 = vld [vmem:[#allocation10 + $0x4f0] sm:$0xff]
    %v1108 = vld [vmem:[#allocation10 + $0x4f8] sm:$0xff]
    %v1109 = vld [vmem:[#allocation10 + $0x500] sm:$0xff]
    %v1110 = vld [vmem:[#allocation10 + $0x508] sm:$0xff]
    %v1111 = vld [vmem:[#allocation10 + $0x510] sm:$0xff]
    %v1112 = vld [vmem:[#allocation10 + $0x518] sm:$0xff]
    %v1113 = vld [vmem:[#allocation10 + $0x520] sm:$0xff]
    %v1114 = vld [vmem:[#allocation10 + $0x528] sm:$0xff]
    %v1115 = vld [vmem:[#allocation10 + $0x530] sm:$0xff]
    %v1116 = vld [vmem:[#allocation10 + $0x538] sm:$0xff]
    %v1117 = vld [vmem:[#allocation10 + $0x540] sm:$0xff]
    %v1118 = vld [vmem:[#allocation10 + $0x548] sm:$0xff]
    %v1119 = vld [vmem:[#allocation10 + $0x550] sm:$0xff]
    %v1120 = vld [vmem:[#allocation10 + $0x558] sm:$0xff]
    %v1121 = vld [vmem:[#allocation10 + $0x560] sm:$0xff]
    %v1122 = vld [vmem:[#allocation10 + $0x568] sm:$0xff]
    %v1123 = vld [vmem:[#allocation10 + $0x570] sm:$0xff]
    %v1124 = vld [vmem:[#allocation10 + $0x578] sm:$0xff]
    %v1125 = vld [vmem:[#allocation10 + $0x580] sm:$0xff]
    %v1126 = vld [vmem:[#allocation10 + $0x588] sm:$0xff]
    %v1127 = vld [vmem:[#allocation10 + $0x590] sm:$0xff]
    %v1128 = vld [vmem:[#allocation10 + $0x598] sm:$0xff]
    %v1129 = vld [vmem:[#allocation10 + $0x5a0] sm:$0xff]
    %v1130 = vld [vmem:[#allocation10 + $0x5a8] sm:$0xff]
    %v1131 = vld [vmem:[#allocation10 + $0x5b0] sm:$0xff]
    %v1132 = vld [vmem:[#allocation10 + $0x5b8] sm:$0xff]
    %v1133 = vld [vmem:[#allocation10 + $0x5c0] sm:$0xff]
    %v1134 = vld [vmem:[#allocation10 + $0x5c8] sm:$0xff]
    %v1135 = vld [vmem:[#allocation10 + $0x5d0] sm:$0xff]
    %v1136 = vld [vmem:[#allocation10 + $0x5d8] sm:$0xff]
    %v1137 = vld [vmem:[#allocation10 + $0x5e0] sm:$0xff]
    %v1138 = vld [vmem:[#allocation10 + $0x5e8] sm:$0xff]
    %v1139 = vld [vmem:[#allocation10 + $0x5f0] sm:$0xff]
    %v1140 = vld [vmem:[#allocation10 + $0x5f8] sm:$0xff]
    %v1141 = vld [vmem:[#allocation10 + $0x600] sm:$0xff]
    %v1142 = vld [vmem:[#allocation10 + $0x608] sm:$0xff]
    %v1143 = vld [vmem:[#allocation10 + $0x610] sm:$0xff]
    %v1144 = vld [vmem:[#allocation10 + $0x618] sm:$0xff]
    %v1145 = vld [vmem:[#allocation10 + $0x620] sm:$0xff]
    %v1146 = vld [vmem:[#allocation10 + $0x628] sm:$0xff]
    %v1147 = vld [vmem:[#allocation10 + $0x630] sm:$0xff]
    %v1148 = vld [vmem:[#allocation10 + $0x638] sm:$0xff]
    %v1149 = vld [vmem:[#allocation10 + $0x640] sm:$0xff]
    %v1150 = vld [vmem:[#allocation10 + $0x648] sm:$0xff]
    %v1151 = vld [vmem:[#allocation10 + $0x650] sm:$0xff]
    %v1152 = vld [vmem:[#allocation10 + $0x658] sm:$0xff]
    %v1153 = vld [vmem:[#allocation10 + $0x660] sm:$0xff]
    %v1154 = vld [vmem:[#allocation10 + $0x668] sm:$0xff]
    %v1155 = vld [vmem:[#allocation10 + $0x670] sm:$0xff]
    %v1156 = vld [vmem:[#allocation10 + $0x678] sm:$0xff]
    %v1157 = vld [vmem:[#allocation10 + $0x680] sm:$0xff]
    %v1158 = vld [vmem:[#allocation10 + $0x688] sm:$0xff]
    %v1159 = vld [vmem:[#allocation10 + $0x690] sm:$0xff]
    %v1160 = vld [vmem:[#allocation10 + $0x698] sm:$0xff]
    %v1161 = vld [vmem:[#allocation10 + $0x6a0] sm:$0xff]
    %v1162 = vld [vmem:[#allocation10 + $0x6a8] sm:$0xff]
    %v1163 = vld [vmem:[#allocation10 + $0x6b0] sm:$0xff]
    %v1164 = vld [vmem:[#allocation10 + $0x6b8] sm:$0xff]
    %v1165 = vld [vmem:[#allocation10 + $0x6c0] sm:$0xff]
    %v1166 = vld [vmem:[#allocation10 + $0x6c8] sm:$0xff]
    %v1167 = vld [vmem:[#allocation10 + $0x6d0] sm:$0xff]
    %v1168 = vld [vmem:[#allocation10 + $0x6d8] sm:$0xff]
    %v1169 = vld [vmem:[#allocation10 + $0x6e0] sm:$0xff]
    %v1170 = vld [vmem:[#allocation10 + $0x6e8] sm:$0xff]
    %v1171 = vld [vmem:[#allocation10 + $0x6f0] sm:$0xff]
    %v1172 = vld [vmem:[#allocation10 + $0x6f8] sm:$0xff]
    %v1173 = vld [vmem:[#allocation10 + $0x700] sm:$0xff]
    %v1174 = vld [vmem:[#allocation10 + $0x708] sm:$0xff]
    %v1175 = vld [vmem:[#allocation10 + $0x710] sm:$0xff]
    %v1176 = vld [vmem:[#allocation10 + $0x718] sm:$0xff]
    %v1177 = vld [vmem:[#allocation10 + $0x720] sm:$0xff]
    %v1178 = vld [vmem:[#allocation10 + $0x728] sm:$0xff]
    %v1179 = vld [vmem:[#allocation10 + $0x730] sm:$0xff]
    %v1180 = vld [vmem:[#allocation10 + $0x738] sm:$0xff]
    %v1181 = vld [vmem:[#allocation10 + $0x740] sm:$0xff]
    %v1182 = vld [vmem:[#allocation10 + $0x748] sm:$0xff]
    %v1183 = vld [vmem:[#allocation10 + $0x750] sm:$0xff]
    %v1184 = vld [vmem:[#allocation10 + $0x758] sm:$0xff]
    %v1185 = vld [vmem:[#allocation10 + $0x760] sm:$0xff]
    %v1186 = vld [vmem:[#allocation10 + $0x768] sm:$0xff]
    %v1187 = vld [vmem:[#allocation10 + $0x770] sm:$0xff]
    %v1188 = vld [vmem:[#allocation10 + $0x778] sm:$0xff]
    %v1189 = vld [vmem:[#allocation10 + $0x780] sm:$0xff]
    %v1190 = vld [vmem:[#allocation10 + $0x788] sm:$0xff]
    %v1191 = vld [vmem:[#allocation10 + $0x790] sm:$0xff]
    %v1192 = vld [vmem:[#allocation10 + $0x798] sm:$0xff]
    %v1193 = vld [vmem:[#allocation10 + $0x7a0] sm:$0xff]
    %v1194 = vld [vmem:[#allocation10 + $0x7a8] sm:$0xff]
    %v1195 = vld [vmem:[#allocation10 + $0x7b0] sm:$0xff]
    %v1196 = vld [vmem:[#allocation10 + $0x7b8] sm:$0xff]
    %v1197 = vld [vmem:[#allocation10 + $0x7c0] sm:$0xff]
    %v1198 = vld [vmem:[#allocation10 + $0x7c8] sm:$0xff]
    %v1199 = vld [vmem:[#allocation10 + $0x7d0] sm:$0xff]
    %v1200 = vld [vmem:[#allocation10 + $0x7d8] sm:$0xff]
    %v1201 = vld [vmem:[#allocation10 + $0x7e0] sm:$0xff]
    %v1202 = vld [vmem:[#allocation10 + $0x7e8] sm:$0xff]
    %v1203 = vld [vmem:[#allocation10 + $0x7f0] sm:$0xff]
    %v1204 = vld [vmem:[#allocation10 + $0x7f8] sm:$0xff]
    %v1205 = vld [vmem:[#allocation10 + $0x800] sm:$0xff]
    %v1206 = vld [vmem:[#allocation10 + $0x808] sm:$0xff]
    %v1207 = vld [vmem:[#allocation10 + $0x810] sm:$0xff]
    %v1208 = vld [vmem:[#allocation10 + $0x818] sm:$0xff]
    %v1209 = vld [vmem:[#allocation10 + $0x820] sm:$0xff]
    %v1210 = vld [vmem:[#allocation10 + $0x828] sm:$0xff]
    %v1211 = vld [vmem:[#allocation10 + $0x830] sm:$0xff]
    %v1212 = vld [vmem:[#allocation10 + $0x838] sm:$0xff]
    %v1213 = vld [vmem:[#allocation10 + $0x840] sm:$0xff]
    %v1214 = vld [vmem:[#allocation10 + $0x848] sm:$0xff]
    %v1215 = vld [vmem:[#allocation10 + $0x850] sm:$0xff]
    %v1216 = vld [vmem:[#allocation10 + $0x858] sm:$0xff]
    %v1217 = vld [vmem:[#allocation10 + $0x860] sm:$0xff]
    %v1218 = vld [vmem:[#allocation10 + $0x868] sm:$0xff]
    %v1219 = vld [vmem:[#allocation10 + $0x870] sm:$0xff]
    %v1220 = vld [vmem:[#allocation10 + $0x878] sm:$0xff]
    %v1221 = vld [vmem:[#allocation10 + $0x880] sm:$0xff]
    %v1222 = vld [vmem:[#allocation10 + $0x888] sm:$0xff]
    %v1223 = vld [vmem:[#allocation10 + $0x890] sm:$0xff]
    %v1224 = vld [vmem:[#allocation10 + $0x898] sm:$0xff]
    %v1225 = vld [vmem:[#allocation10 + $0x8a0] sm:$0xff]
    %v1226 = vld [vmem:[#allocation10 + $0x8a8] sm:$0xff]
    %v1227 = vld [vmem:[#allocation10 + $0x8b0] sm:$0xff]
    %v1228 = vld [vmem:[#allocation10 + $0x8b8] sm:$0xff]
    %v1229 = vld [vmem:[#allocation10 + $0x8c0] sm:$0xff]
    %v1230 = vld [vmem:[#allocation10 + $0x8c8] sm:$0xff]
    %v1231 = vld [vmem:[#allocation10 + $0x8d0] sm:$0xff]
    %v1232 = vld [vmem:[#allocation10 + $0x8d8] sm:$0xff]
    %v1233 = vld [vmem:[#allocation10 + $0x8e0] sm:$0xff]
    %v1234 = vld [vmem:[#allocation10 + $0x8e8] sm:$0xff]
    %v1235 = vld [vmem:[#allocation10 + $0x8f0] sm:$0xff]
    %v1236 = vld [vmem:[#allocation10 + $0x8f8] sm:$0xff]
    %v1237 = vld [vmem:[#allocation10 + $0x900] sm:$0xff]
    %v1238 = vld [vmem:[#allocation10 + $0x908] sm:$0xff]
    %v1239 = vld [vmem:[#allocation10 + $0x910] sm:$0xff]
    %v1240 = vld [vmem:[#allocation10 + $0x918] sm:$0xff]
    %v1241 = vld [vmem:[#allocation10 + $0x920] sm:$0xff]
    %v1242 = vld [vmem:[#allocation10 + $0x928] sm:$0xff]
    %v1243 = vld [vmem:[#allocation10 + $0x930] sm:$0xff]
    %v1244 = vld [vmem:[#allocation10 + $0x938] sm:$0xff]
    %v1245 = vld [vmem:[#allocation10 + $0x940] sm:$0xff]
    %v1246 = vld [vmem:[#allocation10 + $0x948] sm:$0xff]
    %v1247 = vld [vmem:[#allocation10 + $0x950] sm:$0xff]
    %v1248 = vld [vmem:[#allocation10 + $0x958] sm:$0xff]
    %v1249 = vld [vmem:[#allocation10 + $0x960] sm:$0xff]
    %v1250 = vld [vmem:[#allocation10 + $0x968] sm:$0xff]
    %v1251 = vld [vmem:[#allocation10 + $0x970] sm:$0xff]
    %v1252 = vld [vmem:[#allocation10 + $0x978] sm:$0xff]
    %v1253 = vld [vmem:[#allocation10 + $0x980] sm:$0xff]
    %v1254 = vld [vmem:[#allocation10 + $0x988] sm:$0xff]
    %v1255 = vld [vmem:[#allocation10 + $0x990] sm:$0xff]
    %v1256 = vld [vmem:[#allocation10 + $0x998] sm:$0xff]
    %v1257 = vld [vmem:[#allocation10 + $0x9a0] sm:$0xff]
    %v1258 = vld [vmem:[#allocation10 + $0x9a8] sm:$0xff]
    %v1259 = vld [vmem:[#allocation10 + $0x9b0] sm:$0xff]
    %v1260 = vld [vmem:[#allocation10 + $0x9b8] sm:$0xff]
    %v1261 = vld [vmem:[#allocation10 + $0x9c0] sm:$0xff]
    %v1262 = vld [vmem:[#allocation10 + $0x9c8] sm:$0xff]
    %v1263 = vld [vmem:[#allocation10 + $0x9d0] sm:$0xff]
    %v1264 = vld [vmem:[#allocation10 + $0x9d8] sm:$0xff]
    %v1265 = vld [vmem:[#allocation10 + $0x9e0] sm:$0xff]
    %v1266 = vld [vmem:[#allocation10 + $0x9e8] sm:$0xff]
    %v1267 = vld [vmem:[#allocation10 + $0x9f0] sm:$0xff]
    %v1268 = vld [vmem:[#allocation10 + $0x9f8] sm:$0xff]
    %v1269 = vld [vmem:[#allocation10 + $0xa00] sm:$0xff]
    %v1270 = vld [vmem:[#allocation10 + $0xa08] sm:$0xff]
    %v1271 = vld [vmem:[#allocation10 + $0xa10] sm:$0xff]
    %v1272 = vld [vmem:[#allocation10 + $0xa18] sm:$0xff]
    %v1273 = vld [vmem:[#allocation10 + $0xa20] sm:$0xff]
    %v1274 = vld [vmem:[#allocation10 + $0xa28] sm:$0xff]
    %v1275 = vld [vmem:[#allocation10 + $0xa30] sm:$0xff]
    %v1276 = vld [vmem:[#allocation10 + $0xa38] sm:$0xff]
    %v1277 = vld [vmem:[#allocation10 + $0xa40] sm:$0xff]
    %v1278 = vld [vmem:[#allocation10 + $0xa48] sm:$0xff]
    %v1279 = vld [vmem:[#allocation10 + $0xa50] sm:$0xff]
    %v1280 = vld [vmem:[#allocation10 + $0xa58] sm:$0xff]
    %v1281 = vld [vmem:[#allocation10 + $0xa60] sm:$0xff]
    %v1282 = vld [vmem:[#allocation10 + $0xa68] sm:$0xff]
    %v1283 = vld [vmem:[#allocation10 + $0xa70] sm:$0xff]
    %v1284 = vld [vmem:[#allocation10 + $0xa78] sm:$0xff]
    %v1285 = vld [vmem:[#allocation10 + $0xa80] sm:$0xff]
    %v1286 = vld [vmem:[#allocation10 + $0xa88] sm:$0xff]
    %v1287 = vld [vmem:[#allocation10 + $0xa90] sm:$0xff]
    %v1288 = vld [vmem:[#allocation10 + $0xa98] sm:$0xff]
    %v1289 = vld [vmem:[#allocation10 + $0xaa0] sm:$0xff]
    %v1290 = vld [vmem:[#allocation10 + $0xaa8] sm:$0xff]
    %v1291 = vld [vmem:[#allocation10 + $0xab0] sm:$0xff]
    %v1292 = vld [vmem:[#allocation10 + $0xab8] sm:$0xff]
    %v1293 = vld [vmem:[#allocation10 + $0xac0] sm:$0xff]
    %v1294 = vld [vmem:[#allocation10 + $0xac8] sm:$0xff]
    %v1295 = vld [vmem:[#allocation10 + $0xad0] sm:$0xff]
    %v1296 = vld [vmem:[#allocation10 + $0xad8] sm:$0xff]
    %v1297 = vld [vmem:[#allocation10 + $0xae0] sm:$0xff]
    %v1298 = vld [vmem:[#allocation10 + $0xae8] sm:$0xff]
    %v1299 = vld [vmem:[#allocation10 + $0xaf0] sm:$0xff]
    %v1300 = vld [vmem:[#allocation10 + $0xaf8] sm:$0xff]
    %v1301 = vld [vmem:[#allocation10 + $0xb00] sm:$0xff]
    %v1302 = vld [vmem:[#allocation10 + $0xb08] sm:$0xff]
    %v1303 = vld [vmem:[#allocation10 + $0xb10] sm:$0xff]
    %v1304 = vld [vmem:[#allocation10 + $0xb18] sm:$0xff]
    %v1305 = vld [vmem:[#allocation10 + $0xb20] sm:$0xff]
    %v1306 = vld [vmem:[#allocation10 + $0xb28] sm:$0xff]
    %v1307 = vld [vmem:[#allocation10 + $0xb30] sm:$0xff]
    %v1308 = vld [vmem:[#allocation10 + $0xb38] sm:$0xff]
    %v1309 = vld [vmem:[#allocation10 + $0xb40] sm:$0xff]
    %v1310 = vld [vmem:[#allocation10 + $0xb48] sm:$0xff]
    %v1311 = vld [vmem:[#allocation10 + $0xb50] sm:$0xff]
    %v1312 = vld [vmem:[#allocation10 + $0xb58] sm:$0xff]
    %v1313 = vld [vmem:[#allocation10 + $0xb60] sm:$0xff]
    %v1314 = vld [vmem:[#allocation10 + $0xb68] sm:$0xff]
    %v1315 = vld [vmem:[#allocation10 + $0xb70] sm:$0xff]
    %v1316 = vld [vmem:[#allocation10 + $0xb78] sm:$0xff]
    %v1317 = vld [vmem:[#allocation10 + $0xb80] sm:$0xff]
    %v1318 = vld [vmem:[#allocation10 + $0xb88] sm:$0xff]
    %v1319 = vld [vmem:[#allocation10 + $0xb90] sm:$0xff]
    %v1320 = vld [vmem:[#allocation10 + $0xb98] sm:$0xff]
    %v1321 = vld [vmem:[#allocation10 + $0xba0] sm:$0xff]
    %v1322 = vld [vmem:[#allocation10 + $0xba8] sm:$0xff]
    %v1323 = vld [vmem:[#allocation10 + $0xbb0] sm:$0xff]
    %v1324 = vld [vmem:[#allocation10 + $0xbb8] sm:$0xff]
    %v1325 = vld [vmem:[#allocation10 + $0xbc0] sm:$0xff]
    %v1326 = vld [vmem:[#allocation10 + $0xbc8] sm:$0xff]
    %v1327 = vld [vmem:[#allocation10 + $0xbd0] sm:$0xff]
    %v1328 = vld [vmem:[#allocation10 + $0xbd8] sm:$0xff]
    %v1329 = vld [vmem:[#allocation10 + $0xbe0] sm:$0xff]
    %v1330 = vld [vmem:[#allocation10 + $0xbe8] sm:$0xff]
    %v1331 = vld [vmem:[#allocation10 + $0xbf0] sm:$0xff]
    %v1332 = vld [vmem:[#allocation10 + $0xbf8] sm:$0xff]
    %v1333 = vld [vmem:[#allocation10 + $0xc00] sm:$0xff]
    %v1334 = vld [vmem:[#allocation10 + $0xc08] sm:$0xff]
    %v1335 = vld [vmem:[#allocation10 + $0xc10] sm:$0xff]
    %v1336 = vld [vmem:[#allocation10 + $0xc18] sm:$0xff]
    %v1337 = vld [vmem:[#allocation10 + $0xc20] sm:$0xff]
    %v1338 = vld [vmem:[#allocation10 + $0xc28] sm:$0xff]
    %v1339 = vld [vmem:[#allocation10 + $0xc30] sm:$0xff]
    %v1340 = vld [vmem:[#allocation10 + $0xc38] sm:$0xff]
    %v1341 = vld [vmem:[#allocation10 + $0xc40] sm:$0xff]
    %v1342 = vld [vmem:[#allocation10 + $0xc48] sm:$0xff]
    %v1343 = vld [vmem:[#allocation10 + $0xc50] sm:$0xff]
    %v1344 = vld [vmem:[#allocation10 + $0xc58] sm:$0xff]
    %v1345 = vld [vmem:[#allocation10 + $0xc60] sm:$0xff]
    %v1346 = vld [vmem:[#allocation10 + $0xc68] sm:$0xff]
    %v1347 = vld [vmem:[#allocation10 + $0xc70] sm:$0xff]
    %v1348 = vld [vmem:[#allocation10 + $0xc78] sm:$0xff]
    %v1349 = vld [vmem:[#allocation10 + $0xc80] sm:$0xff]
    %v1350 = vld [vmem:[#allocation10 + $0xc88] sm:$0xff]
    %v1351 = vld [vmem:[#allocation10 + $0xc90] sm:$0xff]
    %v1352 = vld [vmem:[#allocation10 + $0xc98] sm:$0xff]
    %v1353 = vld [vmem:[#allocation10 + $0xca0] sm:$0xff]
    %v1354 = vld [vmem:[#allocation10 + $0xca8] sm:$0xff]
    %v1355 = vld [vmem:[#allocation10 + $0xcb0] sm:$0xff]
    %v1356 = vld [vmem:[#allocation10 + $0xcb8] sm:$0xff]
    %v1357 = vld [vmem:[#allocation10 + $0xcc0] sm:$0xff]
    %v1358 = vld [vmem:[#allocation10 + $0xcc8] sm:$0xff]
    %v1359 = vld [vmem:[#allocation10 + $0xcd0] sm:$0xff]
    %v1360 = vld [vmem:[#allocation10 + $0xcd8] sm:$0xff]
    %v1361 = vld [vmem:[#allocation10 + $0xce0] sm:$0xff]
    %v1362 = vld [vmem:[#allocation10 + $0xce8] sm:$0xff]
    %v1363 = vld [vmem:[#allocation10 + $0xcf0] sm:$0xff]
    %v1364 = vld [vmem:[#allocation10 + $0xcf8] sm:$0xff]
    %v1365 = vld [vmem:[#allocation10 + $0xd00] sm:$0xff]
    %v1366 = vld [vmem:[#allocation10 + $0xd08] sm:$0xff]
    %v1367 = vld [vmem:[#allocation10 + $0xd10] sm:$0xff]
    %v1368 = vld [vmem:[#allocation10 + $0xd18] sm:$0xff]
    %v1369 = vld [vmem:[#allocation10 + $0xd20] sm:$0xff]
    %v1370 = vld [vmem:[#allocation10 + $0xd28] sm:$0xff]
    %v1371 = vld [vmem:[#allocation10 + $0xd30] sm:$0xff]
    %v1372 = vld [vmem:[#allocation10 + $0xd38] sm:$0xff]
    %v1373 = vld [vmem:[#allocation10 + $0xd40] sm:$0xff]
    %v1374 = vld [vmem:[#allocation10 + $0xd48] sm:$0xff]
    %v1375 = vld [vmem:[#allocation10 + $0xd50] sm:$0xff]
    %v1376 = vld [vmem:[#allocation10 + $0xd58] sm:$0xff]
    %v1377 = vld [vmem:[#allocation10 + $0xd60] sm:$0xff]
    %v1378 = vld [vmem:[#allocation10 + $0xd68] sm:$0xff]
    %v1379 = vld [vmem:[#allocation10 + $0xd70] sm:$0xff]
    %v1380 = vld [vmem:[#allocation10 + $0xd78] sm:$0xff]
    %v1381 = vld [vmem:[#allocation10 + $0xd80] sm:$0xff]
    %v1382 = vld [vmem:[#allocation10 + $0xd88] sm:$0xff]
    %v1383 = vld [vmem:[#allocation10 + $0xd90] sm:$0xff]
    %v1384 = vld [vmem:[#allocation10 + $0xd98] sm:$0xff]
    %v1385 = vld [vmem:[#allocation10 + $0xda0] sm:$0xff]
    %v1386 = vld [vmem:[#allocation10 + $0xda8] sm:$0xff]
    %v1387 = vld [vmem:[#allocation10 + $0xdb0] sm:$0xff]
    %v1388 = vld [vmem:[#allocation10 + $0xdb8] sm:$0xff]
    %v1389 = vld [vmem:[#allocation10 + $0xdc0] sm:$0xff]
    %v1390 = vld [vmem:[#allocation10 + $0xdc8] sm:$0xff]
    %v1391 = vld [vmem:[#allocation10 + $0xdd0] sm:$0xff]
    %v1392 = vld [vmem:[#allocation10 + $0xdd8] sm:$0xff]
    %v1393 = vld [vmem:[#allocation10 + $0xde0] sm:$0xff]
    %v1394 = vld [vmem:[#allocation10 + $0xde8] sm:$0xff]
    %v1395 = vld [vmem:[#allocation10 + $0xdf0] sm:$0xff]
    %v1396 = vld [vmem:[#allocation10 + $0xdf8] sm:$0xff]
    %v1397 = vld [vmem:[#allocation10 + $0xe00] sm:$0xff]
    %v1398 = vld [vmem:[#allocation10 + $0xe08] sm:$0xff]
    %v1399 = vld [vmem:[#allocation10 + $0xe10] sm:$0xff]
    %v1400 = vld [vmem:[#allocation10 + $0xe18] sm:$0xff]
    %v1401 = vld [vmem:[#allocation10 + $0xe20] sm:$0xff]
    %v1402 = vld [vmem:[#allocation10 + $0xe28] sm:$0xff]
    %v1403 = vld [vmem:[#allocation10 + $0xe30] sm:$0xff]
    %v1404 = vld [vmem:[#allocation10 + $0xe38] sm:$0xff]
    %v1405 = vld [vmem:[#allocation10 + $0xe40] sm:$0xff]
    %v1406 = vld [vmem:[#allocation10 + $0xe48] sm:$0xff]
    %v1407 = vld [vmem:[#allocation10 + $0xe50] sm:$0xff]
    %v1408 = vld [vmem:[#allocation10 + $0xe58] sm:$0xff]
    %v1409 = vld [vmem:[#allocation10 + $0xe60] sm:$0xff]
    %v1410 = vld [vmem:[#allocation10 + $0xe68] sm:$0xff]
    %v1411 = vld [vmem:[#allocation10 + $0xe70] sm:$0xff]
    %v1412 = vld [vmem:[#allocation10 + $0xe78] sm:$0xff]
    %v1413 = vld [vmem:[#allocation10 + $0xe80] sm:$0xff]
    %v1414 = vld [vmem:[#allocation10 + $0xe88] sm:$0xff]
    %v1415 = vld [vmem:[#allocation10 + $0xe90] sm:$0xff]
    %v1416 = vld [vmem:[#allocation10 + $0xe98] sm:$0xff]
    %v1417 = vld [vmem:[#allocation10 + $0xea0] sm:$0xff]
    %v1418 = vld [vmem:[#allocation10 + $0xea8] sm:$0xff]
    %v1419 = vld [vmem:[#allocation10 + $0xeb0] sm:$0xff]
    %v1420 = vld [vmem:[#allocation10 + $0xeb8] sm:$0xff]
    %v1421 = vld [vmem:[#allocation10 + $0xec0] sm:$0xff]
    %v1422 = vld [vmem:[#allocation10 + $0xec8] sm:$0xff]
    %v1423 = vld [vmem:[#allocation10 + $0xed0] sm:$0xff]
    %v1424 = vld [vmem:[#allocation10 + $0xed8] sm:$0xff]
    %v1425 = vld [vmem:[#allocation10 + $0xee0] sm:$0xff]
    %v1426 = vld [vmem:[#allocation10 + $0xee8] sm:$0xff]
    %v1427 = vld [vmem:[#allocation10 + $0xef0] sm:$0xff]
    %v1428 = vld [vmem:[#allocation10 + $0xef8] sm:$0xff]
    %v1429 = vld [vmem:[#allocation10 + $0xf00] sm:$0xff]
    %v1430 = vld [vmem:[#allocation10 + $0xf08] sm:$0xff]
    %v1431 = vld [vmem:[#allocation10 + $0xf10] sm:$0xff]
    %v1432 = vld [vmem:[#allocation10 + $0xf18] sm:$0xff]
    %v1433 = vld [vmem:[#allocation10 + $0xf20] sm:$0xff]
    %v1434 = vld [vmem:[#allocation10 + $0xf28] sm:$0xff]
    %v1435 = vld [vmem:[#allocation10 + $0xf30] sm:$0xff]
    %v1436 = vld [vmem:[#allocation10 + $0xf38] sm:$0xff]
    %v1437 = vld [vmem:[#allocation10 + $0xf40] sm:$0xff]
    %v1438 = vld [vmem:[#allocation10 + $0xf48] sm:$0xff]
    %v1439 = vld [vmem:[#allocation10 + $0xf50] sm:$0xff]
    %v1440 = vld [vmem:[#allocation10 + $0xf58] sm:$0xff]
    %v1441 = vld [vmem:[#allocation10 + $0xf60] sm:$0xff]
    %v1442 = vld [vmem:[#allocation10 + $0xf68] sm:$0xff]
    %v1443 = vld [vmem:[#allocation10 + $0xf70] sm:$0xff]
    %v1444 = vld [vmem:[#allocation10 + $0xf78] sm:$0xff]
    %v1445 = vld [vmem:[#allocation10 + $0xf80] sm:$0xff]
    %v1446 = vld [vmem:[#allocation10 + $0xf88] sm:$0xff]
    %v1447 = vld [vmem:[#allocation10 + $0xf90] sm:$0xff]
    %v1448 = vld [vmem:[#allocation10 + $0xf98] sm:$0xff]
    %v1449 = vld [vmem:[#allocation10 + $0xfa0] sm:$0xff]
    %v1450 = vld [vmem:[#allocation10 + $0xfa8] sm:$0xff]
    %v1451 = vld [vmem:[#allocation10 + $0xfb0] sm:$0xff]
    %v1452 = vld [vmem:[#allocation10 + $0xfb8] sm:$0xff]
    %v1453 = vld [vmem:[#allocation10 + $0xfc0] sm:$0xff]
    %v1454 = vld [vmem:[#allocation10 + $0xfc8] sm:$0xff]
    %v1455 = vld [vmem:[#allocation10 + $0xfd0] sm:$0xff]
    %v1456 = vld [vmem:[#allocation10 + $0xfd8] sm:$0xff]
    %v1457 = vld [vmem:[#allocation10 + $0xfe0] sm:$0xff]
    %v1458 = vld [vmem:[#allocation10 + $0xfe8] sm:$0xff]
    %v1459 = vld [vmem:[#allocation10 + $0xff0] sm:$0xff]
    %v1460 = vld [vmem:[#allocation10 + $0xff8] sm:$0xff]
    %v1461 = vld [vmem:[#allocation12] sm:$0xf]
    %v1463 = vlaneseq
    %v1464 = vshrl.u32 %v1463, 7
    %v1465 = vsub.s32 0, %v1464
    %v1466 = vrot.slane %v1461, %v1465
    %v1467 = vlaneseq
    %v1468 = vshrl.u32 %v1467, 7
    %v1469 = vsub.s32 1, %v1468
    %v1470 = vrot.slane %v1461, %v1469
    %v1471 = vlaneseq
    %v1472 = vshrl.u32 %v1471, 7
    %v1473 = vsub.s32 2, %v1472
    %v1474 = vrot.slane %v1461, %v1473
    %v1475 = vlaneseq
    %v1476 = vshrl.u32 %v1475, 7
    %v1477 = vsub.s32 3, %v1476
    %v1478 = vrot.slane %v1461, %v1477
    %v1995 = vunpack.c.l.b16 %v949
    %v1996 = vunpack.c.h.b16 %v949
    %v1997 = vunpack.c.l.b16 %v950
    %v1998 = vunpack.c.h.b16 %v950
    %v1999 = vunpack.c.l.b16 %v951
    %v2000 = vunpack.c.h.b16 %v951
    %v2001 = vunpack.c.l.b16 %v952
    %v2002 = vunpack.c.h.b16 %v952
    %v2003 = vunpack.c.l.b16 %v953
    %v2004 = vunpack.c.h.b16 %v953
    %v2005 = vunpack.c.l.b16 %v954
    %v2006 = vunpack.c.h.b16 %v954
    %v2007 = vunpack.c.l.b16 %v955
    %v2008 = vunpack.c.h.b16 %v955
    %v2009 = vunpack.c.l.b16 %v956
    %v2010 = vunpack.c.h.b16 %v956
    %v2011 = vunpack.c.l.b16 %v957
    %v2012 = vunpack.c.h.b16 %v957
    %v2013 = vunpack.c.l.b16 %v958
    %v2014 = vunpack.c.h.b16 %v958
    %v2015 = vunpack.c.l.b16 %v959
    %v2016 = vunpack.c.h.b16 %v959
    %v2017 = vunpack.c.l.b16 %v960
    %v2018 = vunpack.c.h.b16 %v960
    %v2019 = vunpack.c.l.b16 %v961
    %v2020 = vunpack.c.h.b16 %v961
    %v2021 = vunpack.c.l.b16 %v962
    %v2022 = vunpack.c.h.b16 %v962
    %v2023 = vunpack.c.l.b16 %v963
    %v2024 = vunpack.c.h.b16 %v963
    %v2025 = vunpack.c.l.b16 %v964
    %v2026 = vunpack.c.h.b16 %v964
    %v2027 = vunpack.c.l.b16 %v965
    %v2028 = vunpack.c.h.b16 %v965
    %v2029 = vunpack.c.l.b16 %v966
    %v2030 = vunpack.c.h.b16 %v966
    %v2031 = vunpack.c.l.b16 %v967
    %v2032 = vunpack.c.h.b16 %v967
    %v2033 = vunpack.c.l.b16 %v968
    %v2034 = vunpack.c.h.b16 %v968
    %v2035 = vunpack.c.l.b16 %v969
    %v2036 = vunpack.c.h.b16 %v969
    %v2037 = vunpack.c.l.b16 %v970
    %v2038 = vunpack.c.h.b16 %v970
    %v2039 = vunpack.c.l.b16 %v971
    %v2040 = vunpack.c.h.b16 %v971
    %v2041 = vunpack.c.l.b16 %v972
    %v2042 = vunpack.c.h.b16 %v972
    %v2043 = vunpack.c.l.b16 %v973
    %v2044 = vunpack.c.h.b16 %v973
    %v2045 = vunpack.c.l.b16 %v974
    %v2046 = vunpack.c.h.b16 %v974
    %v2047 = vunpack.c.l.b16 %v975
    %v2048 = vunpack.c.h.b16 %v975
    %v2049 = vunpack.c.l.b16 %v976
    %v2050 = vunpack.c.h.b16 %v976
    %v2051 = vunpack.c.l.b16 %v977
    %v2052 = vunpack.c.h.b16 %v977
    %v2053 = vunpack.c.l.b16 %v978
    %v2054 = vunpack.c.h.b16 %v978
    %v2055 = vunpack.c.l.b16 %v979
    %v2056 = vunpack.c.h.b16 %v979
    %v2057 = vunpack.c.l.b16 %v980
    %v2058 = vunpack.c.h.b16 %v980
    %v2059 = vunpack.c.l.b16 %v981
    %v2060 = vunpack.c.h.b16 %v981
    %v2061 = vunpack.c.l.b16 %v982
    %v2062 = vunpack.c.h.b16 %v982
    %v2063 = vunpack.c.l.b16 %v983
    %v2064 = vunpack.c.h.b16 %v983
    %v2065 = vunpack.c.l.b16 %v984
    %v2066 = vunpack.c.h.b16 %v984
    %v2067 = vunpack.c.l.b16 %v985
    %v2068 = vunpack.c.h.b16 %v985
    %v2069 = vunpack.c.l.b16 %v986
    %v2070 = vunpack.c.h.b16 %v986
    %v2071 = vunpack.c.l.b16 %v987
    %v2072 = vunpack.c.h.b16 %v987
    %v2073 = vunpack.c.l.b16 %v988
    %v2074 = vunpack.c.h.b16 %v988
    %v2075 = vunpack.c.l.b16 %v989
    %v2076 = vunpack.c.h.b16 %v989
    %v2077 = vunpack.c.l.b16 %v990
    %v2078 = vunpack.c.h.b16 %v990
    %v2079 = vunpack.c.l.b16 %v991
    %v2080 = vunpack.c.h.b16 %v991
    %v2081 = vunpack.c.l.b16 %v992
    %v2082 = vunpack.c.h.b16 %v992
    %v2083 = vunpack.c.l.b16 %v993
    %v2084 = vunpack.c.h.b16 %v993
    %v2085 = vunpack.c.l.b16 %v994
    %v2086 = vunpack.c.h.b16 %v994
    %v2087 = vunpack.c.l.b16 %v995
    %v2088 = vunpack.c.h.b16 %v995
    %v2089 = vunpack.c.l.b16 %v996
    %v2090 = vunpack.c.h.b16 %v996
    %v2091 = vunpack.c.l.b16 %v997
    %v2092 = vunpack.c.h.b16 %v997
    %v2093 = vunpack.c.l.b16 %v998
    %v2094 = vunpack.c.h.b16 %v998
    %v2095 = vunpack.c.l.b16 %v999
    %v2096 = vunpack.c.h.b16 %v999
    %v2097 = vunpack.c.l.b16 %v1000
    %v2098 = vunpack.c.h.b16 %v1000
    %v2099 = vunpack.c.l.b16 %v1001
    %v2100 = vunpack.c.h.b16 %v1001
    %v2101 = vunpack.c.l.b16 %v1002
    %v2102 = vunpack.c.h.b16 %v1002
    %v2103 = vunpack.c.l.b16 %v1003
    %v2104 = vunpack.c.h.b16 %v1003
    %v2105 = vunpack.c.l.b16 %v1004
    %v2106 = vunpack.c.h.b16 %v1004
    %v2107 = vunpack.c.l.b16 %v1005
    %v2108 = vunpack.c.h.b16 %v1005
    %v2109 = vunpack.c.l.b16 %v1006
    %v2110 = vunpack.c.h.b16 %v1006
    %v2111 = vunpack.c.l.b16 %v1007
    %v2112 = vunpack.c.h.b16 %v1007
    %v2113 = vunpack.c.l.b16 %v1008
    %v2114 = vunpack.c.h.b16 %v1008
    %v2115 = vunpack.c.l.b16 %v1009
    %v2116 = vunpack.c.h.b16 %v1009
    %v2117 = vunpack.c.l.b16 %v1010
    %v2118 = vunpack.c.h.b16 %v1010
    %v2119 = vunpack.c.l.b16 %v1011
    %v2120 = vunpack.c.h.b16 %v1011
    %v2121 = vunpack.c.l.b16 %v1012
    %v2122 = vunpack.c.h.b16 %v1012
    %v2123 = vunpack.c.l.b16 %v1013
    %v2124 = vunpack.c.h.b16 %v1013
    %v2125 = vunpack.c.l.b16 %v1014
    %v2126 = vunpack.c.h.b16 %v1014
    %v2127 = vunpack.c.l.b16 %v1015
    %v2128 = vunpack.c.h.b16 %v1015
    %v2129 = vunpack.c.l.b16 %v1016
    %v2130 = vunpack.c.h.b16 %v1016
    %v2131 = vunpack.c.l.b16 %v1017
    %v2132 = vunpack.c.h.b16 %v1017
    %v2133 = vunpack.c.l.b16 %v1018
    %v2134 = vunpack.c.h.b16 %v1018
    %v2135 = vunpack.c.l.b16 %v1019
    %v2136 = vunpack.c.h.b16 %v1019
    %v2137 = vunpack.c.l.b16 %v1020
    %v2138 = vunpack.c.h.b16 %v1020
    %v2139 = vunpack.c.l.b16 %v1021
    %v2140 = vunpack.c.h.b16 %v1021
    %v2141 = vunpack.c.l.b16 %v1022
    %v2142 = vunpack.c.h.b16 %v1022
    %v2143 = vunpack.c.l.b16 %v1023
    %v2144 = vunpack.c.h.b16 %v1023
    %v2145 = vunpack.c.l.b16 %v1024
    %v2146 = vunpack.c.h.b16 %v1024
    %v2147 = vunpack.c.l.b16 %v1025
    %v2148 = vunpack.c.h.b16 %v1025
    %v2149 = vunpack.c.l.b16 %v1026
    %v2150 = vunpack.c.h.b16 %v1026
    %v2151 = vunpack.c.l.b16 %v1027
    %v2152 = vunpack.c.h.b16 %v1027
    %v2153 = vunpack.c.l.b16 %v1028
    %v2154 = vunpack.c.h.b16 %v1028
    %v2155 = vunpack.c.l.b16 %v1029
    %v2156 = vunpack.c.h.b16 %v1029
    %v2157 = vunpack.c.l.b16 %v1030
    %v2158 = vunpack.c.h.b16 %v1030
    %v2159 = vunpack.c.l.b16 %v1031
    %v2160 = vunpack.c.h.b16 %v1031
    %v2161 = vunpack.c.l.b16 %v1032
    %v2162 = vunpack.c.h.b16 %v1032
    %v2163 = vunpack.c.l.b16 %v1033
    %v2164 = vunpack.c.h.b16 %v1033
    %v2165 = vunpack.c.l.b16 %v1034
    %v2166 = vunpack.c.h.b16 %v1034
    %v2167 = vunpack.c.l.b16 %v1035
    %v2168 = vunpack.c.h.b16 %v1035
    %v2169 = vunpack.c.l.b16 %v1036
    %v2170 = vunpack.c.h.b16 %v1036
    %v2171 = vunpack.c.l.b16 %v1037
    %v2172 = vunpack.c.h.b16 %v1037
    %v2173 = vunpack.c.l.b16 %v1038
    %v2174 = vunpack.c.h.b16 %v1038
    %v2175 = vunpack.c.l.b16 %v1039
    %v2176 = vunpack.c.h.b16 %v1039
    %v2177 = vunpack.c.l.b16 %v1040
    %v2178 = vunpack.c.h.b16 %v1040
    %v2179 = vunpack.c.l.b16 %v1041
    %v2180 = vunpack.c.h.b16 %v1041
    %v2181 = vunpack.c.l.b16 %v1042
    %v2182 = vunpack.c.h.b16 %v1042
    %v2183 = vunpack.c.l.b16 %v1043
    %v2184 = vunpack.c.h.b16 %v1043
    %v2185 = vunpack.c.l.b16 %v1044
    %v2186 = vunpack.c.h.b16 %v1044
    %v2187 = vunpack.c.l.b16 %v1045
    %v2188 = vunpack.c.h.b16 %v1045
    %v2189 = vunpack.c.l.b16 %v1046
    %v2190 = vunpack.c.h.b16 %v1046
    %v2191 = vunpack.c.l.b16 %v1047
    %v2192 = vunpack.c.h.b16 %v1047
    %v2193 = vunpack.c.l.b16 %v1048
    %v2194 = vunpack.c.h.b16 %v1048
    %v2195 = vunpack.c.l.b16 %v1049
    %v2196 = vunpack.c.h.b16 %v1049
    %v2197 = vunpack.c.l.b16 %v1050
    %v2198 = vunpack.c.h.b16 %v1050
    %v2199 = vunpack.c.l.b16 %v1051
    %v2200 = vunpack.c.h.b16 %v1051
    %v2201 = vunpack.c.l.b16 %v1052
    %v2202 = vunpack.c.h.b16 %v1052
    %v2203 = vunpack.c.l.b16 %v1053
    %v2204 = vunpack.c.h.b16 %v1053
    %v2205 = vunpack.c.l.b16 %v1054
    %v2206 = vunpack.c.h.b16 %v1054
    %v2207 = vunpack.c.l.b16 %v1055
    %v2208 = vunpack.c.h.b16 %v1055
    %v2209 = vunpack.c.l.b16 %v1056
    %v2210 = vunpack.c.h.b16 %v1056
    %v2211 = vunpack.c.l.b16 %v1057
    %v2212 = vunpack.c.h.b16 %v1057
    %v2213 = vunpack.c.l.b16 %v1058
    %v2214 = vunpack.c.h.b16 %v1058
    %v2215 = vunpack.c.l.b16 %v1059
    %v2216 = vunpack.c.h.b16 %v1059
    %v2217 = vunpack.c.l.b16 %v1060
    %v2218 = vunpack.c.h.b16 %v1060
    %v2219 = vunpack.c.l.b16 %v1061
    %v2220 = vunpack.c.h.b16 %v1061
    %v2221 = vunpack.c.l.b16 %v1062
    %v2222 = vunpack.c.h.b16 %v1062
    %v2223 = vunpack.c.l.b16 %v1063
    %v2224 = vunpack.c.h.b16 %v1063
    %v2225 = vunpack.c.l.b16 %v1064
    %v2226 = vunpack.c.h.b16 %v1064
    %v2227 = vunpack.c.l.b16 %v1065
    %v2228 = vunpack.c.h.b16 %v1065
    %v2229 = vunpack.c.l.b16 %v1066
    %v2230 = vunpack.c.h.b16 %v1066
    %v2231 = vunpack.c.l.b16 %v1067
    %v2232 = vunpack.c.h.b16 %v1067
    %v2233 = vunpack.c.l.b16 %v1068
    %v2234 = vunpack.c.h.b16 %v1068
    %v2235 = vunpack.c.l.b16 %v1069
    %v2236 = vunpack.c.h.b16 %v1069
    %v2237 = vunpack.c.l.b16 %v1070
    %v2238 = vunpack.c.h.b16 %v1070
    %v2239 = vunpack.c.l.b16 %v1071
    %v2240 = vunpack.c.h.b16 %v1071
    %v2241 = vunpack.c.l.b16 %v1072
    %v2242 = vunpack.c.h.b16 %v1072
    %v2243 = vunpack.c.l.b16 %v1073
    %v2244 = vunpack.c.h.b16 %v1073
    %v2245 = vunpack.c.l.b16 %v1074
    %v2246 = vunpack.c.h.b16 %v1074
    %v2247 = vunpack.c.l.b16 %v1075
    %v2248 = vunpack.c.h.b16 %v1075
    %v2249 = vunpack.c.l.b16 %v1076
    %v2250 = vunpack.c.h.b16 %v1076
    %v2251 = vunpack.c.l.b16 %v1077
    %v2252 = vunpack.c.h.b16 %v1077
    %v2253 = vunpack.c.l.b16 %v1078
    %v2254 = vunpack.c.h.b16 %v1078
    %v2255 = vunpack.c.l.b16 %v1079
    %v2256 = vunpack.c.h.b16 %v1079
    %v2257 = vunpack.c.l.b16 %v1080
    %v2258 = vunpack.c.h.b16 %v1080
    %v2259 = vunpack.c.l.b16 %v1081
    %v2260 = vunpack.c.h.b16 %v1081
    %v2261 = vunpack.c.l.b16 %v1082
    %v2262 = vunpack.c.h.b16 %v1082
    %v2263 = vunpack.c.l.b16 %v1083
    %v2264 = vunpack.c.h.b16 %v1083
    %v2265 = vunpack.c.l.b16 %v1084
    %v2266 = vunpack.c.h.b16 %v1084
    %v2267 = vunpack.c.l.b16 %v1085
    %v2268 = vunpack.c.h.b16 %v1085
    %v2269 = vunpack.c.l.b16 %v1086
    %v2270 = vunpack.c.h.b16 %v1086
    %v2271 = vunpack.c.l.b16 %v1087
    %v2272 = vunpack.c.h.b16 %v1087
    %v2273 = vunpack.c.l.b16 %v1088
    %v2274 = vunpack.c.h.b16 %v1088
    %v2275 = vunpack.c.l.b16 %v1089
    %v2276 = vunpack.c.h.b16 %v1089
    %v2277 = vunpack.c.l.b16 %v1090
    %v2278 = vunpack.c.h.b16 %v1090
    %v2279 = vunpack.c.l.b16 %v1091
    %v2280 = vunpack.c.h.b16 %v1091
    %v2281 = vunpack.c.l.b16 %v1092
    %v2282 = vunpack.c.h.b16 %v1092
    %v2283 = vunpack.c.l.b16 %v1093
    %v2284 = vunpack.c.h.b16 %v1093
    %v2285 = vunpack.c.l.b16 %v1094
    %v2286 = vunpack.c.h.b16 %v1094
    %v2287 = vunpack.c.l.b16 %v1095
    %v2288 = vunpack.c.h.b16 %v1095
    %v2289 = vunpack.c.l.b16 %v1096
    %v2290 = vunpack.c.h.b16 %v1096
    %v2291 = vunpack.c.l.b16 %v1097
    %v2292 = vunpack.c.h.b16 %v1097
    %v2293 = vunpack.c.l.b16 %v1098
    %v2294 = vunpack.c.h.b16 %v1098
    %v2295 = vunpack.c.l.b16 %v1099
    %v2296 = vunpack.c.h.b16 %v1099
    %v2297 = vunpack.c.l.b16 %v1100
    %v2298 = vunpack.c.h.b16 %v1100
    %v2299 = vunpack.c.l.b16 %v1101
    %v2300 = vunpack.c.h.b16 %v1101
    %v2301 = vunpack.c.l.b16 %v1102
    %v2302 = vunpack.c.h.b16 %v1102
    %v2303 = vunpack.c.l.b16 %v1103
    %v2304 = vunpack.c.h.b16 %v1103
    %v2305 = vunpack.c.l.b16 %v1104
    %v2306 = vunpack.c.h.b16 %v1104
    %v2307 = vunpack.c.l.b16 %v1105
    %v2308 = vunpack.c.h.b16 %v1105
    %v2309 = vunpack.c.l.b16 %v1106
    %v2310 = vunpack.c.h.b16 %v1106
    %v2311 = vunpack.c.l.b16 %v1107
    %v2312 = vunpack.c.h.b16 %v1107
    %v2313 = vunpack.c.l.b16 %v1108
    %v2314 = vunpack.c.h.b16 %v1108
    %v2315 = vunpack.c.l.b16 %v1109
    %v2316 = vunpack.c.h.b16 %v1109
    %v2317 = vunpack.c.l.b16 %v1110
    %v2318 = vunpack.c.h.b16 %v1110
    %v2319 = vunpack.c.l.b16 %v1111
    %v2320 = vunpack.c.h.b16 %v1111
    %v2321 = vunpack.c.l.b16 %v1112
    %v2322 = vunpack.c.h.b16 %v1112
    %v2323 = vunpack.c.l.b16 %v1113
    %v2324 = vunpack.c.h.b16 %v1113
    %v2325 = vunpack.c.l.b16 %v1114
    %v2326 = vunpack.c.h.b16 %v1114
    %v2327 = vunpack.c.l.b16 %v1115
    %v2328 = vunpack.c.h.b16 %v1115
    %v2329 = vunpack.c.l.b16 %v1116
    %v2330 = vunpack.c.h.b16 %v1116
    %v2331 = vunpack.c.l.b16 %v1117
    %v2332 = vunpack.c.h.b16 %v1117
    %v2333 = vunpack.c.l.b16 %v1118
    %v2334 = vunpack.c.h.b16 %v1118
    %v2335 = vunpack.c.l.b16 %v1119
    %v2336 = vunpack.c.h.b16 %v1119
    %v2337 = vunpack.c.l.b16 %v1120
    %v2338 = vunpack.c.h.b16 %v1120
    %v2339 = vunpack.c.l.b16 %v1121
    %v2340 = vunpack.c.h.b16 %v1121
    %v2341 = vunpack.c.l.b16 %v1122
    %v2342 = vunpack.c.h.b16 %v1122
    %v2343 = vunpack.c.l.b16 %v1123
    %v2344 = vunpack.c.h.b16 %v1123
    %v2345 = vunpack.c.l.b16 %v1124
    %v2346 = vunpack.c.h.b16 %v1124
    %v2347 = vunpack.c.l.b16 %v1125
    %v2348 = vunpack.c.h.b16 %v1125
    %v2349 = vunpack.c.l.b16 %v1126
    %v2350 = vunpack.c.h.b16 %v1126
    %v2351 = vunpack.c.l.b16 %v1127
    %v2352 = vunpack.c.h.b16 %v1127
    %v2353 = vunpack.c.l.b16 %v1128
    %v2354 = vunpack.c.h.b16 %v1128
    %v2355 = vunpack.c.l.b16 %v1129
    %v2356 = vunpack.c.h.b16 %v1129
    %v2357 = vunpack.c.l.b16 %v1130
    %v2358 = vunpack.c.h.b16 %v1130
    %v2359 = vunpack.c.l.b16 %v1131
    %v2360 = vunpack.c.h.b16 %v1131
    %v2361 = vunpack.c.l.b16 %v1132
    %v2362 = vunpack.c.h.b16 %v1132
    %v2363 = vunpack.c.l.b16 %v1133
    %v2364 = vunpack.c.h.b16 %v1133
    %v2365 = vunpack.c.l.b16 %v1134
    %v2366 = vunpack.c.h.b16 %v1134
    %v2367 = vunpack.c.l.b16 %v1135
    %v2368 = vunpack.c.h.b16 %v1135
    %v2369 = vunpack.c.l.b16 %v1136
    %v2370 = vunpack.c.h.b16 %v1136
    %v2371 = vunpack.c.l.b16 %v1137
    %v2372 = vunpack.c.h.b16 %v1137
    %v2373 = vunpack.c.l.b16 %v1138
    %v2374 = vunpack.c.h.b16 %v1138
    %v2375 = vunpack.c.l.b16 %v1139
    %v2376 = vunpack.c.h.b16 %v1139
    %v2377 = vunpack.c.l.b16 %v1140
    %v2378 = vunpack.c.h.b16 %v1140
    %v2379 = vunpack.c.l.b16 %v1141
    %v2380 = vunpack.c.h.b16 %v1141
    %v2381 = vunpack.c.l.b16 %v1142
    %v2382 = vunpack.c.h.b16 %v1142
    %v2383 = vunpack.c.l.b16 %v1143
    %v2384 = vunpack.c.h.b16 %v1143
    %v2385 = vunpack.c.l.b16 %v1144
    %v2386 = vunpack.c.h.b16 %v1144
    %v2387 = vunpack.c.l.b16 %v1145
    %v2388 = vunpack.c.h.b16 %v1145
    %v2389 = vunpack.c.l.b16 %v1146
    %v2390 = vunpack.c.h.b16 %v1146
    %v2391 = vunpack.c.l.b16 %v1147
    %v2392 = vunpack.c.h.b16 %v1147
    %v2393 = vunpack.c.l.b16 %v1148
    %v2394 = vunpack.c.h.b16 %v1148
    %v2395 = vunpack.c.l.b16 %v1149
    %v2396 = vunpack.c.h.b16 %v1149
    %v2397 = vunpack.c.l.b16 %v1150
    %v2398 = vunpack.c.h.b16 %v1150
    %v2399 = vunpack.c.l.b16 %v1151
    %v2400 = vunpack.c.h.b16 %v1151
    %v2401 = vunpack.c.l.b16 %v1152
    %v2402 = vunpack.c.h.b16 %v1152
    %v2403 = vunpack.c.l.b16 %v1153
    %v2404 = vunpack.c.h.b16 %v1153
    %v2405 = vunpack.c.l.b16 %v1154
    %v2406 = vunpack.c.h.b16 %v1154
    %v2407 = vunpack.c.l.b16 %v1155
    %v2408 = vunpack.c.h.b16 %v1155
    %v2409 = vunpack.c.l.b16 %v1156
    %v2410 = vunpack.c.h.b16 %v1156
    %v2411 = vunpack.c.l.b16 %v1157
    %v2412 = vunpack.c.h.b16 %v1157
    %v2413 = vunpack.c.l.b16 %v1158
    %v2414 = vunpack.c.h.b16 %v1158
    %v2415 = vunpack.c.l.b16 %v1159
    %v2416 = vunpack.c.h.b16 %v1159
    %v2417 = vunpack.c.l.b16 %v1160
    %v2418 = vunpack.c.h.b16 %v1160
    %v2419 = vunpack.c.l.b16 %v1161
    %v2420 = vunpack.c.h.b16 %v1161
    %v2421 = vunpack.c.l.b16 %v1162
    %v2422 = vunpack.c.h.b16 %v1162
    %v2423 = vunpack.c.l.b16 %v1163
    %v2424 = vunpack.c.h.b16 %v1163
    %v2425 = vunpack.c.l.b16 %v1164
    %v2426 = vunpack.c.h.b16 %v1164
    %v2427 = vunpack.c.l.b16 %v1165
    %v2428 = vunpack.c.h.b16 %v1165
    %v2429 = vunpack.c.l.b16 %v1166
    %v2430 = vunpack.c.h.b16 %v1166
    %v2431 = vunpack.c.l.b16 %v1167
    %v2432 = vunpack.c.h.b16 %v1167
    %v2433 = vunpack.c.l.b16 %v1168
    %v2434 = vunpack.c.h.b16 %v1168
    %v2435 = vunpack.c.l.b16 %v1169
    %v2436 = vunpack.c.h.b16 %v1169
    %v2437 = vunpack.c.l.b16 %v1170
    %v2438 = vunpack.c.h.b16 %v1170
    %v2439 = vunpack.c.l.b16 %v1171
    %v2440 = vunpack.c.h.b16 %v1171
    %v2441 = vunpack.c.l.b16 %v1172
    %v2442 = vunpack.c.h.b16 %v1172
    %v2443 = vunpack.c.l.b16 %v1173
    %v2444 = vunpack.c.h.b16 %v1173
    %v2445 = vunpack.c.l.b16 %v1174
    %v2446 = vunpack.c.h.b16 %v1174
    %v2447 = vunpack.c.l.b16 %v1175
    %v2448 = vunpack.c.h.b16 %v1175
    %v2449 = vunpack.c.l.b16 %v1176
    %v2450 = vunpack.c.h.b16 %v1176
    %v2451 = vunpack.c.l.b16 %v1177
    %v2452 = vunpack.c.h.b16 %v1177
    %v2453 = vunpack.c.l.b16 %v1178
    %v2454 = vunpack.c.h.b16 %v1178
    %v2455 = vunpack.c.l.b16 %v1179
    %v2456 = vunpack.c.h.b16 %v1179
    %v2457 = vunpack.c.l.b16 %v1180
    %v2458 = vunpack.c.h.b16 %v1180
    %v2459 = vunpack.c.l.b16 %v1181
    %v2460 = vunpack.c.h.b16 %v1181
    %v2461 = vunpack.c.l.b16 %v1182
    %v2462 = vunpack.c.h.b16 %v1182
    %v2463 = vunpack.c.l.b16 %v1183
    %v2464 = vunpack.c.h.b16 %v1183
    %v2465 = vunpack.c.l.b16 %v1184
    %v2466 = vunpack.c.h.b16 %v1184
    %v2467 = vunpack.c.l.b16 %v1185
    %v2468 = vunpack.c.h.b16 %v1185
    %v2469 = vunpack.c.l.b16 %v1186
    %v2470 = vunpack.c.h.b16 %v1186
    %v2471 = vunpack.c.l.b16 %v1187
    %v2472 = vunpack.c.h.b16 %v1187
    %v2473 = vunpack.c.l.b16 %v1188
    %v2474 = vunpack.c.h.b16 %v1188
    %v2475 = vunpack.c.l.b16 %v1189
    %v2476 = vunpack.c.h.b16 %v1189
    %v2477 = vunpack.c.l.b16 %v1190
    %v2478 = vunpack.c.h.b16 %v1190
    %v2479 = vunpack.c.l.b16 %v1191
    %v2480 = vunpack.c.h.b16 %v1191
    %v2481 = vunpack.c.l.b16 %v1192
    %v2482 = vunpack.c.h.b16 %v1192
    %v2483 = vunpack.c.l.b16 %v1193
    %v2484 = vunpack.c.h.b16 %v1193
    %v2485 = vunpack.c.l.b16 %v1194
    %v2486 = vunpack.c.h.b16 %v1194
    %v2487 = vunpack.c.l.b16 %v1195
    %v2488 = vunpack.c.h.b16 %v1195
    %v2489 = vunpack.c.l.b16 %v1196
    %v2490 = vunpack.c.h.b16 %v1196
    %v2491 = vunpack.c.l.b16 %v1197
    %v2492 = vunpack.c.h.b16 %v1197
    %v2493 = vunpack.c.l.b16 %v1198
    %v2494 = vunpack.c.h.b16 %v1198
    %v2495 = vunpack.c.l.b16 %v1199
    %v2496 = vunpack.c.h.b16 %v1199
    %v2497 = vunpack.c.l.b16 %v1200
    %v2498 = vunpack.c.h.b16 %v1200
    %v2499 = vunpack.c.l.b16 %v1201
    %v2500 = vunpack.c.h.b16 %v1201
    %v2501 = vunpack.c.l.b16 %v1202
    %v2502 = vunpack.c.h.b16 %v1202
    %v2503 = vunpack.c.l.b16 %v1203
    %v2504 = vunpack.c.h.b16 %v1203
    %v2505 = vunpack.c.l.b16 %v1204
    %v2506 = vunpack.c.h.b16 %v1204
    %v2507 = vunpack.c.l.b16 %v1205
    %v2508 = vunpack.c.h.b16 %v1205
    %v2509 = vunpack.c.l.b16 %v1206
    %v2510 = vunpack.c.h.b16 %v1206
    %v2511 = vunpack.c.l.b16 %v1207
    %v2512 = vunpack.c.h.b16 %v1207
    %v2513 = vunpack.c.l.b16 %v1208
    %v2514 = vunpack.c.h.b16 %v1208
    %v2515 = vunpack.c.l.b16 %v1209
    %v2516 = vunpack.c.h.b16 %v1209
    %v2517 = vunpack.c.l.b16 %v1210
    %v2518 = vunpack.c.h.b16 %v1210
    %v2519 = vunpack.c.l.b16 %v1211
    %v2520 = vunpack.c.h.b16 %v1211
    %v2521 = vunpack.c.l.b16 %v1212
    %v2522 = vunpack.c.h.b16 %v1212
    %v2523 = vunpack.c.l.b16 %v1213
    %v2524 = vunpack.c.h.b16 %v1213
    %v2525 = vunpack.c.l.b16 %v1214
    %v2526 = vunpack.c.h.b16 %v1214
    %v2527 = vunpack.c.l.b16 %v1215
    %v2528 = vunpack.c.h.b16 %v1215
    %v2529 = vunpack.c.l.b16 %v1216
    %v2530 = vunpack.c.h.b16 %v1216
    %v2531 = vunpack.c.l.b16 %v1217
    %v2532 = vunpack.c.h.b16 %v1217
    %v2533 = vunpack.c.l.b16 %v1218
    %v2534 = vunpack.c.h.b16 %v1218
    %v2535 = vunpack.c.l.b16 %v1219
    %v2536 = vunpack.c.h.b16 %v1219
    %v2537 = vunpack.c.l.b16 %v1220
    %v2538 = vunpack.c.h.b16 %v1220
    %v2539 = vunpack.c.l.b16 %v1221
    %v2540 = vunpack.c.h.b16 %v1221
    %v2541 = vunpack.c.l.b16 %v1222
    %v2542 = vunpack.c.h.b16 %v1222
    %v2543 = vunpack.c.l.b16 %v1223
    %v2544 = vunpack.c.h.b16 %v1223
    %v2545 = vunpack.c.l.b16 %v1224
    %v2546 = vunpack.c.h.b16 %v1224
    %v2547 = vunpack.c.l.b16 %v1225
    %v2548 = vunpack.c.h.b16 %v1225
    %v2549 = vunpack.c.l.b16 %v1226
    %v2550 = vunpack.c.h.b16 %v1226
    %v2551 = vunpack.c.l.b16 %v1227
    %v2552 = vunpack.c.h.b16 %v1227
    %v2553 = vunpack.c.l.b16 %v1228
    %v2554 = vunpack.c.h.b16 %v1228
    %v2555 = vunpack.c.l.b16 %v1229
    %v2556 = vunpack.c.h.b16 %v1229
    %v2557 = vunpack.c.l.b16 %v1230
    %v2558 = vunpack.c.h.b16 %v1230
    %v2559 = vunpack.c.l.b16 %v1231
    %v2560 = vunpack.c.h.b16 %v1231
    %v2561 = vunpack.c.l.b16 %v1232
    %v2562 = vunpack.c.h.b16 %v1232
    %v2563 = vunpack.c.l.b16 %v1233
    %v2564 = vunpack.c.h.b16 %v1233
    %v2565 = vunpack.c.l.b16 %v1234
    %v2566 = vunpack.c.h.b16 %v1234
    %v2567 = vunpack.c.l.b16 %v1235
    %v2568 = vunpack.c.h.b16 %v1235
    %v2569 = vunpack.c.l.b16 %v1236
    %v2570 = vunpack.c.h.b16 %v1236
    %v2571 = vunpack.c.l.b16 %v1237
    %v2572 = vunpack.c.h.b16 %v1237
    %v2573 = vunpack.c.l.b16 %v1238
    %v2574 = vunpack.c.h.b16 %v1238
    %v2575 = vunpack.c.l.b16 %v1239
    %v2576 = vunpack.c.h.b16 %v1239
    %v2577 = vunpack.c.l.b16 %v1240
    %v2578 = vunpack.c.h.b16 %v1240
    %v2579 = vunpack.c.l.b16 %v1241
    %v2580 = vunpack.c.h.b16 %v1241
    %v2581 = vunpack.c.l.b16 %v1242
    %v2582 = vunpack.c.h.b16 %v1242
    %v2583 = vunpack.c.l.b16 %v1243
    %v2584 = vunpack.c.h.b16 %v1243
    %v2585 = vunpack.c.l.b16 %v1244
    %v2586 = vunpack.c.h.b16 %v1244
    %v2587 = vunpack.c.l.b16 %v1245
    %v2588 = vunpack.c.h.b16 %v1245
    %v2589 = vunpack.c.l.b16 %v1246
    %v2590 = vunpack.c.h.b16 %v1246
    %v2591 = vunpack.c.l.b16 %v1247
    %v2592 = vunpack.c.h.b16 %v1247
    %v2593 = vunpack.c.l.b16 %v1248
    %v2594 = vunpack.c.h.b16 %v1248
    %v2595 = vunpack.c.l.b16 %v1249
    %v2596 = vunpack.c.h.b16 %v1249
    %v2597 = vunpack.c.l.b16 %v1250
    %v2598 = vunpack.c.h.b16 %v1250
    %v2599 = vunpack.c.l.b16 %v1251
    %v2600 = vunpack.c.h.b16 %v1251
    %v2601 = vunpack.c.l.b16 %v1252
    %v2602 = vunpack.c.h.b16 %v1252
    %v2603 = vunpack.c.l.b16 %v1253
    %v2604 = vunpack.c.h.b16 %v1253
    %v2605 = vunpack.c.l.b16 %v1254
    %v2606 = vunpack.c.h.b16 %v1254
    %v2607 = vunpack.c.l.b16 %v1255
    %v2608 = vunpack.c.h.b16 %v1255
    %v2609 = vunpack.c.l.b16 %v1256
    %v2610 = vunpack.c.h.b16 %v1256
    %v2611 = vunpack.c.l.b16 %v1257
    %v2612 = vunpack.c.h.b16 %v1257
    %v2613 = vunpack.c.l.b16 %v1258
    %v2614 = vunpack.c.h.b16 %v1258
    %v2615 = vunpack.c.l.b16 %v1259
    %v2616 = vunpack.c.h.b16 %v1259
    %v2617 = vunpack.c.l.b16 %v1260
    %v2618 = vunpack.c.h.b16 %v1260
    %v2619 = vunpack.c.l.b16 %v1261
    %v2620 = vunpack.c.h.b16 %v1261
    %v2621 = vunpack.c.l.b16 %v1262
    %v2622 = vunpack.c.h.b16 %v1262
    %v2623 = vunpack.c.l.b16 %v1263
    %v2624 = vunpack.c.h.b16 %v1263
    %v2625 = vunpack.c.l.b16 %v1264
    %v2626 = vunpack.c.h.b16 %v1264
    %v2627 = vunpack.c.l.b16 %v1265
    %v2628 = vunpack.c.h.b16 %v1265
    %v2629 = vunpack.c.l.b16 %v1266
    %v2630 = vunpack.c.h.b16 %v1266
    %v2631 = vunpack.c.l.b16 %v1267
    %v2632 = vunpack.c.h.b16 %v1267
    %v2633 = vunpack.c.l.b16 %v1268
    %v2634 = vunpack.c.h.b16 %v1268
    %v2635 = vunpack.c.l.b16 %v1269
    %v2636 = vunpack.c.h.b16 %v1269
    %v2637 = vunpack.c.l.b16 %v1270
    %v2638 = vunpack.c.h.b16 %v1270
    %v2639 = vunpack.c.l.b16 %v1271
    %v2640 = vunpack.c.h.b16 %v1271
    %v2641 = vunpack.c.l.b16 %v1272
    %v2642 = vunpack.c.h.b16 %v1272
    %v2643 = vunpack.c.l.b16 %v1273
    %v2644 = vunpack.c.h.b16 %v1273
    %v2645 = vunpack.c.l.b16 %v1274
    %v2646 = vunpack.c.h.b16 %v1274
    %v2647 = vunpack.c.l.b16 %v1275
    %v2648 = vunpack.c.h.b16 %v1275
    %v2649 = vunpack.c.l.b16 %v1276
    %v2650 = vunpack.c.h.b16 %v1276
    %v2651 = vunpack.c.l.b16 %v1277
    %v2652 = vunpack.c.h.b16 %v1277
    %v2653 = vunpack.c.l.b16 %v1278
    %v2654 = vunpack.c.h.b16 %v1278
    %v2655 = vunpack.c.l.b16 %v1279
    %v2656 = vunpack.c.h.b16 %v1279
    %v2657 = vunpack.c.l.b16 %v1280
    %v2658 = vunpack.c.h.b16 %v1280
    %v2659 = vunpack.c.l.b16 %v1281
    %v2660 = vunpack.c.h.b16 %v1281
    %v2661 = vunpack.c.l.b16 %v1282
    %v2662 = vunpack.c.h.b16 %v1282
    %v2663 = vunpack.c.l.b16 %v1283
    %v2664 = vunpack.c.h.b16 %v1283
    %v2665 = vunpack.c.l.b16 %v1284
    %v2666 = vunpack.c.h.b16 %v1284
    %v2667 = vunpack.c.l.b16 %v1285
    %v2668 = vunpack.c.h.b16 %v1285
    %v2669 = vunpack.c.l.b16 %v1286
    %v2670 = vunpack.c.h.b16 %v1286
    %v2671 = vunpack.c.l.b16 %v1287
    %v2672 = vunpack.c.h.b16 %v1287
    %v2673 = vunpack.c.l.b16 %v1288
    %v2674 = vunpack.c.h.b16 %v1288
    %v2675 = vunpack.c.l.b16 %v1289
    %v2676 = vunpack.c.h.b16 %v1289
    %v2677 = vunpack.c.l.b16 %v1290
    %v2678 = vunpack.c.h.b16 %v1290
    %v2679 = vunpack.c.l.b16 %v1291
    %v2680 = vunpack.c.h.b16 %v1291
    %v2681 = vunpack.c.l.b16 %v1292
    %v2682 = vunpack.c.h.b16 %v1292
    %v2683 = vunpack.c.l.b16 %v1293
    %v2684 = vunpack.c.h.b16 %v1293
    %v2685 = vunpack.c.l.b16 %v1294
    %v2686 = vunpack.c.h.b16 %v1294
    %v2687 = vunpack.c.l.b16 %v1295
    %v2688 = vunpack.c.h.b16 %v1295
    %v2689 = vunpack.c.l.b16 %v1296
    %v2690 = vunpack.c.h.b16 %v1296
    %v2691 = vunpack.c.l.b16 %v1297
    %v2692 = vunpack.c.h.b16 %v1297
    %v2693 = vunpack.c.l.b16 %v1298
    %v2694 = vunpack.c.h.b16 %v1298
    %v2695 = vunpack.c.l.b16 %v1299
    %v2696 = vunpack.c.h.b16 %v1299
    %v2697 = vunpack.c.l.b16 %v1300
    %v2698 = vunpack.c.h.b16 %v1300
    %v2699 = vunpack.c.l.b16 %v1301
    %v2700 = vunpack.c.h.b16 %v1301
    %v2701 = vunpack.c.l.b16 %v1302
    %v2702 = vunpack.c.h.b16 %v1302
    %v2703 = vunpack.c.l.b16 %v1303
    %v2704 = vunpack.c.h.b16 %v1303
    %v2705 = vunpack.c.l.b16 %v1304
    %v2706 = vunpack.c.h.b16 %v1304
    %v2707 = vunpack.c.l.b16 %v1305
    %v2708 = vunpack.c.h.b16 %v1305
    %v2709 = vunpack.c.l.b16 %v1306
    %v2710 = vunpack.c.h.b16 %v1306
    %v2711 = vunpack.c.l.b16 %v1307
    %v2712 = vunpack.c.h.b16 %v1307
    %v2713 = vunpack.c.l.b16 %v1308
    %v2714 = vunpack.c.h.b16 %v1308
    %v2715 = vunpack.c.l.b16 %v1309
    %v2716 = vunpack.c.h.b16 %v1309
    %v2717 = vunpack.c.l.b16 %v1310
    %v2718 = vunpack.c.h.b16 %v1310
    %v2719 = vunpack.c.l.b16 %v1311
    %v2720 = vunpack.c.h.b16 %v1311
    %v2721 = vunpack.c.l.b16 %v1312
    %v2722 = vunpack.c.h.b16 %v1312
    %v2723 = vunpack.c.l.b16 %v1313
    %v2724 = vunpack.c.h.b16 %v1313
    %v2725 = vunpack.c.l.b16 %v1314
    %v2726 = vunpack.c.h.b16 %v1314
    %v2727 = vunpack.c.l.b16 %v1315
    %v2728 = vunpack.c.h.b16 %v1315
    %v2729 = vunpack.c.l.b16 %v1316
    %v2730 = vunpack.c.h.b16 %v1316
    %v2731 = vunpack.c.l.b16 %v1317
    %v2732 = vunpack.c.h.b16 %v1317
    %v2733 = vunpack.c.l.b16 %v1318
    %v2734 = vunpack.c.h.b16 %v1318
    %v2735 = vunpack.c.l.b16 %v1319
    %v2736 = vunpack.c.h.b16 %v1319
    %v2737 = vunpack.c.l.b16 %v1320
    %v2738 = vunpack.c.h.b16 %v1320
    %v2739 = vunpack.c.l.b16 %v1321
    %v2740 = vunpack.c.h.b16 %v1321
    %v2741 = vunpack.c.l.b16 %v1322
    %v2742 = vunpack.c.h.b16 %v1322
    %v2743 = vunpack.c.l.b16 %v1323
    %v2744 = vunpack.c.h.b16 %v1323
    %v2745 = vunpack.c.l.b16 %v1324
    %v2746 = vunpack.c.h.b16 %v1324
    %v2747 = vunpack.c.l.b16 %v1325
    %v2748 = vunpack.c.h.b16 %v1325
    %v2749 = vunpack.c.l.b16 %v1326
    %v2750 = vunpack.c.h.b16 %v1326
    %v2751 = vunpack.c.l.b16 %v1327
    %v2752 = vunpack.c.h.b16 %v1327
    %v2753 = vunpack.c.l.b16 %v1328
    %v2754 = vunpack.c.h.b16 %v1328
    %v2755 = vunpack.c.l.b16 %v1329
    %v2756 = vunpack.c.h.b16 %v1329
    %v2757 = vunpack.c.l.b16 %v1330
    %v2758 = vunpack.c.h.b16 %v1330
    %v2759 = vunpack.c.l.b16 %v1331
    %v2760 = vunpack.c.h.b16 %v1331
    %v2761 = vunpack.c.l.b16 %v1332
    %v2762 = vunpack.c.h.b16 %v1332
    %v2763 = vunpack.c.l.b16 %v1333
    %v2764 = vunpack.c.h.b16 %v1333
    %v2765 = vunpack.c.l.b16 %v1334
    %v2766 = vunpack.c.h.b16 %v1334
    %v2767 = vunpack.c.l.b16 %v1335
    %v2768 = vunpack.c.h.b16 %v1335
    %v2769 = vunpack.c.l.b16 %v1336
    %v2770 = vunpack.c.h.b16 %v1336
    %v2771 = vunpack.c.l.b16 %v1337
    %v2772 = vunpack.c.h.b16 %v1337
    %v2773 = vunpack.c.l.b16 %v1338
    %v2774 = vunpack.c.h.b16 %v1338
    %v2775 = vunpack.c.l.b16 %v1339
    %v2776 = vunpack.c.h.b16 %v1339
    %v2777 = vunpack.c.l.b16 %v1340
    %v2778 = vunpack.c.h.b16 %v1340
    %v2779 = vunpack.c.l.b16 %v1341
    %v2780 = vunpack.c.h.b16 %v1341
    %v2781 = vunpack.c.l.b16 %v1342
    %v2782 = vunpack.c.h.b16 %v1342
    %v2783 = vunpack.c.l.b16 %v1343
    %v2784 = vunpack.c.h.b16 %v1343
    %v2785 = vunpack.c.l.b16 %v1344
    %v2786 = vunpack.c.h.b16 %v1344
    %v2787 = vunpack.c.l.b16 %v1345
    %v2788 = vunpack.c.h.b16 %v1345
    %v2789 = vunpack.c.l.b16 %v1346
    %v2790 = vunpack.c.h.b16 %v1346
    %v2791 = vunpack.c.l.b16 %v1347
    %v2792 = vunpack.c.h.b16 %v1347
    %v2793 = vunpack.c.l.b16 %v1348
    %v2794 = vunpack.c.h.b16 %v1348
    %v2795 = vunpack.c.l.b16 %v1349
    %v2796 = vunpack.c.h.b16 %v1349
    %v2797 = vunpack.c.l.b16 %v1350
    %v2798 = vunpack.c.h.b16 %v1350
    %v2799 = vunpack.c.l.b16 %v1351
    %v2800 = vunpack.c.h.b16 %v1351
    %v2801 = vunpack.c.l.b16 %v1352
    %v2802 = vunpack.c.h.b16 %v1352
    %v2803 = vunpack.c.l.b16 %v1353
    %v2804 = vunpack.c.h.b16 %v1353
    %v2805 = vunpack.c.l.b16 %v1354
    %v2806 = vunpack.c.h.b16 %v1354
    %v2807 = vunpack.c.l.b16 %v1355
    %v2808 = vunpack.c.h.b16 %v1355
    %v2809 = vunpack.c.l.b16 %v1356
    %v2810 = vunpack.c.h.b16 %v1356
    %v2811 = vunpack.c.l.b16 %v1357
    %v2812 = vunpack.c.h.b16 %v1357
    %v2813 = vunpack.c.l.b16 %v1358
    %v2814 = vunpack.c.h.b16 %v1358
    %v2815 = vunpack.c.l.b16 %v1359
    %v2816 = vunpack.c.h.b16 %v1359
    %v2817 = vunpack.c.l.b16 %v1360
    %v2818 = vunpack.c.h.b16 %v1360
    %v2819 = vunpack.c.l.b16 %v1361
    %v2820 = vunpack.c.h.b16 %v1361
    %v2821 = vunpack.c.l.b16 %v1362
    %v2822 = vunpack.c.h.b16 %v1362
    %v2823 = vunpack.c.l.b16 %v1363
    %v2824 = vunpack.c.h.b16 %v1363
    %v2825 = vunpack.c.l.b16 %v1364
    %v2826 = vunpack.c.h.b16 %v1364
    %v2827 = vunpack.c.l.b16 %v1365
    %v2828 = vunpack.c.h.b16 %v1365
    %v2829 = vunpack.c.l.b16 %v1366
    %v2830 = vunpack.c.h.b16 %v1366
    %v2831 = vunpack.c.l.b16 %v1367
    %v2832 = vunpack.c.h.b16 %v1367
    %v2833 = vunpack.c.l.b16 %v1368
    %v2834 = vunpack.c.h.b16 %v1368
    %v2835 = vunpack.c.l.b16 %v1369
    %v2836 = vunpack.c.h.b16 %v1369
    %v2837 = vunpack.c.l.b16 %v1370
    %v2838 = vunpack.c.h.b16 %v1370
    %v2839 = vunpack.c.l.b16 %v1371
    %v2840 = vunpack.c.h.b16 %v1371
    %v2841 = vunpack.c.l.b16 %v1372
    %v2842 = vunpack.c.h.b16 %v1372
    %v2843 = vunpack.c.l.b16 %v1373
    %v2844 = vunpack.c.h.b16 %v1373
    %v2845 = vunpack.c.l.b16 %v1374
    %v2846 = vunpack.c.h.b16 %v1374
    %v2847 = vunpack.c.l.b16 %v1375
    %v2848 = vunpack.c.h.b16 %v1375
    %v2849 = vunpack.c.l.b16 %v1376
    %v2850 = vunpack.c.h.b16 %v1376
    %v2851 = vunpack.c.l.b16 %v1377
    %v2852 = vunpack.c.h.b16 %v1377
    %v2853 = vunpack.c.l.b16 %v1378
    %v2854 = vunpack.c.h.b16 %v1378
    %v2855 = vunpack.c.l.b16 %v1379
    %v2856 = vunpack.c.h.b16 %v1379
    %v2857 = vunpack.c.l.b16 %v1380
    %v2858 = vunpack.c.h.b16 %v1380
    %v2859 = vunpack.c.l.b16 %v1381
    %v2860 = vunpack.c.h.b16 %v1381
    %v2861 = vunpack.c.l.b16 %v1382
    %v2862 = vunpack.c.h.b16 %v1382
    %v2863 = vunpack.c.l.b16 %v1383
    %v2864 = vunpack.c.h.b16 %v1383
    %v2865 = vunpack.c.l.b16 %v1384
    %v2866 = vunpack.c.h.b16 %v1384
    %v2867 = vunpack.c.l.b16 %v1385
    %v2868 = vunpack.c.h.b16 %v1385
    %v2869 = vunpack.c.l.b16 %v1386
    %v2870 = vunpack.c.h.b16 %v1386
    %v2871 = vunpack.c.l.b16 %v1387
    %v2872 = vunpack.c.h.b16 %v1387
    %v2873 = vunpack.c.l.b16 %v1388
    %v2874 = vunpack.c.h.b16 %v1388
    %v2875 = vunpack.c.l.b16 %v1389
    %v2876 = vunpack.c.h.b16 %v1389
    %v2877 = vunpack.c.l.b16 %v1390
    %v2878 = vunpack.c.h.b16 %v1390
    %v2879 = vunpack.c.l.b16 %v1391
    %v2880 = vunpack.c.h.b16 %v1391
    %v2881 = vunpack.c.l.b16 %v1392
    %v2882 = vunpack.c.h.b16 %v1392
    %v2883 = vunpack.c.l.b16 %v1393
    %v2884 = vunpack.c.h.b16 %v1393
    %v2885 = vunpack.c.l.b16 %v1394
    %v2886 = vunpack.c.h.b16 %v1394
    %v2887 = vunpack.c.l.b16 %v1395
    %v2888 = vunpack.c.h.b16 %v1395
    %v2889 = vunpack.c.l.b16 %v1396
    %v2890 = vunpack.c.h.b16 %v1396
    %v2891 = vunpack.c.l.b16 %v1397
    %v2892 = vunpack.c.h.b16 %v1397
    %v2893 = vunpack.c.l.b16 %v1398
    %v2894 = vunpack.c.h.b16 %v1398
    %v2895 = vunpack.c.l.b16 %v1399
    %v2896 = vunpack.c.h.b16 %v1399
    %v2897 = vunpack.c.l.b16 %v1400
    %v2898 = vunpack.c.h.b16 %v1400
    %v2899 = vunpack.c.l.b16 %v1401
    %v2900 = vunpack.c.h.b16 %v1401
    %v2901 = vunpack.c.l.b16 %v1402
    %v2902 = vunpack.c.h.b16 %v1402
    %v2903 = vunpack.c.l.b16 %v1403
    %v2904 = vunpack.c.h.b16 %v1403
    %v2905 = vunpack.c.l.b16 %v1404
    %v2906 = vunpack.c.h.b16 %v1404
    %v2907 = vunpack.c.l.b16 %v1405
    %v2908 = vunpack.c.h.b16 %v1405
    %v2909 = vunpack.c.l.b16 %v1406
    %v2910 = vunpack.c.h.b16 %v1406
    %v2911 = vunpack.c.l.b16 %v1407
    %v2912 = vunpack.c.h.b16 %v1407
    %v2913 = vunpack.c.l.b16 %v1408
    %v2914 = vunpack.c.h.b16 %v1408
    %v2915 = vunpack.c.l.b16 %v1409
    %v2916 = vunpack.c.h.b16 %v1409
    %v2917 = vunpack.c.l.b16 %v1410
    %v2918 = vunpack.c.h.b16 %v1410
    %v2919 = vunpack.c.l.b16 %v1411
    %v2920 = vunpack.c.h.b16 %v1411
    %v2921 = vunpack.c.l.b16 %v1412
    %v2922 = vunpack.c.h.b16 %v1412
    %v2923 = vunpack.c.l.b16 %v1413
    %v2924 = vunpack.c.h.b16 %v1413
    %v2925 = vunpack.c.l.b16 %v1414
    %v2926 = vunpack.c.h.b16 %v1414
    %v2927 = vunpack.c.l.b16 %v1415
    %v2928 = vunpack.c.h.b16 %v1415
    %v2929 = vunpack.c.l.b16 %v1416
    %v2930 = vunpack.c.h.b16 %v1416
    %v2931 = vunpack.c.l.b16 %v1417
    %v2932 = vunpack.c.h.b16 %v1417
    %v2933 = vunpack.c.l.b16 %v1418
    %v2934 = vunpack.c.h.b16 %v1418
    %v2935 = vunpack.c.l.b16 %v1419
    %v2936 = vunpack.c.h.b16 %v1419
    %v2937 = vunpack.c.l.b16 %v1420
    %v2938 = vunpack.c.h.b16 %v1420
    %v2939 = vunpack.c.l.b16 %v1421
    %v2940 = vunpack.c.h.b16 %v1421
    %v2941 = vunpack.c.l.b16 %v1422
    %v2942 = vunpack.c.h.b16 %v1422
    %v2943 = vunpack.c.l.b16 %v1423
    %v2944 = vunpack.c.h.b16 %v1423
    %v2945 = vunpack.c.l.b16 %v1424
    %v2946 = vunpack.c.h.b16 %v1424
    %v2947 = vunpack.c.l.b16 %v1425
    %v2948 = vunpack.c.h.b16 %v1425
    %v2949 = vunpack.c.l.b16 %v1426
    %v2950 = vunpack.c.h.b16 %v1426
    %v2951 = vunpack.c.l.b16 %v1427
    %v2952 = vunpack.c.h.b16 %v1427
    %v2953 = vunpack.c.l.b16 %v1428
    %v2954 = vunpack.c.h.b16 %v1428
    %v2955 = vunpack.c.l.b16 %v1429
    %v2956 = vunpack.c.h.b16 %v1429
    %v2957 = vunpack.c.l.b16 %v1430
    %v2958 = vunpack.c.h.b16 %v1430
    %v2959 = vunpack.c.l.b16 %v1431
    %v2960 = vunpack.c.h.b16 %v1431
    %v2961 = vunpack.c.l.b16 %v1432
    %v2962 = vunpack.c.h.b16 %v1432
    %v2963 = vunpack.c.l.b16 %v1433
    %v2964 = vunpack.c.h.b16 %v1433
    %v2965 = vunpack.c.l.b16 %v1434
    %v2966 = vunpack.c.h.b16 %v1434
    %v2967 = vunpack.c.l.b16 %v1435
    %v2968 = vunpack.c.h.b16 %v1435
    %v2969 = vunpack.c.l.b16 %v1436
    %v2970 = vunpack.c.h.b16 %v1436
    %v2971 = vunpack.c.l.b16 %v1437
    %v2972 = vunpack.c.h.b16 %v1437
    %v2973 = vunpack.c.l.b16 %v1438
    %v2974 = vunpack.c.h.b16 %v1438
    %v2975 = vunpack.c.l.b16 %v1439
    %v2976 = vunpack.c.h.b16 %v1439
    %v2977 = vunpack.c.l.b16 %v1440
    %v2978 = vunpack.c.h.b16 %v1440
    %v2979 = vunpack.c.l.b16 %v1441
    %v2980 = vunpack.c.h.b16 %v1441
    %v2981 = vunpack.c.l.b16 %v1442
    %v2982 = vunpack.c.h.b16 %v1442
    %v2983 = vunpack.c.l.b16 %v1443
    %v2984 = vunpack.c.h.b16 %v1443
    %v2985 = vunpack.c.l.b16 %v1444
    %v2986 = vunpack.c.h.b16 %v1444
    %v2987 = vunpack.c.l.b16 %v1445
    %v2988 = vunpack.c.h.b16 %v1445
    %v2989 = vunpack.c.l.b16 %v1446
    %v2990 = vunpack.c.h.b16 %v1446
    %v2991 = vunpack.c.l.b16 %v1447
    %v2992 = vunpack.c.h.b16 %v1447
    %v2993 = vunpack.c.l.b16 %v1448
    %v2994 = vunpack.c.h.b16 %v1448
    %v2995 = vunpack.c.l.b16 %v1449
    %v2996 = vunpack.c.h.b16 %v1449
    %v2997 = vunpack.c.l.b16 %v1450
    %v2998 = vunpack.c.h.b16 %v1450
    %v2999 = vunpack.c.l.b16 %v1451
    %v3000 = vunpack.c.h.b16 %v1451
    %v3001 = vunpack.c.l.b16 %v1452
    %v3002 = vunpack.c.h.b16 %v1452
    %v3003 = vunpack.c.l.b16 %v1453
    %v3004 = vunpack.c.h.b16 %v1453
    %v3005 = vunpack.c.l.b16 %v1454
    %v3006 = vunpack.c.h.b16 %v1454
    %v3007 = vunpack.c.l.b16 %v1455
    %v3008 = vunpack.c.h.b16 %v1455
    %v3009 = vunpack.c.l.b16 %v1456
    %v3010 = vunpack.c.h.b16 %v1456
    %v3011 = vunpack.c.l.b16 %v1457
    %v3012 = vunpack.c.h.b16 %v1457
    %v3013 = vunpack.c.l.b16 %v1458
    %v3014 = vunpack.c.h.b16 %v1458
    %v3015 = vunpack.c.l.b16 %v1459
    %v3016 = vunpack.c.h.b16 %v1459
    %v3017 = vunpack.c.l.b16 %v1460
    %v3018 = vunpack.c.h.b16 %v1460
    %v3019 = vpack.c.b16 %v1999, %v1995
    %v3020 = vpack.c.b16 %v2000, %v1996
    %v3021 = vpack.c.b16 %v2001, %v1997
    %v3022 = vpack.c.b16 %v2002, %v1998
    %v3023 = vpack.c.b16 %v2007, %v2003
    %v3024 = vpack.c.b16 %v2008, %v2004
    %v3025 = vpack.c.b16 %v2009, %v2005
    %v3026 = vpack.c.b16 %v2010, %v2006
    %v3027 = vpack.c.b16 %v2015, %v2011
    %v3028 = vpack.c.b16 %v2016, %v2012
    %v3029 = vpack.c.b16 %v2017, %v2013
    %v3030 = vpack.c.b16 %v2018, %v2014
    %v3031 = vpack.c.b16 %v2023, %v2019
    %v3032 = vpack.c.b16 %v2024, %v2020
    %v3033 = vpack.c.b16 %v2025, %v2021
    %v3034 = vpack.c.b16 %v2026, %v2022
    %v3035 = vpack.c.b16 %v2031, %v2027
    %v3036 = vpack.c.b16 %v2032, %v2028
    %v3037 = vpack.c.b16 %v2033, %v2029
    %v3038 = vpack.c.b16 %v2034, %v2030
    %v3039 = vpack.c.b16 %v2039, %v2035
    %v3040 = vpack.c.b16 %v2040, %v2036
    %v3041 = vpack.c.b16 %v2041, %v2037
    %v3042 = vpack.c.b16 %v2042, %v2038
    %v3043 = vpack.c.b16 %v2047, %v2043
    %v3044 = vpack.c.b16 %v2048, %v2044
    %v3045 = vpack.c.b16 %v2049, %v2045
    %v3046 = vpack.c.b16 %v2050, %v2046
    %v3047 = vpack.c.b16 %v2055, %v2051
    %v3048 = vpack.c.b16 %v2056, %v2052
    %v3049 = vpack.c.b16 %v2057, %v2053
    %v3050 = vpack.c.b16 %v2058, %v2054
    %v3051 = vpack.c.b16 %v2063, %v2059
    %v3052 = vpack.c.b16 %v2064, %v2060
    %v3053 = vpack.c.b16 %v2065, %v2061
    %v3054 = vpack.c.b16 %v2066, %v2062
    %v3055 = vpack.c.b16 %v2071, %v2067
    %v3056 = vpack.c.b16 %v2072, %v2068
    %v3057 = vpack.c.b16 %v2073, %v2069
    %v3058 = vpack.c.b16 %v2074, %v2070
    %v3059 = vpack.c.b16 %v2079, %v2075
    %v3060 = vpack.c.b16 %v2080, %v2076
    %v3061 = vpack.c.b16 %v2081, %v2077
    %v3062 = vpack.c.b16 %v2082, %v2078
    %v3063 = vpack.c.b16 %v2087, %v2083
    %v3064 = vpack.c.b16 %v2088, %v2084
    %v3065 = vpack.c.b16 %v2089, %v2085
    %v3066 = vpack.c.b16 %v2090, %v2086
    %v3067 = vpack.c.b16 %v2095, %v2091
    %v3068 = vpack.c.b16 %v2096, %v2092
    %v3069 = vpack.c.b16 %v2097, %v2093
    %v3070 = vpack.c.b16 %v2098, %v2094
    %v3071 = vpack.c.b16 %v2103, %v2099
    %v3072 = vpack.c.b16 %v2104, %v2100
    %v3073 = vpack.c.b16 %v2105, %v2101
    %v3074 = vpack.c.b16 %v2106, %v2102
    %v3075 = vpack.c.b16 %v2111, %v2107
    %v3076 = vpack.c.b16 %v2112, %v2108
    %v3077 = vpack.c.b16 %v2113, %v2109
    %v3078 = vpack.c.b16 %v2114, %v2110
    %v3079 = vpack.c.b16 %v2119, %v2115
    %v3080 = vpack.c.b16 %v2120, %v2116
    %v3081 = vpack.c.b16 %v2121, %v2117
    %v3082 = vpack.c.b16 %v2122, %v2118
    %v3083 = vpack.c.b16 %v2127, %v2123
    %v3084 = vpack.c.b16 %v2128, %v2124
    %v3085 = vpack.c.b16 %v2129, %v2125
    %v3086 = vpack.c.b16 %v2130, %v2126
    %v3087 = vpack.c.b16 %v2135, %v2131
    %v3088 = vpack.c.b16 %v2136, %v2132
    %v3089 = vpack.c.b16 %v2137, %v2133
    %v3090 = vpack.c.b16 %v2138, %v2134
    %v3091 = vpack.c.b16 %v2143, %v2139
    %v3092 = vpack.c.b16 %v2144, %v2140
    %v3093 = vpack.c.b16 %v2145, %v2141
    %v3094 = vpack.c.b16 %v2146, %v2142
    %v3095 = vpack.c.b16 %v2151, %v2147
    %v3096 = vpack.c.b16 %v2152, %v2148
    %v3097 = vpack.c.b16 %v2153, %v2149
    %v3098 = vpack.c.b16 %v2154, %v2150
    %v3099 = vpack.c.b16 %v2159, %v2155
    %v3100 = vpack.c.b16 %v2160, %v2156
    %v3101 = vpack.c.b16 %v2161, %v2157
    %v3102 = vpack.c.b16 %v2162, %v2158
    %v3103 = vpack.c.b16 %v2167, %v2163
    %v3104 = vpack.c.b16 %v2168, %v2164
    %v3105 = vpack.c.b16 %v2169, %v2165
    %v3106 = vpack.c.b16 %v2170, %v2166
    %v3107 = vpack.c.b16 %v2175, %v2171
    %v3108 = vpack.c.b16 %v2176, %v2172
    %v3109 = vpack.c.b16 %v2177, %v2173
    %v3110 = vpack.c.b16 %v2178, %v2174
    %v3111 = vpack.c.b16 %v2183, %v2179
    %v3112 = vpack.c.b16 %v2184, %v2180
    %v3113 = vpack.c.b16 %v2185, %v2181
    %v3114 = vpack.c.b16 %v2186, %v2182
    %v3115 = vpack.c.b16 %v2191, %v2187
    %v3116 = vpack.c.b16 %v2192, %v2188
    %v3117 = vpack.c.b16 %v2193, %v2189
    %v3118 = vpack.c.b16 %v2194, %v2190
    %v3119 = vpack.c.b16 %v2199, %v2195
    %v3120 = vpack.c.b16 %v2200, %v2196
    %v3121 = vpack.c.b16 %v2201, %v2197
    %v3122 = vpack.c.b16 %v2202, %v2198
    %v3123 = vpack.c.b16 %v2207, %v2203
    %v3124 = vpack.c.b16 %v2208, %v2204
    %v3125 = vpack.c.b16 %v2209, %v2205
    %v3126 = vpack.c.b16 %v2210, %v2206
    %v3127 = vpack.c.b16 %v2215, %v2211
    %v3128 = vpack.c.b16 %v2216, %v2212
    %v3129 = vpack.c.b16 %v2217, %v2213
    %v3130 = vpack.c.b16 %v2218, %v2214
    %v3131 = vpack.c.b16 %v2223, %v2219
    %v3132 = vpack.c.b16 %v2224, %v2220
    %v3133 = vpack.c.b16 %v2225, %v2221
    %v3134 = vpack.c.b16 %v2226, %v2222
    %v3135 = vpack.c.b16 %v2231, %v2227
    %v3136 = vpack.c.b16 %v2232, %v2228
    %v3137 = vpack.c.b16 %v2233, %v2229
    %v3138 = vpack.c.b16 %v2234, %v2230
    %v3139 = vpack.c.b16 %v2239, %v2235
    %v3140 = vpack.c.b16 %v2240, %v2236
    %v3141 = vpack.c.b16 %v2241, %v2237
    %v3142 = vpack.c.b16 %v2242, %v2238
    %v3143 = vpack.c.b16 %v2247, %v2243
    %v3144 = vpack.c.b16 %v2248, %v2244
    %v3145 = vpack.c.b16 %v2249, %v2245
    %v3146 = vpack.c.b16 %v2250, %v2246
    %v3147 = vpack.c.b16 %v2255, %v2251
    %v3148 = vpack.c.b16 %v2256, %v2252
    %v3149 = vpack.c.b16 %v2257, %v2253
    %v3150 = vpack.c.b16 %v2258, %v2254
    %v3151 = vpack.c.b16 %v2263, %v2259
    %v3152 = vpack.c.b16 %v2264, %v2260
    %v3153 = vpack.c.b16 %v2265, %v2261
    %v3154 = vpack.c.b16 %v2266, %v2262
    %v3155 = vpack.c.b16 %v2271, %v2267
    %v3156 = vpack.c.b16 %v2272, %v2268
    %v3157 = vpack.c.b16 %v2273, %v2269
    %v3158 = vpack.c.b16 %v2274, %v2270
    %v3159 = vpack.c.b16 %v2279, %v2275
    %v3160 = vpack.c.b16 %v2280, %v2276
    %v3161 = vpack.c.b16 %v2281, %v2277
    %v3162 = vpack.c.b16 %v2282, %v2278
    %v3163 = vpack.c.b16 %v2287, %v2283
    %v3164 = vpack.c.b16 %v2288, %v2284
    %v3165 = vpack.c.b16 %v2289, %v2285
    %v3166 = vpack.c.b16 %v2290, %v2286
    %v3167 = vpack.c.b16 %v2295, %v2291
    %v3168 = vpack.c.b16 %v2296, %v2292
    %v3169 = vpack.c.b16 %v2297, %v2293
    %v3170 = vpack.c.b16 %v2298, %v2294
    %v3171 = vpack.c.b16 %v2303, %v2299
    %v3172 = vpack.c.b16 %v2304, %v2300
    %v3173 = vpack.c.b16 %v2305, %v2301
    %v3174 = vpack.c.b16 %v2306, %v2302
    %v3175 = vpack.c.b16 %v2311, %v2307
    %v3176 = vpack.c.b16 %v2312, %v2308
    %v3177 = vpack.c.b16 %v2313, %v2309
    %v3178 = vpack.c.b16 %v2314, %v2310
    %v3179 = vpack.c.b16 %v2319, %v2315
    %v3180 = vpack.c.b16 %v2320, %v2316
    %v3181 = vpack.c.b16 %v2321, %v2317
    %v3182 = vpack.c.b16 %v2322, %v2318
    %v3183 = vpack.c.b16 %v2327, %v2323
    %v3184 = vpack.c.b16 %v2328, %v2324
    %v3185 = vpack.c.b16 %v2329, %v2325
    %v3186 = vpack.c.b16 %v2330, %v2326
    %v3187 = vpack.c.b16 %v2335, %v2331
    %v3188 = vpack.c.b16 %v2336, %v2332
    %v3189 = vpack.c.b16 %v2337, %v2333
    %v3190 = vpack.c.b16 %v2338, %v2334
    %v3191 = vpack.c.b16 %v2343, %v2339
    %v3192 = vpack.c.b16 %v2344, %v2340
    %v3193 = vpack.c.b16 %v2345, %v2341
    %v3194 = vpack.c.b16 %v2346, %v2342
    %v3195 = vpack.c.b16 %v2351, %v2347
    %v3196 = vpack.c.b16 %v2352, %v2348
    %v3197 = vpack.c.b16 %v2353, %v2349
    %v3198 = vpack.c.b16 %v2354, %v2350
    %v3199 = vpack.c.b16 %v2359, %v2355
    %v3200 = vpack.c.b16 %v2360, %v2356
    %v3201 = vpack.c.b16 %v2361, %v2357
    %v3202 = vpack.c.b16 %v2362, %v2358
    %v3203 = vpack.c.b16 %v2367, %v2363
    %v3204 = vpack.c.b16 %v2368, %v2364
    %v3205 = vpack.c.b16 %v2369, %v2365
    %v3206 = vpack.c.b16 %v2370, %v2366
    %v3207 = vpack.c.b16 %v2375, %v2371
    %v3208 = vpack.c.b16 %v2376, %v2372
    %v3209 = vpack.c.b16 %v2377, %v2373
    %v3210 = vpack.c.b16 %v2378, %v2374
    %v3211 = vpack.c.b16 %v2383, %v2379
    %v3212 = vpack.c.b16 %v2384, %v2380
    %v3213 = vpack.c.b16 %v2385, %v2381
    %v3214 = vpack.c.b16 %v2386, %v2382
    %v3215 = vpack.c.b16 %v2391, %v2387
    %v3216 = vpack.c.b16 %v2392, %v2388
    %v3217 = vpack.c.b16 %v2393, %v2389
    %v3218 = vpack.c.b16 %v2394, %v2390
    %v3219 = vpack.c.b16 %v2399, %v2395
    %v3220 = vpack.c.b16 %v2400, %v2396
    %v3221 = vpack.c.b16 %v2401, %v2397
    %v3222 = vpack.c.b16 %v2402, %v2398
    %v3223 = vpack.c.b16 %v2407, %v2403
    %v3224 = vpack.c.b16 %v2408, %v2404
    %v3225 = vpack.c.b16 %v2409, %v2405
    %v3226 = vpack.c.b16 %v2410, %v2406
    %v3227 = vpack.c.b16 %v2415, %v2411
    %v3228 = vpack.c.b16 %v2416, %v2412
    %v3229 = vpack.c.b16 %v2417, %v2413
    %v3230 = vpack.c.b16 %v2418, %v2414
    %v3231 = vpack.c.b16 %v2423, %v2419
    %v3232 = vpack.c.b16 %v2424, %v2420
    %v3233 = vpack.c.b16 %v2425, %v2421
    %v3234 = vpack.c.b16 %v2426, %v2422
    %v3235 = vpack.c.b16 %v2431, %v2427
    %v3236 = vpack.c.b16 %v2432, %v2428
    %v3237 = vpack.c.b16 %v2433, %v2429
    %v3238 = vpack.c.b16 %v2434, %v2430
    %v3239 = vpack.c.b16 %v2439, %v2435
    %v3240 = vpack.c.b16 %v2440, %v2436
    %v3241 = vpack.c.b16 %v2441, %v2437
    %v3242 = vpack.c.b16 %v2442, %v2438
    %v3243 = vpack.c.b16 %v2447, %v2443
    %v3244 = vpack.c.b16 %v2448, %v2444
    %v3245 = vpack.c.b16 %v2449, %v2445
    %v3246 = vpack.c.b16 %v2450, %v2446
    %v3247 = vpack.c.b16 %v2455, %v2451
    %v3248 = vpack.c.b16 %v2456, %v2452
    %v3249 = vpack.c.b16 %v2457, %v2453
    %v3250 = vpack.c.b16 %v2458, %v2454
    %v3251 = vpack.c.b16 %v2463, %v2459
    %v3252 = vpack.c.b16 %v2464, %v2460
    %v3253 = vpack.c.b16 %v2465, %v2461
    %v3254 = vpack.c.b16 %v2466, %v2462
    %v3255 = vpack.c.b16 %v2471, %v2467
    %v3256 = vpack.c.b16 %v2472, %v2468
    %v3257 = vpack.c.b16 %v2473, %v2469
    %v3258 = vpack.c.b16 %v2474, %v2470
    %v3259 = vpack.c.b16 %v2479, %v2475
    %v3260 = vpack.c.b16 %v2480, %v2476
    %v3261 = vpack.c.b16 %v2481, %v2477
    %v3262 = vpack.c.b16 %v2482, %v2478
    %v3263 = vpack.c.b16 %v2487, %v2483
    %v3264 = vpack.c.b16 %v2488, %v2484
    %v3265 = vpack.c.b16 %v2489, %v2485
    %v3266 = vpack.c.b16 %v2490, %v2486
    %v3267 = vpack.c.b16 %v2495, %v2491
    %v3268 = vpack.c.b16 %v2496, %v2492
    %v3269 = vpack.c.b16 %v2497, %v2493
    %v3270 = vpack.c.b16 %v2498, %v2494
    %v3271 = vpack.c.b16 %v2503, %v2499
    %v3272 = vpack.c.b16 %v2504, %v2500
    %v3273 = vpack.c.b16 %v2505, %v2501
    %v3274 = vpack.c.b16 %v2506, %v2502
    %v3275 = vpack.c.b16 %v2511, %v2507
    %v3276 = vpack.c.b16 %v2512, %v2508
    %v3277 = vpack.c.b16 %v2513, %v2509
    %v3278 = vpack.c.b16 %v2514, %v2510
    %v3279 = vpack.c.b16 %v2519, %v2515
    %v3280 = vpack.c.b16 %v2520, %v2516
    %v3281 = vpack.c.b16 %v2521, %v2517
    %v3282 = vpack.c.b16 %v2522, %v2518
    %v3283 = vpack.c.b16 %v2527, %v2523
    %v3284 = vpack.c.b16 %v2528, %v2524
    %v3285 = vpack.c.b16 %v2529, %v2525
    %v3286 = vpack.c.b16 %v2530, %v2526
    %v3287 = vpack.c.b16 %v2535, %v2531
    %v3288 = vpack.c.b16 %v2536, %v2532
    %v3289 = vpack.c.b16 %v2537, %v2533
    %v3290 = vpack.c.b16 %v2538, %v2534
    %v3291 = vpack.c.b16 %v2543, %v2539
    %v3292 = vpack.c.b16 %v2544, %v2540
    %v3293 = vpack.c.b16 %v2545, %v2541
    %v3294 = vpack.c.b16 %v2546, %v2542
    %v3295 = vpack.c.b16 %v2551, %v2547
    %v3296 = vpack.c.b16 %v2552, %v2548
    %v3297 = vpack.c.b16 %v2553, %v2549
    %v3298 = vpack.c.b16 %v2554, %v2550
    %v3299 = vpack.c.b16 %v2559, %v2555
    %v3300 = vpack.c.b16 %v2560, %v2556
    %v3301 = vpack.c.b16 %v2561, %v2557
    %v3302 = vpack.c.b16 %v2562, %v2558
    %v3303 = vpack.c.b16 %v2567, %v2563
    %v3304 = vpack.c.b16 %v2568, %v2564
    %v3305 = vpack.c.b16 %v2569, %v2565
    %v3306 = vpack.c.b16 %v2570, %v2566
    %v3307 = vpack.c.b16 %v2575, %v2571
    %v3308 = vpack.c.b16 %v2576, %v2572
    %v3309 = vpack.c.b16 %v2577, %v2573
    %v3310 = vpack.c.b16 %v2578, %v2574
    %v3311 = vpack.c.b16 %v2583, %v2579
    %v3312 = vpack.c.b16 %v2584, %v2580
    %v3313 = vpack.c.b16 %v2585, %v2581
    %v3314 = vpack.c.b16 %v2586, %v2582
    %v3315 = vpack.c.b16 %v2591, %v2587
    %v3316 = vpack.c.b16 %v2592, %v2588
    %v3317 = vpack.c.b16 %v2593, %v2589
    %v3318 = vpack.c.b16 %v2594, %v2590
    %v3319 = vpack.c.b16 %v2599, %v2595
    %v3320 = vpack.c.b16 %v2600, %v2596
    %v3321 = vpack.c.b16 %v2601, %v2597
    %v3322 = vpack.c.b16 %v2602, %v2598
    %v3323 = vpack.c.b16 %v2607, %v2603
    %v3324 = vpack.c.b16 %v2608, %v2604
    %v3325 = vpack.c.b16 %v2609, %v2605
    %v3326 = vpack.c.b16 %v2610, %v2606
    %v3327 = vpack.c.b16 %v2615, %v2611
    %v3328 = vpack.c.b16 %v2616, %v2612
    %v3329 = vpack.c.b16 %v2617, %v2613
    %v3330 = vpack.c.b16 %v2618, %v2614
    %v3331 = vpack.c.b16 %v2623, %v2619
    %v3332 = vpack.c.b16 %v2624, %v2620
    %v3333 = vpack.c.b16 %v2625, %v2621
    %v3334 = vpack.c.b16 %v2626, %v2622
    %v3335 = vpack.c.b16 %v2631, %v2627
    %v3336 = vpack.c.b16 %v2632, %v2628
    %v3337 = vpack.c.b16 %v2633, %v2629
    %v3338 = vpack.c.b16 %v2634, %v2630
    %v3339 = vpack.c.b16 %v2639, %v2635
    %v3340 = vpack.c.b16 %v2640, %v2636
    %v3341 = vpack.c.b16 %v2641, %v2637
    %v3342 = vpack.c.b16 %v2642, %v2638
    %v3343 = vpack.c.b16 %v2647, %v2643
    %v3344 = vpack.c.b16 %v2648, %v2644
    %v3345 = vpack.c.b16 %v2649, %v2645
    %v3346 = vpack.c.b16 %v2650, %v2646
    %v3347 = vpack.c.b16 %v2655, %v2651
    %v3348 = vpack.c.b16 %v2656, %v2652
    %v3349 = vpack.c.b16 %v2657, %v2653
    %v3350 = vpack.c.b16 %v2658, %v2654
    %v3351 = vpack.c.b16 %v2663, %v2659
    %v3352 = vpack.c.b16 %v2664, %v2660
    %v3353 = vpack.c.b16 %v2665, %v2661
    %v3354 = vpack.c.b16 %v2666, %v2662
    %v3355 = vpack.c.b16 %v2671, %v2667
    %v3356 = vpack.c.b16 %v2672, %v2668
    %v3357 = vpack.c.b16 %v2673, %v2669
    %v3358 = vpack.c.b16 %v2674, %v2670
    %v3359 = vpack.c.b16 %v2679, %v2675
    %v3360 = vpack.c.b16 %v2680, %v2676
    %v3361 = vpack.c.b16 %v2681, %v2677
    %v3362 = vpack.c.b16 %v2682, %v2678
    %v3363 = vpack.c.b16 %v2687, %v2683
    %v3364 = vpack.c.b16 %v2688, %v2684
    %v3365 = vpack.c.b16 %v2689, %v2685
    %v3366 = vpack.c.b16 %v2690, %v2686
    %v3367 = vpack.c.b16 %v2695, %v2691
    %v3368 = vpack.c.b16 %v2696, %v2692
    %v3369 = vpack.c.b16 %v2697, %v2693
    %v3370 = vpack.c.b16 %v2698, %v2694
    %v3371 = vpack.c.b16 %v2703, %v2699
    %v3372 = vpack.c.b16 %v2704, %v2700
    %v3373 = vpack.c.b16 %v2705, %v2701
    %v3374 = vpack.c.b16 %v2706, %v2702
    %v3375 = vpack.c.b16 %v2711, %v2707
    %v3376 = vpack.c.b16 %v2712, %v2708
    %v3377 = vpack.c.b16 %v2713, %v2709
    %v3378 = vpack.c.b16 %v2714, %v2710
    %v3379 = vpack.c.b16 %v2719, %v2715
    %v3380 = vpack.c.b16 %v2720, %v2716
    %v3381 = vpack.c.b16 %v2721, %v2717
    %v3382 = vpack.c.b16 %v2722, %v2718
    %v3383 = vpack.c.b16 %v2727, %v2723
    %v3384 = vpack.c.b16 %v2728, %v2724
    %v3385 = vpack.c.b16 %v2729, %v2725
    %v3386 = vpack.c.b16 %v2730, %v2726
    %v3387 = vpack.c.b16 %v2735, %v2731
    %v3388 = vpack.c.b16 %v2736, %v2732
    %v3389 = vpack.c.b16 %v2737, %v2733
    %v3390 = vpack.c.b16 %v2738, %v2734
    %v3391 = vpack.c.b16 %v2743, %v2739
    %v3392 = vpack.c.b16 %v2744, %v2740
    %v3393 = vpack.c.b16 %v2745, %v2741
    %v3394 = vpack.c.b16 %v2746, %v2742
    %v3395 = vpack.c.b16 %v2751, %v2747
    %v3396 = vpack.c.b16 %v2752, %v2748
    %v3397 = vpack.c.b16 %v2753, %v2749
    %v3398 = vpack.c.b16 %v2754, %v2750
    %v3399 = vpack.c.b16 %v2759, %v2755
    %v3400 = vpack.c.b16 %v2760, %v2756
    %v3401 = vpack.c.b16 %v2761, %v2757
    %v3402 = vpack.c.b16 %v2762, %v2758
    %v3403 = vpack.c.b16 %v2767, %v2763
    %v3404 = vpack.c.b16 %v2768, %v2764
    %v3405 = vpack.c.b16 %v2769, %v2765
    %v3406 = vpack.c.b16 %v2770, %v2766
    %v3407 = vpack.c.b16 %v2775, %v2771
    %v3408 = vpack.c.b16 %v2776, %v2772
    %v3409 = vpack.c.b16 %v2777, %v2773
    %v3410 = vpack.c.b16 %v2778, %v2774
    %v3411 = vpack.c.b16 %v2783, %v2779
    %v3412 = vpack.c.b16 %v2784, %v2780
    %v3413 = vpack.c.b16 %v2785, %v2781
    %v3414 = vpack.c.b16 %v2786, %v2782
    %v3415 = vpack.c.b16 %v2791, %v2787
    %v3416 = vpack.c.b16 %v2792, %v2788
    %v3417 = vpack.c.b16 %v2793, %v2789
    %v3418 = vpack.c.b16 %v2794, %v2790
    %v3419 = vpack.c.b16 %v2799, %v2795
    %v3420 = vpack.c.b16 %v2800, %v2796
    %v3421 = vpack.c.b16 %v2801, %v2797
    %v3422 = vpack.c.b16 %v2802, %v2798
    %v3423 = vpack.c.b16 %v2807, %v2803
    %v3424 = vpack.c.b16 %v2808, %v2804
    %v3425 = vpack.c.b16 %v2809, %v2805
    %v3426 = vpack.c.b16 %v2810, %v2806
    %v3427 = vpack.c.b16 %v2815, %v2811
    %v3428 = vpack.c.b16 %v2816, %v2812
    %v3429 = vpack.c.b16 %v2817, %v2813
    %v3430 = vpack.c.b16 %v2818, %v2814
    %v3431 = vpack.c.b16 %v2823, %v2819
    %v3432 = vpack.c.b16 %v2824, %v2820
    %v3433 = vpack.c.b16 %v2825, %v2821
    %v3434 = vpack.c.b16 %v2826, %v2822
    %v3435 = vpack.c.b16 %v2831, %v2827
    %v3436 = vpack.c.b16 %v2832, %v2828
    %v3437 = vpack.c.b16 %v2833, %v2829
    %v3438 = vpack.c.b16 %v2834, %v2830
    %v3439 = vpack.c.b16 %v2839, %v2835
    %v3440 = vpack.c.b16 %v2840, %v2836
    %v3441 = vpack.c.b16 %v2841, %v2837
    %v3442 = vpack.c.b16 %v2842, %v2838
    %v3443 = vpack.c.b16 %v2847, %v2843
    %v3444 = vpack.c.b16 %v2848, %v2844
    %v3445 = vpack.c.b16 %v2849, %v2845
    %v3446 = vpack.c.b16 %v2850, %v2846
    %v3447 = vpack.c.b16 %v2855, %v2851
    %v3448 = vpack.c.b16 %v2856, %v2852
    %v3449 = vpack.c.b16 %v2857, %v2853
    %v3450 = vpack.c.b16 %v2858, %v2854
    %v3451 = vpack.c.b16 %v2863, %v2859
    %v3452 = vpack.c.b16 %v2864, %v2860
    %v3453 = vpack.c.b16 %v2865, %v2861
    %v3454 = vpack.c.b16 %v2866, %v2862
    %v3455 = vpack.c.b16 %v2871, %v2867
    %v3456 = vpack.c.b16 %v2872, %v2868
    %v3457 = vpack.c.b16 %v2873, %v2869
    %v3458 = vpack.c.b16 %v2874, %v2870
    %v3459 = vpack.c.b16 %v2879, %v2875
    %v3460 = vpack.c.b16 %v2880, %v2876
    %v3461 = vpack.c.b16 %v2881, %v2877
    %v3462 = vpack.c.b16 %v2882, %v2878
    %v3463 = vpack.c.b16 %v2887, %v2883
    %v3464 = vpack.c.b16 %v2888, %v2884
    %v3465 = vpack.c.b16 %v2889, %v2885
    %v3466 = vpack.c.b16 %v2890, %v2886
    %v3467 = vpack.c.b16 %v2895, %v2891
    %v3468 = vpack.c.b16 %v2896, %v2892
    %v3469 = vpack.c.b16 %v2897, %v2893
    %v3470 = vpack.c.b16 %v2898, %v2894
    %v3471 = vpack.c.b16 %v2903, %v2899
    %v3472 = vpack.c.b16 %v2904, %v2900
    %v3473 = vpack.c.b16 %v2905, %v2901
    %v3474 = vpack.c.b16 %v2906, %v2902
    %v3475 = vpack.c.b16 %v2911, %v2907
    %v3476 = vpack.c.b16 %v2912, %v2908
    %v3477 = vpack.c.b16 %v2913, %v2909
    %v3478 = vpack.c.b16 %v2914, %v2910
    %v3479 = vpack.c.b16 %v2919, %v2915
    %v3480 = vpack.c.b16 %v2920, %v2916
    %v3481 = vpack.c.b16 %v2921, %v2917
    %v3482 = vpack.c.b16 %v2922, %v2918
    %v3483 = vpack.c.b16 %v2927, %v2923
    %v3484 = vpack.c.b16 %v2928, %v2924
    %v3485 = vpack.c.b16 %v2929, %v2925
    %v3486 = vpack.c.b16 %v2930, %v2926
    %v3487 = vpack.c.b16 %v2935, %v2931
    %v3488 = vpack.c.b16 %v2936, %v2932
    %v3489 = vpack.c.b16 %v2937, %v2933
    %v3490 = vpack.c.b16 %v2938, %v2934
    %v3491 = vpack.c.b16 %v2943, %v2939
    %v3492 = vpack.c.b16 %v2944, %v2940
    %v3493 = vpack.c.b16 %v2945, %v2941
    %v3494 = vpack.c.b16 %v2946, %v2942
    %v3495 = vpack.c.b16 %v2951, %v2947
    %v3496 = vpack.c.b16 %v2952, %v2948
    %v3497 = vpack.c.b16 %v2953, %v2949
    %v3498 = vpack.c.b16 %v2954, %v2950
    %v3499 = vpack.c.b16 %v2959, %v2955
    %v3500 = vpack.c.b16 %v2960, %v2956
    %v3501 = vpack.c.b16 %v2961, %v2957
    %v3502 = vpack.c.b16 %v2962, %v2958
    %v3503 = vpack.c.b16 %v2967, %v2963
    %v3504 = vpack.c.b16 %v2968, %v2964
    %v3505 = vpack.c.b16 %v2969, %v2965
    %v3506 = vpack.c.b16 %v2970, %v2966
    %v3507 = vpack.c.b16 %v2975, %v2971
    %v3508 = vpack.c.b16 %v2976, %v2972
    %v3509 = vpack.c.b16 %v2977, %v2973
    %v3510 = vpack.c.b16 %v2978, %v2974
    %v3511 = vpack.c.b16 %v2983, %v2979
    %v3512 = vpack.c.b16 %v2984, %v2980
    %v3513 = vpack.c.b16 %v2985, %v2981
    %v3514 = vpack.c.b16 %v2986, %v2982
    %v3515 = vpack.c.b16 %v2991, %v2987
    %v3516 = vpack.c.b16 %v2992, %v2988
    %v3517 = vpack.c.b16 %v2993, %v2989
    %v3518 = vpack.c.b16 %v2994, %v2990
    %v3519 = vpack.c.b16 %v2999, %v2995
    %v3520 = vpack.c.b16 %v3000, %v2996
    %v3521 = vpack.c.b16 %v3001, %v2997
    %v3522 = vpack.c.b16 %v3002, %v2998
    %v3523 = vpack.c.b16 %v3007, %v3003
    %v3524 = vpack.c.b16 %v3008, %v3004
    %v3525 = vpack.c.b16 %v3009, %v3005
    %v3526 = vpack.c.b16 %v3010, %v3006
    %v3527 = vpack.c.b16 %v3015, %v3011
    %v3528 = vpack.c.b16 %v3016, %v3012
    %v3529 = vpack.c.b16 %v3017, %v3013
    %v3530 = vpack.c.b16 %v3018, %v3014
    %4043 = vmatprep.subr.bf16.mxu0 %v3020
    %4044 = vmatpush1.bf16.msra.mxu0 %v3019
    %4045 = vmatprep.subr.bf16.mxu0 %v3024
    %4046 = vmatpush1.bf16.msra.mxu0 %v3023
    %4047 = vmatprep.subr.bf16.mxu0 %v3028
    %4048 = vmatpush1.bf16.msra.mxu0 %v3027
    %4049 = vmatprep.subr.bf16.mxu0 %v3032
    %4050 = vmatpush1.bf16.msra.mxu0 %v3031
    %4051 = vmatprep.subr.bf16.mxu0 %v3036
    %4052 = vmatpush1.bf16.msra.mxu0 %v3035
    %4053 = vmatprep.subr.bf16.mxu0 %v3040
    %4054 = vmatpush1.bf16.msra.mxu0 %v3039
    %4055 = vmatprep.subr.bf16.mxu0 %v3044
    %4056 = vmatpush1.bf16.msra.mxu0 %v3043
    %4057 = vmatprep.subr.bf16.mxu0 %v3048
    %4058 = vmatpush1.bf16.msra.mxu0 %v3047
    %4059 = vmatprep.subr.bf16.mxu0 %v3052
    %4060 = vmatpush1.bf16.msra.mxu0 %v3051
    %4061 = vmatprep.subr.bf16.mxu0 %v3056
    %4062 = vmatpush1.bf16.msra.mxu0 %v3055
    %4063 = vmatprep.subr.bf16.mxu0 %v3060
    %4064 = vmatpush1.bf16.msra.mxu0 %v3059
    %4065 = vmatprep.subr.bf16.mxu0 %v3064
    %4066 = vmatpush1.bf16.msra.mxu0 %v3063
    %4067 = vmatprep.subr.bf16.mxu0 %v3068
    %4068 = vmatpush1.bf16.msra.mxu0 %v3067
    %4069 = vmatprep.subr.bf16.mxu0 %v3072
    %4070 = vmatpush1.bf16.msra.mxu0 %v3071
    %4071 = vmatprep.subr.bf16.mxu0 %v3076
    %4072 = vmatpush1.bf16.msra.mxu0 %v3075
    %4073 = vmatprep.subr.bf16.mxu0 %v3080
    %4074 = vmatpush1.bf16.msra.mxu0 %v3079
    %4075 = vmatprep.mubr.bf16.mxu0 %v934
    %4076 = vmatmul.mubr.bf16.gmra.mrb[0].mxu0 %v933
    %v4077 = vpop.f32.mrb[0].mxu0
    %v4078 = vadd.f32 %v1466, %v4077
    %v4079 = vpop.f32.mrb[0].mxu0
    %v4080 = vadd.f32 %v1470, %v4079
    %v4081 = vpop.f32.mrb[0].mxu0
    %v4082 = vpop.f32.mrb[0].mxu0
    %4083 = vdwg.mxu0
    %4084 = vmatprep.subr.bf16.mxu0 %v3084
    %4085 = vmatpush1.bf16.msra.mxu0 %v3083
    %4086 = vmatprep.subr.bf16.mxu0 %v3088
    %4087 = vmatpush1.bf16.msra.mxu0 %v3087
    %4088 = vmatprep.subr.bf16.mxu0 %v3092
    %4089 = vmatpush1.bf16.msra.mxu0 %v3091
    %4090 = vmatprep.subr.bf16.mxu0 %v3096
    %4091 = vmatpush1.bf16.msra.mxu0 %v3095
    %4092 = vmatprep.subr.bf16.mxu0 %v3100
    %4093 = vmatpush1.bf16.msra.mxu0 %v3099
    %4094 = vmatprep.subr.bf16.mxu0 %v3104
    %4095 = vmatpush1.bf16.msra.mxu0 %v3103
    %4096 = vmatprep.subr.bf16.mxu0 %v3108
    %4097 = vmatpush1.bf16.msra.mxu0 %v3107
    %4098 = vmatprep.subr.bf16.mxu0 %v3112
    %4099 = vmatpush1.bf16.msra.mxu0 %v3111
    %4100 = vmatprep.subr.bf16.mxu0 %v3116
    %4101 = vmatpush1.bf16.msra.mxu0 %v3115
    %4102 = vmatprep.subr.bf16.mxu0 %v3120
    %4103 = vmatpush1.bf16.msra.mxu0 %v3119
    %4104 = vmatprep.subr.bf16.mxu0 %v3124
    %4105 = vmatpush1.bf16.msra.mxu0 %v3123
    %4106 = vmatprep.subr.bf16.mxu0 %v3128
    %4107 = vmatpush1.bf16.msra.mxu0 %v3127
    %4108 = vmatprep.subr.bf16.mxu0 %v3132
    %4109 = vmatpush1.bf16.msra.mxu0 %v3131
    %4110 = vmatprep.subr.bf16.mxu0 %v3136
    %4111 = vmatpush1.bf16.msra.mxu0 %v3135
    %4112 = vmatprep.subr.bf16.mxu0 %v3140
    %4113 = vmatpush1.bf16.msra.mxu0 %v3139
    %4114 = vmatprep.subr.bf16.mxu0 %v3144
    %4115 = vmatpush1.bf16.msra.mxu0 %v3143
    %4116 = vmatprep.mubr.bf16.mxu0 %v936
    %4117 = vmatmul.mubr.bf16.gmra.mrb[0].mxu0 %v935
    %v4118 = vpop.f32.mrb[0].mxu0
    %v4119 = vadd.f32 %v4078, %v4118
    %v4120 = vpop.f32.mrb[0].mxu0
    %v4121 = vadd.f32 %v4080, %v4120
    %v4122 = vpop.f32.mrb[0].mxu0
    %v4123 = vpop.f32.mrb[0].mxu0
    %4124 = vdwg.mxu0
    %4125 = vmatprep.subr.bf16.mxu0 %v3148
    %4126 = vmatpush1.bf16.msra.mxu0 %v3147
    %4127 = vmatprep.subr.bf16.mxu0 %v3152
    %4128 = vmatpush1.bf16.msra.mxu0 %v3151
    %4129 = vmatprep.subr.bf16.mxu0 %v3156
    %4130 = vmatpush1.bf16.msra.mxu0 %v3155
    %4131 = vmatprep.subr.bf16.mxu0 %v3160
    %4132 = vmatpush1.bf16.msra.mxu0 %v3159
    %4133 = vmatprep.subr.bf16.mxu0 %v3164
    %4134 = vmatpush1.bf16.msra.mxu0 %v3163
    %4135 = vmatprep.subr.bf16.mxu0 %v3168
    %4136 = vmatpush1.bf16.msra.mxu0 %v3167
    %4137 = vmatprep.subr.bf16.mxu0 %v3172
    %4138 = vmatpush1.bf16.msra.mxu0 %v3171
    %4139 = vmatprep.subr.bf16.mxu0 %v3176
    %4140 = vmatpush1.bf16.msra.mxu0 %v3175
    %4141 = vmatprep.subr.bf16.mxu0 %v3180
    %4142 = vmatpush1.bf16.msra.mxu0 %v3179
    %4143 = vmatprep.subr.bf16.mxu0 %v3184
    %4144 = vmatpush1.bf16.msra.mxu0 %v3183
    %4145 = vmatprep.subr.bf16.mxu0 %v3188
    %4146 = vmatpush1.bf16.msra.mxu0 %v3187
    %4147 = vmatprep.subr.bf16.mxu0 %v3192
    %4148 = vmatpush1.bf16.msra.mxu0 %v3191
    %4149 = vmatprep.subr.bf16.mxu0 %v3196
    %4150 = vmatpush1.bf16.msra.mxu0 %v3195
    %4151 = vmatprep.subr.bf16.mxu0 %v3200
    %4152 = vmatpush1.bf16.msra.mxu0 %v3199
    %4153 = vmatprep.subr.bf16.mxu0 %v3204
    %4154 = vmatpush1.bf16.msra.mxu0 %v3203
    %4155 = vmatprep.subr.bf16.mxu0 %v3208
    %4156 = vmatpush1.bf16.msra.mxu0 %v3207
    %4157 = vmatprep.mubr.bf16.mxu0 %v938
    %4158 = vmatmul.mubr.bf16.gmra.mrb[0].mxu0 %v937
    %v4159 = vpop.f32.mrb[0].mxu0
    %v4160 = vadd.f32 %v4119, %v4159
    %v4161 = vpop.f32.mrb[0].mxu0
    %v4162 = vadd.f32 %v4121, %v4161
    %v4163 = vpop.f32.mrb[0].mxu0
    %v4164 = vpop.f32.mrb[0].mxu0
    %4165 = vdwg.mxu0
    %4166 = vmatprep.subr.bf16.mxu0 %v3212
    %4167 = vmatpush1.bf16.msra.mxu0 %v3211
    %4168 = vmatprep.subr.bf16.mxu0 %v3216
    %4169 = vmatpush1.bf16.msra.mxu0 %v3215
    %4170 = vmatprep.subr.bf16.mxu0 %v3220
    %4171 = vmatpush1.bf16.msra.mxu0 %v3219
    %4172 = vmatprep.subr.bf16.mxu0 %v3224
    %4173 = vmatpush1.bf16.msra.mxu0 %v3223
    %4174 = vmatprep.subr.bf16.mxu0 %v3228
    %4175 = vmatpush1.bf16.msra.mxu0 %v3227
    %4176 = vmatprep.subr.bf16.mxu0 %v3232
    %4177 = vmatpush1.bf16.msra.mxu0 %v3231
    %4178 = vmatprep.subr.bf16.mxu0 %v3236
    %4179 = vmatpush1.bf16.msra.mxu0 %v3235
    %4180 = vmatprep.subr.bf16.mxu0 %v3240
    %4181 = vmatpush1.bf16.msra.mxu0 %v3239
    %4182 = vmatprep.subr.bf16.mxu0 %v3244
    %4183 = vmatpush1.bf16.msra.mxu0 %v3243
    %4184 = vmatprep.subr.bf16.mxu0 %v3248
    %4185 = vmatpush1.bf16.msra.mxu0 %v3247
    %4186 = vmatprep.subr.bf16.mxu0 %v3252
    %4187 = vmatpush1.bf16.msra.mxu0 %v3251
    %4188 = vmatprep.subr.bf16.mxu0 %v3256
    %4189 = vmatpush1.bf16.msra.mxu0 %v3255
    %4190 = vmatprep.subr.bf16.mxu0 %v3260
    %4191 = vmatpush1.bf16.msra.mxu0 %v3259
    %4192 = vmatprep.subr.bf16.mxu0 %v3264
    %4193 = vmatpush1.bf16.msra.mxu0 %v3263
    %4194 = vmatprep.subr.bf16.mxu0 %v3268
    %4195 = vmatpush1.bf16.msra.mxu0 %v3267
    %4196 = vmatprep.subr.bf16.mxu0 %v3272
    %4197 = vmatpush1.bf16.msra.mxu0 %v3271
    %4198 = vmatprep.mubr.bf16.mxu0 %v940
    %4199 = vmatmul.mubr.bf16.gmra.mrb[0].mxu0 %v939
    %v4200 = vpop.f32.mrb[0].mxu0
    %v4201 = vadd.f32 %v4160, %v4200
    %v4202 = vpop.f32.mrb[0].mxu0
    %v4203 = vadd.f32 %v4162, %v4202
    %v4204 = vpop.f32.mrb[0].mxu0
    %v4205 = vpop.f32.mrb[0].mxu0
    %4206 = vdwg.mxu0
    %4207 = vmatprep.subr.bf16.mxu0 %v3276
    %4208 = vmatpush1.bf16.msra.mxu0 %v3275
    %4209 = vmatprep.subr.bf16.mxu0 %v3280
    %4210 = vmatpush1.bf16.msra.mxu0 %v3279
    %4211 = vmatprep.subr.bf16.mxu0 %v3284
    %4212 = vmatpush1.bf16.msra.mxu0 %v3283
    %4213 = vmatprep.subr.bf16.mxu0 %v3288
    %4214 = vmatpush1.bf16.msra.mxu0 %v3287
    %4215 = vmatprep.subr.bf16.mxu0 %v3292
    %4216 = vmatpush1.bf16.msra.mxu0 %v3291
    %4217 = vmatprep.subr.bf16.mxu0 %v3296
    %4218 = vmatpush1.bf16.msra.mxu0 %v3295
    %4219 = vmatprep.subr.bf16.mxu0 %v3300
    %4220 = vmatpush1.bf16.msra.mxu0 %v3299
    %4221 = vmatprep.subr.bf16.mxu0 %v3304
    %4222 = vmatpush1.bf16.msra.mxu0 %v3303
    %4223 = vmatprep.subr.bf16.mxu0 %v3308
    %4224 = vmatpush1.bf16.msra.mxu0 %v3307
    %4225 = vmatprep.subr.bf16.mxu0 %v3312
    %4226 = vmatpush1.bf16.msra.mxu0 %v3311
    %4227 = vmatprep.subr.bf16.mxu0 %v3316
    %4228 = vmatpush1.bf16.msra.mxu0 %v3315
    %4229 = vmatprep.subr.bf16.mxu0 %v3320
    %4230 = vmatpush1.bf16.msra.mxu0 %v3319
    %4231 = vmatprep.subr.bf16.mxu0 %v3324
    %4232 = vmatpush1.bf16.msra.mxu0 %v3323
    %4233 = vmatprep.subr.bf16.mxu0 %v3328
    %4234 = vmatpush1.bf16.msra.mxu0 %v3327
    %4235 = vmatprep.subr.bf16.mxu0 %v3332
    %4236 = vmatpush1.bf16.msra.mxu0 %v3331
    %4237 = vmatprep.subr.bf16.mxu0 %v3336
    %4238 = vmatpush1.bf16.msra.mxu0 %v3335
    %4239 = vmatprep.mubr.bf16.mxu0 %v942
    %4240 = vmatmul.mubr.bf16.gmra.mrb[0].mxu0 %v941
    %v4241 = vpop.f32.mrb[0].mxu0
    %v4242 = vadd.f32 %v4201, %v4241
    %v4243 = vpop.f32.mrb[0].mxu0
    %v4244 = vadd.f32 %v4203, %v4243
    %v4245 = vpop.f32.mrb[0].mxu0
    %v4246 = vpop.f32.mrb[0].mxu0
    %4247 = vdwg.mxu0
    %4248 = vmatprep.subr.bf16.mxu0 %v3340
    %4249 = vmatpush1.bf16.msra.mxu0 %v3339
    %4250 = vmatprep.subr.bf16.mxu0 %v3344
    %4251 = vmatpush1.bf16.msra.mxu0 %v3343
    %4252 = vmatprep.subr.bf16.mxu0 %v3348
    %4253 = vmatpush1.bf16.msra.mxu0 %v3347
    %4254 = vmatprep.subr.bf16.mxu0 %v3352
    %4255 = vmatpush1.bf16.msra.mxu0 %v3351
    %4256 = vmatprep.subr.bf16.mxu0 %v3356
    %4257 = vmatpush1.bf16.msra.mxu0 %v3355
    %4258 = vmatprep.subr.bf16.mxu0 %v3360
    %4259 = vmatpush1.bf16.msra.mxu0 %v3359
    %4260 = vmatprep.subr.bf16.mxu0 %v3364
    %4261 = vmatpush1.bf16.msra.mxu0 %v3363
    %4262 = vmatprep.subr.bf16.mxu0 %v3368
    %4263 = vmatpush1.bf16.msra.mxu0 %v3367
    %4264 = vmatprep.subr.bf16.mxu0 %v3372
    %4265 = vmatpush1.bf16.msra.mxu0 %v3371
    %4266 = vmatprep.subr.bf16.mxu0 %v3376
    %4267 = vmatpush1.bf16.msra.mxu0 %v3375
    %4268 = vmatprep.subr.bf16.mxu0 %v3380
    %4269 = vmatpush1.bf16.msra.mxu0 %v3379
    %4270 = vmatprep.subr.bf16.mxu0 %v3384
    %4271 = vmatpush1.bf16.msra.mxu0 %v3383
    %4272 = vmatprep.subr.bf16.mxu0 %v3388
    %4273 = vmatpush1.bf16.msra.mxu0 %v3387
    %4274 = vmatprep.subr.bf16.mxu0 %v3392
    %4275 = vmatpush1.bf16.msra.mxu0 %v3391
    %4276 = vmatprep.subr.bf16.mxu0 %v3396
    %4277 = vmatpush1.bf16.msra.mxu0 %v3395
    %4278 = vmatprep.subr.bf16.mxu0 %v3400
    %4279 = vmatpush1.bf16.msra.mxu0 %v3399
    %4280 = vmatprep.mubr.bf16.mxu0 %v944
    %4281 = vmatmul.mubr.bf16.gmra.mrb[0].mxu0 %v943
    %v4282 = vpop.f32.mrb[0].mxu0
    %v4283 = vadd.f32 %v4242, %v4282
    %v4284 = vpop.f32.mrb[0].mxu0
    %v4285 = vadd.f32 %v4244, %v4284
    %v4286 = vpop.f32.mrb[0].mxu0
    %v4287 = vpop.f32.mrb[0].mxu0
    %4288 = vdwg.mxu0
    %4289 = vmatprep.subr.bf16.mxu0 %v3404
    %4290 = vmatpush1.bf16.msra.mxu0 %v3403
    %4291 = vmatprep.subr.bf16.mxu0 %v3408
    %4292 = vmatpush1.bf16.msra.mxu0 %v3407
    %4293 = vmatprep.subr.bf16.mxu0 %v3412
    %4294 = vmatpush1.bf16.msra.mxu0 %v3411
    %4295 = vmatprep.subr.bf16.mxu0 %v3416
    %4296 = vmatpush1.bf16.msra.mxu0 %v3415
    %4297 = vmatprep.subr.bf16.mxu0 %v3420
    %4298 = vmatpush1.bf16.msra.mxu0 %v3419
    %4299 = vmatprep.subr.bf16.mxu0 %v3424
    %4300 = vmatpush1.bf16.msra.mxu0 %v3423
    %4301 = vmatprep.subr.bf16.mxu0 %v3428
    %4302 = vmatpush1.bf16.msra.mxu0 %v3427
    %4303 = vmatprep.subr.bf16.mxu0 %v3432
    %4304 = vmatpush1.bf16.msra.mxu0 %v3431
    %4305 = vmatprep.subr.bf16.mxu0 %v3436
    %4306 = vmatpush1.bf16.msra.mxu0 %v3435
    %4307 = vmatprep.subr.bf16.mxu0 %v3440
    %4308 = vmatpush1.bf16.msra.mxu0 %v3439
    %4309 = vmatprep.subr.bf16.mxu0 %v3444
    %4310 = vmatpush1.bf16.msra.mxu0 %v3443
    %4311 = vmatprep.subr.bf16.mxu0 %v3448
    %4312 = vmatpush1.bf16.msra.mxu0 %v3447
    %4313 = vmatprep.subr.bf16.mxu0 %v3452
    %4314 = vmatpush1.bf16.msra.mxu0 %v3451
    %4315 = vmatprep.subr.bf16.mxu0 %v3456
    %4316 = vmatpush1.bf16.msra.mxu0 %v3455
    %4317 = vmatprep.subr.bf16.mxu0 %v3460
    %4318 = vmatpush1.bf16.msra.mxu0 %v3459
    %4319 = vmatprep.subr.bf16.mxu0 %v3464
    %4320 = vmatpush1.bf16.msra.mxu0 %v3463
    %4321 = vmatprep.mubr.bf16.mxu0 %v946
    %4322 = vmatmul.mubr.bf16.gmra.mrb[0].mxu0 %v945
    %v4323 = vpop.f32.mrb[0].mxu0
    %v4324 = vadd.f32 %v4283, %v4323
    %v4325 = vpop.f32.mrb[0].mxu0
    %v4326 = vadd.f32 %v4285, %v4325
    %v4327 = vpop.f32.mrb[0].mxu0
    %v4328 = vpop.f32.mrb[0].mxu0
    %4329 = vdwg.mxu0
    %4330 = vmatprep.subr.bf16.mxu0 %v3468
    %4331 = vmatpush1.bf16.msra.mxu0 %v3467
    %4332 = vmatprep.subr.bf16.mxu0 %v3472
    %4333 = vmatpush1.bf16.msra.mxu0 %v3471
    %4334 = vmatprep.subr.bf16.mxu0 %v3476
    %4335 = vmatpush1.bf16.msra.mxu0 %v3475
    %4336 = vmatprep.subr.bf16.mxu0 %v3480
    %4337 = vmatpush1.bf16.msra.mxu0 %v3479
    %4338 = vmatprep.subr.bf16.mxu0 %v3484
    %4339 = vmatpush1.bf16.msra.mxu0 %v3483
    %4340 = vmatprep.subr.bf16.mxu0 %v3488
    %4341 = vmatpush1.bf16.msra.mxu0 %v3487
    %4342 = vmatprep.subr.bf16.mxu0 %v3492
    %4343 = vmatpush1.bf16.msra.mxu0 %v3491
    %4344 = vmatprep.subr.bf16.mxu0 %v3496
    %4345 = vmatpush1.bf16.msra.mxu0 %v3495
    %4346 = vmatprep.subr.bf16.mxu0 %v3500
    %4347 = vmatpush1.bf16.msra.mxu0 %v3499
    %4348 = vmatprep.subr.bf16.mxu0 %v3504
    %4349 = vmatpush1.bf16.msra.mxu0 %v3503
    %4350 = vmatprep.subr.bf16.mxu0 %v3508
    %4351 = vmatpush1.bf16.msra.mxu0 %v3507
    %4352 = vmatprep.subr.bf16.mxu0 %v3512
    %4353 = vmatpush1.bf16.msra.mxu0 %v3511
    %4354 = vmatprep.subr.bf16.mxu0 %v3516
    %4355 = vmatpush1.bf16.msra.mxu0 %v3515
    %4356 = vmatprep.subr.bf16.mxu0 %v3520
    %4357 = vmatpush1.bf16.msra.mxu0 %v3519
    %4358 = vmatprep.subr.bf16.mxu0 %v3524
    %4359 = vmatpush1.bf16.msra.mxu0 %v3523
    %4360 = vmatprep.subr.bf16.mxu0 %v3528
    %4361 = vmatpush1.bf16.msra.mxu0 %v3527
    %4362 = vmatprep.mubr.bf16.mxu0 %v948
    %4363 = vmatmul.mubr.bf16.gmra.mrb[0].mxu0 %v947
    %v4364 = vpop.f32.mrb[0].mxu0
    %v4365 = vadd.f32 %v4324, %v4364
    %v4366 = vpop.f32.mrb[0].mxu0
    %v4367 = vadd.f32 %v4326, %v4366
    %v4368 = vpop.f32.mrb[0].mxu0
    %v4369 = vpop.f32.mrb[0].mxu0
    %4370 = vdwg.mxu0
    %4371 = vmatprep.subr.bf16.mxu0 %v3022
    %4372 = vmatpush1.bf16.msra.mxu0 %v3021
    %4373 = vmatprep.subr.bf16.mxu0 %v3026
    %4374 = vmatpush1.bf16.msra.mxu0 %v3025
    %4375 = vmatprep.subr.bf16.mxu0 %v3030
    %4376 = vmatpush1.bf16.msra.mxu0 %v3029
    %4377 = vmatprep.subr.bf16.mxu0 %v3034
    %4378 = vmatpush1.bf16.msra.mxu0 %v3033
    %4379 = vmatprep.subr.bf16.mxu0 %v3038
    %4380 = vmatpush1.bf16.msra.mxu0 %v3037
    %4381 = vmatprep.subr.bf16.mxu0 %v3042
    %4382 = vmatpush1.bf16.msra.mxu0 %v3041
    %4383 = vmatprep.subr.bf16.mxu0 %v3046
    %4384 = vmatpush1.bf16.msra.mxu0 %v3045
    %4385 = vmatprep.subr.bf16.mxu0 %v3050
    %4386 = vmatpush1.bf16.msra.mxu0 %v3049
    %4387 = vmatprep.subr.bf16.mxu0 %v3054
    %4388 = vmatpush1.bf16.msra.mxu0 %v3053
    %4389 = vmatprep.subr.bf16.mxu0 %v3058
    %4390 = vmatpush1.bf16.msra.mxu0 %v3057
    %4391 = vmatprep.subr.bf16.mxu0 %v3062
    %4392 = vmatpush1.bf16.msra.mxu0 %v3061
    %4393 = vmatprep.subr.bf16.mxu0 %v3066
    %4394 = vmatpush1.bf16.msra.mxu0 %v3065
    %4395 = vmatprep.subr.bf16.mxu0 %v3070
    %4396 = vmatpush1.bf16.msra.mxu0 %v3069
    %4397 = vmatprep.subr.bf16.mxu0 %v3074
    %4398 = vmatpush1.bf16.msra.mxu0 %v3073
    %4399 = vmatprep.subr.bf16.mxu0 %v3078
    %4400 = vmatpush1.bf16.msra.mxu0 %v3077
    %4401 = vmatprep.subr.bf16.mxu0 %v3082
    %4402 = vmatpush1.bf16.msra.mxu0 %v3081
    %4403 = vmatprep.mubr.bf16.mxu0 %v934
    %4404 = vmatmul.mubr.bf16.gmra.mrb[0].mxu0 %v933
    %v4405 = vpop.f32.mrb[0].mxu0
    %v4406 = vadd.f32 %v1474, %v4405
    %v4407 = vpop.f32.mrb[0].mxu0
    %v4408 = vadd.f32 %v1478, %v4407
    %v4409 = vpop.f32.mrb[0].mxu0
    %v4410 = vpop.f32.mrb[0].mxu0
    %4411 = vdwg.mxu0
    %4412 = vmatprep.subr.bf16.mxu0 %v3086
    %4413 = vmatpush1.bf16.msra.mxu0 %v3085
    %4414 = vmatprep.subr.bf16.mxu0 %v3090
    %4415 = vmatpush1.bf16.msra.mxu0 %v3089
    %4416 = vmatprep.subr.bf16.mxu0 %v3094
    %4417 = vmatpush1.bf16.msra.mxu0 %v3093
    %4418 = vmatprep.subr.bf16.mxu0 %v3098
    %4419 = vmatpush1.bf16.msra.mxu0 %v3097
    %4420 = vmatprep.subr.bf16.mxu0 %v3102
    %4421 = vmatpush1.bf16.msra.mxu0 %v3101
    %4422 = vmatprep.subr.bf16.mxu0 %v3106
    %4423 = vmatpush1.bf16.msra.mxu0 %v3105
    %4424 = vmatprep.subr.bf16.mxu0 %v3110
    %4425 = vmatpush1.bf16.msra.mxu0 %v3109
    %4426 = vmatprep.subr.bf16.mxu0 %v3114
    %4427 = vmatpush1.bf16.msra.mxu0 %v3113
    %4428 = vmatprep.subr.bf16.mxu0 %v3118
    %4429 = vmatpush1.bf16.msra.mxu0 %v3117
    %4430 = vmatprep.subr.bf16.mxu0 %v3122
    %4431 = vmatpush1.bf16.msra.mxu0 %v3121
    %4432 = vmatprep.subr.bf16.mxu0 %v3126
    %4433 = vmatpush1.bf16.msra.mxu0 %v3125
    %4434 = vmatprep.subr.bf16.mxu0 %v3130
    %4435 = vmatpush1.bf16.msra.mxu0 %v3129
    %4436 = vmatprep.subr.bf16.mxu0 %v3134
    %4437 = vmatpush1.bf16.msra.mxu0 %v3133
    %4438 = vmatprep.subr.bf16.mxu0 %v3138
    %4439 = vmatpush1.bf16.msra.mxu0 %v3137
    %4440 = vmatprep.subr.bf16.mxu0 %v3142
    %4441 = vmatpush1.bf16.msra.mxu0 %v3141
    %4442 = vmatprep.subr.bf16.mxu0 %v3146
    %4443 = vmatpush1.bf16.msra.mxu0 %v3145
    %4444 = vmatprep.mubr.bf16.mxu0 %v936
    %4445 = vmatmul.mubr.bf16.gmra.mrb[0].mxu0 %v935
    %v4446 = vpop.f32.mrb[0].mxu0
    %v4447 = vadd.f32 %v4406, %v4446
    %v4448 = vpop.f32.mrb[0].mxu0
    %v4449 = vadd.f32 %v4408, %v4448
    %v4450 = vpop.f32.mrb[0].mxu0
    %v4451 = vpop.f32.mrb[0].mxu0
    %4452 = vdwg.mxu0
    %4453 = vmatprep.subr.bf16.mxu0 %v3150
    %4454 = vmatpush1.bf16.msra.mxu0 %v3149
    %4455 = vmatprep.subr.bf16.mxu0 %v3154
    %4456 = vmatpush1.bf16.msra.mxu0 %v3153
    %4457 = vmatprep.subr.bf16.mxu0 %v3158
    %4458 = vmatpush1.bf16.msra.mxu0 %v3157
    %4459 = vmatprep.subr.bf16.mxu0 %v3162
    %4460 = vmatpush1.bf16.msra.mxu0 %v3161
    %4461 = vmatprep.subr.bf16.mxu0 %v3166
    %4462 = vmatpush1.bf16.msra.mxu0 %v3165
    %4463 = vmatprep.subr.bf16.mxu0 %v3170
    %4464 = vmatpush1.bf16.msra.mxu0 %v3169
    %4465 = vmatprep.subr.bf16.mxu0 %v3174
    %4466 = vmatpush1.bf16.msra.mxu0 %v3173
    %4467 = vmatprep.subr.bf16.mxu0 %v3178
    %4468 = vmatpush1.bf16.msra.mxu0 %v3177
    %4469 = vmatprep.subr.bf16.mxu0 %v3182
    %4470 = vmatpush1.bf16.msra.mxu0 %v3181
    %4471 = vmatprep.subr.bf16.mxu0 %v3186
    %4472 = vmatpush1.bf16.msra.mxu0 %v3185
    %4473 = vmatprep.subr.bf16.mxu0 %v3190
    %4474 = vmatpush1.bf16.msra.mxu0 %v3189
    %4475 = vmatprep.subr.bf16.mxu0 %v3194
    %4476 = vmatpush1.bf16.msra.mxu0 %v3193
    %4477 = vmatprep.subr.bf16.mxu0 %v3198
    %4478 = vmatpush1.bf16.msra.mxu0 %v3197
    %4479 = vmatprep.subr.bf16.mxu0 %v3202
    %4480 = vmatpush1.bf16.msra.mxu0 %v3201
    %4481 = vmatprep.subr.bf16.mxu0 %v3206
    %4482 = vmatpush1.bf16.msra.mxu0 %v3205
    %4483 = vmatprep.subr.bf16.mxu0 %v3210
    %4484 = vmatpush1.bf16.msra.mxu0 %v3209
    %4485 = vmatprep.mubr.bf16.mxu0 %v938
    %4486 = vmatmul.mubr.bf16.gmra.mrb[0].mxu0 %v937
    %v4487 = vpop.f32.mrb[0].mxu0
    %v4488 = vadd.f32 %v4447, %v4487
    %v4489 = vpop.f32.mrb[0].mxu0
    %v4490 = vadd.f32 %v4449, %v4489
    %v4491 = vpop.f32.mrb[0].mxu0
    %v4492 = vpop.f32.mrb[0].mxu0
    %4493 = vdwg.mxu0
    %4494 = vmatprep.subr.bf16.mxu0 %v3214
    %4495 = vmatpush1.bf16.msra.mxu0 %v3213
    %4496 = vmatprep.subr.bf16.mxu0 %v3218
    %4497 = vmatpush1.bf16.msra.mxu0 %v3217
    %4498 = vmatprep.subr.bf16.mxu0 %v3222
    %4499 = vmatpush1.bf16.msra.mxu0 %v3221
    %4500 = vmatprep.subr.bf16.mxu0 %v3226
    %4501 = vmatpush1.bf16.msra.mxu0 %v3225
    %4502 = vmatprep.subr.bf16.mxu0 %v3230
    %4503 = vmatpush1.bf16.msra.mxu0 %v3229
    %4504 = vmatprep.subr.bf16.mxu0 %v3234
    %4505 = vmatpush1.bf16.msra.mxu0 %v3233
    %4506 = vmatprep.subr.bf16.mxu0 %v3238
    %4507 = vmatpush1.bf16.msra.mxu0 %v3237
    %4508 = vmatprep.subr.bf16.mxu0 %v3242
    %4509 = vmatpush1.bf16.msra.mxu0 %v3241
    %4510 = vmatprep.subr.bf16.mxu0 %v3246
    %4511 = vmatpush1.bf16.msra.mxu0 %v3245
    %4512 = vmatprep.subr.bf16.mxu0 %v3250
    %4513 = vmatpush1.bf16.msra.mxu0 %v3249
    %4514 = vmatprep.subr.bf16.mxu0 %v3254
    %4515 = vmatpush1.bf16.msra.mxu0 %v3253
    %4516 = vmatprep.subr.bf16.mxu0 %v3258
    %4517 = vmatpush1.bf16.msra.mxu0 %v3257
    %4518 = vmatprep.subr.bf16.mxu0 %v3262
    %4519 = vmatpush1.bf16.msra.mxu0 %v3261
    %4520 = vmatprep.subr.bf16.mxu0 %v3266
    %4521 = vmatpush1.bf16.msra.mxu0 %v3265
    %4522 = vmatprep.subr.bf16.mxu0 %v3270
    %4523 = vmatpush1.bf16.msra.mxu0 %v3269
    %4524 = vmatprep.subr.bf16.mxu0 %v3274
    %4525 = vmatpush1.bf16.msra.mxu0 %v3273
    %4526 = vmatprep.mubr.bf16.mxu0 %v940
    %4527 = vmatmul.mubr.bf16.gmra.mrb[0].mxu0 %v939
    %v4528 = vpop.f32.mrb[0].mxu0
    %v4529 = vadd.f32 %v4488, %v4528
    %v4530 = vpop.f32.mrb[0].mxu0
    %v4531 = vadd.f32 %v4490, %v4530
    %v4532 = vpop.f32.mrb[0].mxu0
    %v4533 = vpop.f32.mrb[0].mxu0
    %4534 = vdwg.mxu0
    %4535 = vmatprep.subr.bf16.mxu0 %v3278
    %4536 = vmatpush1.bf16.msra.mxu0 %v3277
    %4537 = vmatprep.subr.bf16.mxu0 %v3282
    %4538 = vmatpush1.bf16.msra.mxu0 %v3281
    %4539 = vmatprep.subr.bf16.mxu0 %v3286
    %4540 = vmatpush1.bf16.msra.mxu0 %v3285
    %4541 = vmatprep.subr.bf16.mxu0 %v3290
    %4542 = vmatpush1.bf16.msra.mxu0 %v3289
    %4543 = vmatprep.subr.bf16.mxu0 %v3294
    %4544 = vmatpush1.bf16.msra.mxu0 %v3293
    %4545 = vmatprep.subr.bf16.mxu0 %v3298
    %4546 = vmatpush1.bf16.msra.mxu0 %v3297
    %4547 = vmatprep.subr.bf16.mxu0 %v3302
    %4548 = vmatpush1.bf16.msra.mxu0 %v3301
    %4549 = vmatprep.subr.bf16.mxu0 %v3306
    %4550 = vmatpush1.bf16.msra.mxu0 %v3305
    %4551 = vmatprep.subr.bf16.mxu0 %v3310
    %4552 = vmatpush1.bf16.msra.mxu0 %v3309
    %4553 = vmatprep.subr.bf16.mxu0 %v3314
    %4554 = vmatpush1.bf16.msra.mxu0 %v3313
    %4555 = vmatprep.subr.bf16.mxu0 %v3318
    %4556 = vmatpush1.bf16.msra.mxu0 %v3317
    %4557 = vmatprep.subr.bf16.mxu0 %v3322
    %4558 = vmatpush1.bf16.msra.mxu0 %v3321
    %4559 = vmatprep.subr.bf16.mxu0 %v3326
    %4560 = vmatpush1.bf16.msra.mxu0 %v3325
    %4561 = vmatprep.subr.bf16.mxu0 %v3330
    %4562 = vmatpush1.bf16.msra.mxu0 %v3329
    %4563 = vmatprep.subr.bf16.mxu0 %v3334
    %4564 = vmatpush1.bf16.msra.mxu0 %v3333
    %4565 = vmatprep.subr.bf16.mxu0 %v3338
    %4566 = vmatpush1.bf16.msra.mxu0 %v3337
    %4567 = vmatprep.mubr.bf16.mxu0 %v942
    %4568 = vmatmul.mubr.bf16.gmra.mrb[0].mxu0 %v941
    %v4569 = vpop.f32.mrb[0].mxu0
    %v4570 = vadd.f32 %v4529, %v4569
    %v4571 = vpop.f32.mrb[0].mxu0
    %v4572 = vadd.f32 %v4531, %v4571
    %v4573 = vpop.f32.mrb[0].mxu0
    %v4574 = vpop.f32.mrb[0].mxu0
    %4575 = vdwg.mxu0
    %4576 = vmatprep.subr.bf16.mxu0 %v3342
    %4577 = vmatpush1.bf16.msra.mxu0 %v3341
    %4578 = vmatprep.subr.bf16.mxu0 %v3346
    %4579 = vmatpush1.bf16.msra.mxu0 %v3345
    %4580 = vmatprep.subr.bf16.mxu0 %v3350
    %4581 = vmatpush1.bf16.msra.mxu0 %v3349
    %4582 = vmatprep.subr.bf16.mxu0 %v3354
    %4583 = vmatpush1.bf16.msra.mxu0 %v3353
    %4584 = vmatprep.subr.bf16.mxu0 %v3358
    %4585 = vmatpush1.bf16.msra.mxu0 %v3357
    %4586 = vmatprep.subr.bf16.mxu0 %v3362
    %4587 = vmatpush1.bf16.msra.mxu0 %v3361
    %4588 = vmatprep.subr.bf16.mxu0 %v3366
    %4589 = vmatpush1.bf16.msra.mxu0 %v3365
    %4590 = vmatprep.subr.bf16.mxu0 %v3370
    %4591 = vmatpush1.bf16.msra.mxu0 %v3369
    %4592 = vmatprep.subr.bf16.mxu0 %v3374
    %4593 = vmatpush1.bf16.msra.mxu0 %v3373
    %4594 = vmatprep.subr.bf16.mxu0 %v3378
    %4595 = vmatpush1.bf16.msra.mxu0 %v3377
    %4596 = vmatprep.subr.bf16.mxu0 %v3382
    %4597 = vmatpush1.bf16.msra.mxu0 %v3381
    %4598 = vmatprep.subr.bf16.mxu0 %v3386
    %4599 = vmatpush1.bf16.msra.mxu0 %v3385
    %4600 = vmatprep.subr.bf16.mxu0 %v3390
    %4601 = vmatpush1.bf16.msra.mxu0 %v3389
    %4602 = vmatprep.subr.bf16.mxu0 %v3394
    %4603 = vmatpush1.bf16.msra.mxu0 %v3393
    %4604 = vmatprep.subr.bf16.mxu0 %v3398
    %4605 = vmatpush1.bf16.msra.mxu0 %v3397
    %4606 = vmatprep.subr.bf16.mxu0 %v3402
    %4607 = vmatpush1.bf16.msra.mxu0 %v3401
    %4608 = vmatprep.mubr.bf16.mxu0 %v944
    %4609 = vmatmul.mubr.bf16.gmra.mrb[0].mxu0 %v943
    %v4610 = vpop.f32.mrb[0].mxu0
    %v4611 = vadd.f32 %v4570, %v4610
    %v4612 = vpop.f32.mrb[0].mxu0
    %v4613 = vadd.f32 %v4572, %v4612
    %v4614 = vpop.f32.mrb[0].mxu0
    %v4615 = vpop.f32.mrb[0].mxu0
    %4616 = vdwg.mxu0
    %4617 = vmatprep.subr.bf16.mxu0 %v3406
    %4618 = vmatpush1.bf16.msra.mxu0 %v3405
    %4619 = vmatprep.subr.bf16.mxu0 %v3410
    %4620 = vmatpush1.bf16.msra.mxu0 %v3409
    %4621 = vmatprep.subr.bf16.mxu0 %v3414
    %4622 = vmatpush1.bf16.msra.mxu0 %v3413
    %4623 = vmatprep.subr.bf16.mxu0 %v3418
    %4624 = vmatpush1.bf16.msra.mxu0 %v3417
    %4625 = vmatprep.subr.bf16.mxu0 %v3422
    %4626 = vmatpush1.bf16.msra.mxu0 %v3421
    %4627 = vmatprep.subr.bf16.mxu0 %v3426
    %4628 = vmatpush1.bf16.msra.mxu0 %v3425
    %4629 = vmatprep.subr.bf16.mxu0 %v3430
    %4630 = vmatpush1.bf16.msra.mxu0 %v3429
    %4631 = vmatprep.subr.bf16.mxu0 %v3434
    %4632 = vmatpush1.bf16.msra.mxu0 %v3433
    %4633 = vmatprep.subr.bf16.mxu0 %v3438
    %4634 = vmatpush1.bf16.msra.mxu0 %v3437
    %4635 = vmatprep.subr.bf16.mxu0 %v3442
    %4636 = vmatpush1.bf16.msra.mxu0 %v3441
    %4637 = vmatprep.subr.bf16.mxu0 %v3446
    %4638 = vmatpush1.bf16.msra.mxu0 %v3445
    %4639 = vmatprep.subr.bf16.mxu0 %v3450
    %4640 = vmatpush1.bf16.msra.mxu0 %v3449
    %4641 = vmatprep.subr.bf16.mxu0 %v3454
    %4642 = vmatpush1.bf16.msra.mxu0 %v3453
    %4643 = vmatprep.subr.bf16.mxu0 %v3458
    %4644 = vmatpush1.bf16.msra.mxu0 %v3457
    %4645 = vmatprep.subr.bf16.mxu0 %v3462
    %4646 = vmatpush1.bf16.msra.mxu0 %v3461
    %4647 = vmatprep.subr.bf16.mxu0 %v3466
    %4648 = vmatpush1.bf16.msra.mxu0 %v3465
    %4649 = vmatprep.mubr.bf16.mxu0 %v946
    %4650 = vmatmul.mubr.bf16.gmra.mrb[0].mxu0 %v945
    %v4651 = vpop.f32.mrb[0].mxu0
    %v4652 = vadd.f32 %v4611, %v4651
    %v4653 = vpop.f32.mrb[0].mxu0
    %v4654 = vadd.f32 %v4613, %v4653
    %v4655 = vpop.f32.mrb[0].mxu0
    %v4656 = vpop.f32.mrb[0].mxu0
    %4657 = vdwg.mxu0
    %4658 = vmatprep.subr.bf16.mxu0 %v3470
    %4659 = vmatpush1.bf16.msra.mxu0 %v3469
    %4660 = vmatprep.subr.bf16.mxu0 %v3474
    %4661 = vmatpush1.bf16.msra.mxu0 %v3473
    %4662 = vmatprep.subr.bf16.mxu0 %v3478
    %4663 = vmatpush1.bf16.msra.mxu0 %v3477
    %4664 = vmatprep.subr.bf16.mxu0 %v3482
    %4665 = vmatpush1.bf16.msra.mxu0 %v3481
    %4666 = vmatprep.subr.bf16.mxu0 %v3486
    %4667 = vmatpush1.bf16.msra.mxu0 %v3485
    %4668 = vmatprep.subr.bf16.mxu0 %v3490
    %4669 = vmatpush1.bf16.msra.mxu0 %v3489
    %4670 = vmatprep.subr.bf16.mxu0 %v3494
    %4671 = vmatpush1.bf16.msra.mxu0 %v3493
    %4672 = vmatprep.subr.bf16.mxu0 %v3498
    %4673 = vmatpush1.bf16.msra.mxu0 %v3497
    %4674 = vmatprep.subr.bf16.mxu0 %v3502
    %4675 = vmatpush1.bf16.msra.mxu0 %v3501
    %4676 = vmatprep.subr.bf16.mxu0 %v3506
    %4677 = vmatpush1.bf16.msra.mxu0 %v3505
    %4678 = vmatprep.subr.bf16.mxu0 %v3510
    %4679 = vmatpush1.bf16.msra.mxu0 %v3509
    %4680 = vmatprep.subr.bf16.mxu0 %v3514
    %4681 = vmatpush1.bf16.msra.mxu0 %v3513
    %4682 = vmatprep.subr.bf16.mxu0 %v3518
    %4683 = vmatpush1.bf16.msra.mxu0 %v3517
    %4684 = vmatprep.subr.bf16.mxu0 %v3522
    %4685 = vmatpush1.bf16.msra.mxu0 %v3521
    %4686 = vmatprep.subr.bf16.mxu0 %v3526
    %4687 = vmatpush1.bf16.msra.mxu0 %v3525
    %4688 = vmatprep.subr.bf16.mxu0 %v3530
    %4689 = vmatpush1.bf16.msra.mxu0 %v3529
    %4690 = vmatprep.mubr.bf16.mxu0 %v948
    %4691 = vmatmul.mubr.bf16.gmra.mrb[0].mxu0 %v947
    %v4692 = vpop.f32.mrb[0].mxu0
    %v4693 = vadd.f32 %v4652, %v4692
    %v4694 = vpop.f32.mrb[0].mxu0
    %v4695 = vadd.f32 %v4654, %v4694
    %v4696 = vpop.f32.mrb[0].mxu0
    %v4697 = vpop.f32.mrb[0].mxu0
    %4698 = vdwg.mxu0
    %v4699 = vmax.f32 %v4365, 0.0
    %v4700 = vmax.f32 %v4367, 0.0
    %v4701 = vmax.f32 %v4693, 0.0
    %v4702 = vmax.f32 %v4695, 0.0
    %v4703 = vpack.c.bf16 %v4699, %v4699
    %v4704 = vpack.c.bf16 %v4700, %v4700
    %v4705 = vpack.c.bf16 %v4701, %v4701
    %v4706 = vpack.c.bf16 %v4702, %v4702
    %v4707 = vld [vmem:[#allocation13] sm:$0xf]
    %v4708 = vld [vmem:[#allocation13 + $0x4] sm:$0xf]
    %v4709 = vld [vmem:[#allocation13 + $0x8] sm:$0xf]
    %v4710 = vld [vmem:[#allocation13 + $0xc] sm:$0xf]
    %v4711 = vld [vmem:[#allocation13 + $0x10] sm:$0xf]
    %v4712 = vld [vmem:[#allocation13 + $0x14] sm:$0xf]
    %v4713 = vld [vmem:[#allocation13 + $0x18] sm:$0xf]
    %v4714 = vld [vmem:[#allocation13 + $0x1c] sm:$0xf]
    %v4715 = vld [vmem:[#allocation13 + $0x20] sm:$0xf]
    %v4716 = vld [vmem:[#allocation13 + $0x24] sm:$0xf]
    %v4717 = vld [vmem:[#allocation13 + $0x28] sm:$0xf]
    %v4718 = vld [vmem:[#allocation13 + $0x2c] sm:$0xf]
    %v4719 = vld [vmem:[#allocation13 + $0x30] sm:$0xf]
    %v4720 = vld [vmem:[#allocation13 + $0x34] sm:$0xf]
    %v4721 = vld [vmem:[#allocation13 + $0x38] sm:$0xf]
    %v4722 = vld [vmem:[#allocation13 + $0x3c] sm:$0xf]
    %v4723 = vld [vmem:[#allocation13 + $0x40] sm:$0xf]
    %v4724 = vld [vmem:[#allocation13 + $0x44] sm:$0xf]
    %v4725 = vld [vmem:[#allocation13 + $0x48] sm:$0xf]
    %v4726 = vld [vmem:[#allocation13 + $0x4c] sm:$0xf]
    %v4727 = vld [vmem:[#allocation13 + $0x50] sm:$0xf]
    %v4728 = vld [vmem:[#allocation13 + $0x54] sm:$0xf]
    %v4729 = vld [vmem:[#allocation13 + $0x58] sm:$0xf]
    %v4730 = vld [vmem:[#allocation13 + $0x5c] sm:$0xf]
    %v4731 = vld [vmem:[#allocation13 + $0x60] sm:$0xf]
    %v4732 = vld [vmem:[#allocation13 + $0x64] sm:$0xf]
    %v4733 = vld [vmem:[#allocation13 + $0x68] sm:$0xf]
    %v4734 = vld [vmem:[#allocation13 + $0x6c] sm:$0xf]
    %v4735 = vld [vmem:[#allocation13 + $0x70] sm:$0xf]
    %v4736 = vld [vmem:[#allocation13 + $0x74] sm:$0xf]
    %v4737 = vld [vmem:[#allocation13 + $0x78] sm:$0xf]
    %v4738 = vld [vmem:[#allocation13 + $0x7c] sm:$0xf]
    %v4739 = vld [vmem:[#allocation13 + $0x80] sm:$0xf]
    %v4740 = vld [vmem:[#allocation13 + $0x84] sm:$0xf]
    %v4741 = vld [vmem:[#allocation13 + $0x88] sm:$0xf]
    %v4742 = vld [vmem:[#allocation13 + $0x8c] sm:$0xf]
    %v4743 = vld [vmem:[#allocation13 + $0x90] sm:$0xf]
    %v4744 = vld [vmem:[#allocation13 + $0x94] sm:$0xf]
    %v4745 = vld [vmem:[#allocation13 + $0x98] sm:$0xf]
    %v4746 = vld [vmem:[#allocation13 + $0x9c] sm:$0xf]
    %v4747 = vld [vmem:[#allocation13 + $0xa0] sm:$0xf]
    %v4748 = vld [vmem:[#allocation13 + $0xa4] sm:$0xf]
    %v4749 = vld [vmem:[#allocation13 + $0xa8] sm:$0xf]
    %v4750 = vld [vmem:[#allocation13 + $0xac] sm:$0xf]
    %v4751 = vld [vmem:[#allocation13 + $0xb0] sm:$0xf]
    %v4752 = vld [vmem:[#allocation13 + $0xb4] sm:$0xf]
    %v4753 = vld [vmem:[#allocation13 + $0xb8] sm:$0xf]
    %v4754 = vld [vmem:[#allocation13 + $0xbc] sm:$0xf]
    %v4755 = vld [vmem:[#allocation13 + $0xc0] sm:$0xf]
    %v4756 = vld [vmem:[#allocation13 + $0xc4] sm:$0xf]
    %v4757 = vld [vmem:[#allocation13 + $0xc8] sm:$0xf]
    %v4758 = vld [vmem:[#allocation13 + $0xcc] sm:$0xf]
    %v4759 = vld [vmem:[#allocation13 + $0xd0] sm:$0xf]
    %v4760 = vld [vmem:[#allocation13 + $0xd4] sm:$0xf]
    %v4761 = vld [vmem:[#allocation13 + $0xd8] sm:$0xf]
    %v4762 = vld [vmem:[#allocation13 + $0xdc] sm:$0xf]
    %v4763 = vld [vmem:[#allocation13 + $0xe0] sm:$0xf]
    %v4764 = vld [vmem:[#allocation13 + $0xe4] sm:$0xf]
    %v4765 = vld [vmem:[#allocation13 + $0xe8] sm:$0xf]
    %v4766 = vld [vmem:[#allocation13 + $0xec] sm:$0xf]
    %v4767 = vld [vmem:[#allocation13 + $0xf0] sm:$0xf]
    %v4768 = vld [vmem:[#allocation13 + $0xf4] sm:$0xf]
    %v4769 = vld [vmem:[#allocation13 + $0xf8] sm:$0xf]
    %v4770 = vld [vmem:[#allocation13 + $0xfc] sm:$0xf]
    %v4771 = vld [vmem:[#allocation15] sm:$0x1]
    %v4773 = vlaneseq
    %v4774 = vshrl.u32 %v4773, 7
    %v4775 = vsub.s32 0, %v4774
    %v4776 = vrot.slane %v4771, %v4775
    %v4842 = vunpack.c.l.b16 %v4707
    %v4843 = vunpack.c.l.b16 %v4708
    %v4844 = vunpack.c.l.b16 %v4709
    %v4845 = vunpack.c.l.b16 %v4710
    %v4846 = vunpack.c.l.b16 %v4711
    %v4847 = vunpack.c.l.b16 %v4712
    %v4848 = vunpack.c.l.b16 %v4713
    %v4849 = vunpack.c.l.b16 %v4714
    %v4850 = vunpack.c.l.b16 %v4715
    %v4851 = vunpack.c.l.b16 %v4716
    %v4852 = vunpack.c.l.b16 %v4717
    %v4853 = vunpack.c.l.b16 %v4718
    %v4854 = vunpack.c.l.b16 %v4719
    %v4855 = vunpack.c.l.b16 %v4720
    %v4856 = vunpack.c.l.b16 %v4721
    %v4857 = vunpack.c.l.b16 %v4722
    %v4858 = vunpack.c.l.b16 %v4723
    %v4859 = vunpack.c.l.b16 %v4724
    %v4860 = vunpack.c.l.b16 %v4725
    %v4861 = vunpack.c.l.b16 %v4726
    %v4862 = vunpack.c.l.b16 %v4727
    %v4863 = vunpack.c.l.b16 %v4728
    %v4864 = vunpack.c.l.b16 %v4729
    %v4865 = vunpack.c.l.b16 %v4730
    %v4866 = vunpack.c.l.b16 %v4731
    %v4867 = vunpack.c.l.b16 %v4732
    %v4868 = vunpack.c.l.b16 %v4733
    %v4869 = vunpack.c.l.b16 %v4734
    %v4870 = vunpack.c.l.b16 %v4735
    %v4871 = vunpack.c.l.b16 %v4736
    %v4872 = vunpack.c.l.b16 %v4737
    %v4873 = vunpack.c.l.b16 %v4738
    %v4874 = vunpack.c.l.b16 %v4739
    %v4875 = vunpack.c.l.b16 %v4740
    %v4876 = vunpack.c.l.b16 %v4741
    %v4877 = vunpack.c.l.b16 %v4742
    %v4878 = vunpack.c.l.b16 %v4743
    %v4879 = vunpack.c.l.b16 %v4744
    %v4880 = vunpack.c.l.b16 %v4745
    %v4881 = vunpack.c.l.b16 %v4746
    %v4882 = vunpack.c.l.b16 %v4747
    %v4883 = vunpack.c.l.b16 %v4748
    %v4884 = vunpack.c.l.b16 %v4749
    %v4885 = vunpack.c.l.b16 %v4750
    %v4886 = vunpack.c.l.b16 %v4751
    %v4887 = vunpack.c.l.b16 %v4752
    %v4888 = vunpack.c.l.b16 %v4753
    %v4889 = vunpack.c.l.b16 %v4754
    %v4890 = vunpack.c.l.b16 %v4755
    %v4891 = vunpack.c.l.b16 %v4756
    %v4892 = vunpack.c.l.b16 %v4757
    %v4893 = vunpack.c.l.b16 %v4758
    %v4894 = vunpack.c.l.b16 %v4759
    %v4895 = vunpack.c.l.b16 %v4760
    %v4896 = vunpack.c.l.b16 %v4761
    %v4897 = vunpack.c.l.b16 %v4762
    %v4898 = vunpack.c.l.b16 %v4763
    %v4899 = vunpack.c.l.b16 %v4764
    %v4900 = vunpack.c.l.b16 %v4765
    %v4901 = vunpack.c.l.b16 %v4766
    %v4902 = vunpack.c.l.b16 %v4767
    %v4903 = vunpack.c.l.b16 %v4768
    %v4904 = vunpack.c.l.b16 %v4769
    %v4905 = vunpack.c.l.b16 %v4770
    %v4906 = vpack.c.b16 %v4843, %v4842
    %v4907 = vpack.c.b16 %v4845, %v4844
    %v4908 = vpack.c.b16 %v4847, %v4846
    %v4909 = vpack.c.b16 %v4849, %v4848
    %v4910 = vpack.c.b16 %v4851, %v4850
    %v4911 = vpack.c.b16 %v4853, %v4852
    %v4912 = vpack.c.b16 %v4855, %v4854
    %v4913 = vpack.c.b16 %v4857, %v4856
    %v4914 = vpack.c.b16 %v4859, %v4858
    %v4915 = vpack.c.b16 %v4861, %v4860
    %v4916 = vpack.c.b16 %v4863, %v4862
    %v4917 = vpack.c.b16 %v4865, %v4864
    %v4918 = vpack.c.b16 %v4867, %v4866
    %v4919 = vpack.c.b16 %v4869, %v4868
    %v4920 = vpack.c.b16 %v4871, %v4870
    %v4921 = vpack.c.b16 %v4873, %v4872
    %v4922 = vpack.c.b16 %v4875, %v4874
    %v4923 = vpack.c.b16 %v4877, %v4876
    %v4924 = vpack.c.b16 %v4879, %v4878
    %v4925 = vpack.c.b16 %v4881, %v4880
    %v4926 = vpack.c.b16 %v4883, %v4882
    %v4927 = vpack.c.b16 %v4885, %v4884
    %v4928 = vpack.c.b16 %v4887, %v4886
    %v4929 = vpack.c.b16 %v4889, %v4888
    %v4930 = vpack.c.b16 %v4891, %v4890
    %v4931 = vpack.c.b16 %v4893, %v4892
    %v4932 = vpack.c.b16 %v4895, %v4894
    %v4933 = vpack.c.b16 %v4897, %v4896
    %v4934 = vpack.c.b16 %v4899, %v4898
    %v4935 = vpack.c.b16 %v4901, %v4900
    %v4936 = vpack.c.b16 %v4903, %v4902
    %v4937 = vpack.c.b16 %v4905, %v4904
    %4970 = vmatprep.subr.bf16.mxu0 0
    %4971 = vmatpush1.bf16.msra.mxu0 %v4906
    %4972 = vmatprep.subr.bf16.mxu0 0
    %4973 = vmatpush1.bf16.msra.mxu0 %v4907
    %4974 = vmatprep.subr.bf16.mxu0 0
    %4975 = vmatpush1.bf16.msra.mxu0 %v4908
    %4976 = vmatprep.subr.bf16.mxu0 0
    %4977 = vmatpush1.bf16.msra.mxu0 %v4909
    %4978 = vmatprep.subr.bf16.mxu0 0
    %4979 = vmatpush1.bf16.msra.mxu0 %v4910
    %4980 = vmatprep.subr.bf16.mxu0 0
    %4981 = vmatpush1.bf16.msra.mxu0 %v4911
    %4982 = vmatprep.subr.bf16.mxu0 0
    %4983 = vmatpush1.bf16.msra.mxu0 %v4912
    %4984 = vmatprep.subr.bf16.mxu0 0
    %4985 = vmatpush1.bf16.msra.mxu0 %v4913
    %4986 = vmatprep.subr.bf16.mxu0 0
    %4987 = vmatpush1.bf16.msra.mxu0 %v4914
    %4988 = vmatprep.subr.bf16.mxu0 0
    %4989 = vmatpush1.bf16.msra.mxu0 %v4915
    %4990 = vmatprep.subr.bf16.mxu0 0
    %4991 = vmatpush1.bf16.msra.mxu0 %v4916
    %4992 = vmatprep.subr.bf16.mxu0 0
    %4993 = vmatpush1.bf16.msra.mxu0 %v4917
    %4994 = vmatprep.subr.bf16.mxu0 0
    %4995 = vmatpush1.bf16.msra.mxu0 %v4918
    %4996 = vmatprep.subr.bf16.mxu0 0
    %4997 = vmatpush1.bf16.msra.mxu0 %v4919
    %4998 = vmatprep.subr.bf16.mxu0 0
    %4999 = vmatpush1.bf16.msra.mxu0 %v4920
    %5000 = vmatprep.subr.bf16.mxu0 0
    %5001 = vmatpush1.bf16.msra.mxu0 %v4921
    %5002 = vmatprep.mubr.bf16.mxu0 %v4704
    %5003 = vmatmul.mubr.bf16.gmra.mrb[0].mxu0 %v4703
    %v5004 = vpop.f32.mrb[0].mxu0
    %v5005 = vadd.f32 %v4776, %v5004
    %v5006 = vpop.f32.mrb[0].mxu0
    %v5007 = vpop.f32.mrb[0].mxu0
    %v5008 = vpop.f32.mrb[0].mxu0
    %5009 = vdwg.mxu0
    %5010 = vmatprep.subr.bf16.mxu0 0
    %5011 = vmatpush1.bf16.msra.mxu0 %v4922
    %5012 = vmatprep.subr.bf16.mxu0 0
    %5013 = vmatpush1.bf16.msra.mxu0 %v4923
    %5014 = vmatprep.subr.bf16.mxu0 0
    %5015 = vmatpush1.bf16.msra.mxu0 %v4924
    %5016 = vmatprep.subr.bf16.mxu0 0
    %5017 = vmatpush1.bf16.msra.mxu0 %v4925
    %5018 = vmatprep.subr.bf16.mxu0 0
    %5019 = vmatpush1.bf16.msra.mxu0 %v4926
    %5020 = vmatprep.subr.bf16.mxu0 0
    %5021 = vmatpush1.bf16.msra.mxu0 %v4927
    %5022 = vmatprep.subr.bf16.mxu0 0
    %5023 = vmatpush1.bf16.msra.mxu0 %v4928
    %5024 = vmatprep.subr.bf16.mxu0 0
    %5025 = vmatpush1.bf16.msra.mxu0 %v4929
    %5026 = vmatprep.subr.bf16.mxu0 0
    %5027 = vmatpush1.bf16.msra.mxu0 %v4930
    %5028 = vmatprep.subr.bf16.mxu0 0
    %5029 = vmatpush1.bf16.msra.mxu0 %v4931
    %5030 = vmatprep.subr.bf16.mxu0 0
    %5031 = vmatpush1.bf16.msra.mxu0 %v4932
    %5032 = vmatprep.subr.bf16.mxu0 0
    %5033 = vmatpush1.bf16.msra.mxu0 %v4933
    %5034 = vmatprep.subr.bf16.mxu0 0
    %5035 = vmatpush1.bf16.msra.mxu0 %v4934
    %5036 = vmatprep.subr.bf16.mxu0 0
    %5037 = vmatpush1.bf16.msra.mxu0 %v4935
    %5038 = vmatprep.subr.bf16.mxu0 0
    %5039 = vmatpush1.bf16.msra.mxu0 %v4936
    %5040 = vmatprep.subr.bf16.mxu0 0
    %5041 = vmatpush1.bf16.msra.mxu0 %v4937
    %5042 = vmatprep.mubr.bf16.mxu0 %v4706
    %5043 = vmatmul.mubr.bf16.gmra.mrb[0].mxu0 %v4705
    %v5044 = vpop.f32.mrb[0].mxu0
    %v5045 = vadd.f32 %v5005, %v5044
    %v5046 = vpop.f32.mrb[0].mxu0
    %v5047 = vpop.f32.mrb[0].mxu0
    %v5048 = vpop.f32.mrb[0].mxu0
    %5049 = vdwg.mxu0
    %5050 = vst [vmem:[%s10] sm:$0xff] %v5045
    // Predicated region
    $region78: #{audio_emotion_cnn_forward.1} parent=1 // pred_check
      _
    $region79: #{audio_emotion_cnn_forward.1} parent=1 // pred_check_branch
      %5052 = sbr.rel (0) target = $region81
    $region80: #{audio_emotion_cnn_forward.1} parent=1 // pred_region
      _
    $region81: #{audio_emotion_cnn_forward.1} parent=1 // pred_fallthru
      _
    // Predicated region
    $region82: #{audio_emotion_cnn_forward.1} parent=1 // pred_check
      _
    $region83: #{audio_emotion_cnn_forward.1} parent=1 // pred_check_branch
      %5054 = sbr.rel (0) target = $region85
    $region84: #{audio_emotion_cnn_forward.1} parent=1 // pred_region
      _
    $region85: #{audio_emotion_cnn_forward.1} parent=1 // pred_fallthru
      _
    %5055 = vsyncpa [#allocation3], 1
    %5056 = vsyncpa [#allocation5], 1
    %5057 = vsyncpa [#allocation8], 1
    %5058 = vsyncpa [#allocation11], 1
    %5059 = vsyncpa [#allocation14], 1

</llo_original>
